<compile_context>
chip_gen: v7x
topology: tpu7x:2x2x1
jax: 0.10.0
libtpu: 0.0.40
codegen_flags: <defaults>
</compile_context>

<pallas_src>
import jax
import jax.numpy as jnp
import numpy as np
from jax.experimental import pallas as pl
from jax.experimental.pallas import tpu as pltpu

KSIZE = 5
PAD = 2


# --------------------------------------------------------------------------
# Fused kernel: depthwise 5x5(+BN+ReLU) -> pointwise(+BN+ReLU) -> classifier
#               -> bilinear x4 upsample (align_corners=False)
# --------------------------------------------------------------------------
def _fused_head_kernel(x_ref, wdw_ref, bdw_ref, wpw_ref, bpw_ref, wcls_ref,
                       mh_ref, mwk_ref, out_ref, slab_ref, h1_ref):
    # x_ref   : (NB, W, H, C)   unpadded input; W on the lead axis, C on lanes
    # wdw_ref : (25, C)         depthwise taps (BN scale pre-folded)
    # bdw_ref : (1, C)          depthwise BN bias
    # wpw_ref : (C, HC)         pointwise weight (BN scale pre-folded)
    # bpw_ref : (1, HC)         pointwise BN bias
    # wcls_ref: (HC, K)         classifier weight
    # mh_ref  : (4H, H)         row (H -> 4H) bilinear-interp matrix
    # mwk_ref : (K, W, K*4W)    column (W -> 4W) interp rows, one lane-block/class
    # out_ref : (NB, 4H, K*4W)  upsampled class maps (lane-dense store)
    # slab_ref: (W+4, HP, C)    VMEM scratch: zero-padded conv slab, HP=pad8(H+2)
    # h1_ref  : (NB*W*H, C)     VMEM scratch: depthwise+BN+ReLU activations
    nb, w_sz, h_sz, c = x_ref.shape
    hp = slab_ref.shape[1]
    k_cls = wcls_ref.shape[1]

    # Lead-axis (W) chunk so rolled-slab + accumulator fit the 64-vreg file.
    ch = 8 if (w_sz % 8 == 0 and w_sz > 8) else w_sz

    wdw = wdw_ref[...]
    bdw = bdw_ref[...]

    # ---- stage 1: depthwise 5x5 + BN + ReLU for every image -> h1_ref ------
    for img in range(nb):
        # In-kernel zero-halo padding (replaces wrapper-side jnp.pad):
        # real data at lead rows [PAD, PAD+W) and sublanes [0, H); the rest of
        # the slab stays zero so the roll-based window shifts read zeros.
        slab_ref[...] = jnp.zeros(slab_ref.shape, slab_ref.dtype)
        slab_ref[PAD:PAD + w_sz, 0:h_sz, :] = x_ref[img]

        for w0 in range(0, w_sz, ch):
            acc = None
            for i in range(KSIZE):                 # H-offset -> sublane roll
                # Re-read the slab chunk per i so only one rolled copy is live.
                src = slab_ref[w0:w0 + ch + KSIZE - 1]        # (ch+4, HP, C)
                if i == PAD:
                    rolled = src
                else:
                    rolled = pltpu.roll(src, (PAD - i) % hp, 1)
                for j in range(KSIZE):             # W-offset -> lead-row slice
                    win = rolled[j:j + ch, 0:h_sz, :]          # (ch, H, C)
                    term = win * wdw[i * KSIZE + j]
                    acc = term if acc is None else acc + term
            h1 = jnp.maximum(acc + bdw, 0.0)                    # (ch, H, C)
            r0 = (img * w_sz + w0) * h_sz
            # (ch, H, C) -> (ch*H, C) is layout-free when H % 8 == 0.
            h1_ref[r0:r0 + ch * h_sz, :] = h1.reshape(ch * h_sz, c)

    # ---- stages 2-5: pointwise + classifier + x4 bilinear upsample ---------
    for img in range(nb):
        rows = h1_ref[img * w_sz * h_sz:(img + 1) * w_sz * h_sz, :]  # (W*H, C)
        y = jnp.dot(rows, wpw_ref[...], preferred_element_type=jnp.float32)
        y = jnp.maximum(y + bpw_ref[...], 0.0)                       # (W*H, HC)
        pred = jnp.dot(y, wcls_ref[...],
                       preferred_element_type=jnp.float32)           # (W*H, K)

        # Column (W -> 4W) interpolation + class interleave on the VPU:
        #   t[h, k*4W + cc] = sum_w pred[w*H + h, k] * mw[cc, w]
        t = None
        for k in range(k_cls):
            for w in range(w_sz):
                pw = pred[w * h_sz:(w + 1) * h_sz, k:k + 1]          # (H, 1)
                term = pw * mwk_ref[k, w]                            # (H, K*4W)
                t = term if t is None else t + term
        # Row (H -> 4H) interpolation on the MXU; lane-dense (4H, K*4W) store.
        out_ref[img] = jnp.dot(mh_ref[...], t,
                               preferred_element_type=jnp.float32)


# --------------------------------------------------------------------------
# Trace-time interpolation constants and parameter prep
# --------------------------------------------------------------------------
def _bilinear_matrix_np(in_size, scale):
    """(out, in) matrix reproducing F.interpolate bilinear, align_corners=False."""
    out_size = in_size * scale
    o = np.arange(out_size, dtype=np.float32)
    src = np.maximum((o + 0.5) / scale - 0.5, 0.0).astype(np.float32)
    x0 = np.clip(np.floor(src).astype(np.int32), 0, in_size - 1)
    x1 = np.minimum(x0 + 1, in_size - 1)
    w1 = (src - x0.astype(np.float32)).astype(np.float32)
    w0 = (1.0 - w1).astype(np.float32)
    m = np.zeros((out_size, in_size), np.float32)
    rows = np.arange(out_size)
    np.add.at(m, (rows, x0), w0)
    np.add.at(m, (rows, x1), w1)
    return m


def _mwk_np(W, K, scale=4):
    """mwk[k, w, k*scale*W + c] = mw[c, w]; zero in the other class blocks."""
    mw = _bilinear_matrix_np(W, scale)                     # (scale*W, W)
    out = np.zeros((K, W, K * scale * W), np.float32)
    for k in range(K):
        out[k, :, k * scale * W:(k + 1) * scale * W] = mw.T
    return out


def _fold_bn(gamma, beta, mean, var, eps=1e-5):
    scale = gamma * jax.lax.rsqrt(var + eps)
    bias = beta - mean * scale
    return jnp.stack([scale, bias], axis=0)  # (2, C)


def init_params(key, decoder_channel=128, head_channel=32, num_class=2):
    ks = jax.random.split(key, 11)
    p = {}
    p['w_dw'] = (0.05 * jax.random.normal(
        ks[0], (KSIZE, KSIZE, decoder_channel), jnp.float32)
    ).reshape(KSIZE * KSIZE, decoder_channel)
    p['sb_dw'] = _fold_bn(
        1.0 + 0.1 * jax.random.normal(ks[1], (decoder_channel,), jnp.float32),
        0.1 * jax.random.normal(ks[2], (decoder_channel,), jnp.float32),
        0.1 * jax.random.normal(ks[3], (decoder_channel,), jnp.float32),
        jax.random.uniform(ks[4], (decoder_channel,), jnp.float32, 0.5, 1.5))
    p['w_pw'] = 0.05 * jax.random.normal(
        ks[5], (decoder_channel, head_channel), jnp.float32)
    p['sb_pw'] = _fold_bn(
        1.0 + 0.1 * jax.random.normal(ks[6], (head_channel,), jnp.float32),
        0.1 * jax.random.normal(ks[7], (head_channel,), jnp.float32),
        0.1 * jax.random.normal(ks[8], (head_channel,), jnp.float32),
        jax.random.uniform(ks[9], (head_channel,), jnp.float32, 0.5, 1.5))
    p['w_cls'] = 0.05 * jax.random.normal(
        ks[10], (head_channel, num_class), jnp.float32)
    return p


def _images_per_grid_step(n_images):
    """One image per 'parallel' grid step on chips with 2 TensorCores
    (v7x, v4/v5p megacore); fold the whole batch into a single step on
    single-TC chips (v5e/v6e), where the grid is a serial loop and each extra
    step only adds fixed overhead."""
    try:
        kind = jax.devices()[0].device_kind.lower()
    except Exception:
        return 1
    single_tc = any(s in kind for s in ("lite", "v5e", "v6e", "trillium"))
    return n_images if single_tc else 1


# --------------------------------------------------------------------------
# Wrapper
# --------------------------------------------------------------------------
@jax.jit
def instance_center_regression_head(x_nchw, params):
    N, C, H, W = x_nchw.shape
    HC = params['w_pw'].shape[1]
    K = params['w_cls'].shape[1]

    # Fold the BN scales into the conv weights (wrapper-side prep, tiny).
    w_dw = params['w_dw'] * params['sb_dw'][0]             # (25, C)
    b_dw = params['sb_dw'][1].reshape(1, C)                # (1, C)
    w_pw = params['w_pw'] * params['sb_pw'][0][None, :]    # (C, HC)
    b_pw = params['sb_pw'][1].reshape(1, HC)               # (1, HC)
    w_cls = params['w_cls']                                # (HC, K)

    # Trace-time interpolation constants.
    mh = jnp.asarray(_bilinear_matrix_np(H, 4))            # (4H, H)
    mwk = jnp.asarray(_mwk_np(W, K, 4))                    # (K, W, K*4W)

    # Only wrapper-side relayout: NCHW -> (N, W, H, C) so C sits on lanes and
    # H on sublanes.  Zero-halo padding is done inside the kernel.
    # TODO(synk): accept channel-last input upstream to remove this transpose.
    xt = jnp.transpose(x_nchw, (0, 3, 2, 1)).astype(jnp.float32)

    HP = ((H + PAD + 7) // 8) * 8          # padded sublane extent, >= H+2

    NB = _images_per_grid_step(N)
    grid = (N // NB,)
    sem = ("parallel",) if NB == 1 else ("arbitrary",)

    up = pl.pallas_call(
        _fused_head_kernel,
        out_shape=jax.ShapeDtypeStruct((N, 4 * H, K * 4 * W), jnp.float32),
        grid=grid,
        in_specs=[
            pl.BlockSpec((NB, W, H, C), lambda n: (n, 0, 0, 0)),
            pl.BlockSpec((KSIZE * KSIZE, C), lambda n: (0, 0)),
            pl.BlockSpec((1, C), lambda n: (0, 0)),
            pl.BlockSpec((C, HC), lambda n: (0, 0)),
            pl.BlockSpec((1, HC), lambda n: (0, 0)),
            pl.BlockSpec((HC, K), lambda n: (0, 0)),
            pl.BlockSpec((4 * H, H), lambda n: (0, 0)),
            pl.BlockSpec((K, W, K * 4 * W), lambda n: (0, 0, 0)),
        ],
        out_specs=pl.BlockSpec((NB, 4 * H, K * 4 * W), lambda n: (n, 0, 0)),
        scratch_shapes=[
            pltpu.VMEM((W + 2 * PAD, HP, C), jnp.float32),   # padded conv slab
            pltpu.VMEM((NB * W * H, C), jnp.float32),        # h1 activations
        ],
        compiler_params=pltpu.CompilerParams(dimension_semantics=sem),
    )(xt, w_dw, b_dw, w_pw, b_pw, w_cls, mh, mwk)

    # Back to the module's NCHW contract (cheap: N*K*4H*4W floats).
    return jnp.transpose(up.reshape(N, 4 * H, K, 4 * W), (0, 2, 1, 3))


# --------------------------------------------------------------------------
# Pure-JAX reference (numerical sanity check)
# --------------------------------------------------------------------------
def _reference_forward(x_nchw, p):
    N, C, H, W = x_nchw.shape
    hp = jax.lax.Precision.HIGHEST
    xx = jnp.transpose(x_nchw, (0, 2, 3, 1)).astype(jnp.float32)
    xpp = jnp.pad(xx, ((0, 0), (PAD, PAD), (PAD, PAD), (0, 0)))
    acc = 0.0
    for i in range(KSIZE):
        for j in range(KSIZE):
            acc = acc + xpp[:, i:i + H, j:j + W, :] * p['w_dw'][i * KSIZE + j]
    h1 = jnp.maximum(acc * p['sb_dw'][0] + p['sb_dw'][1], 0.0)
    y = jnp.einsum('nhwc,cd->nhwd', h1, p['w_pw'], precision=hp)
    y = jnp.maximum(y * p['sb_pw'][0] + p['sb_pw'][1], 0.0)
    pr = jnp.einsum('nhwd,dk->nkhw', y, p['w_cls'], precision=hp)
    mh = jnp.asarray(_bilinear_matrix_np(H, 4))
    mw = jnp.asarray(_bilinear_matrix_np(W, 4))
    return jnp.einsum('ah,nkhw,cw->nkac', mh, pr, mw, precision=hp)


if __name__ == "__main__":
    key = jax.random.PRNGKey(0)
    k_x, k_p = jax.random.split(key)

    N, C, H, W = 2, 128, 16, 16          # decoder_channel=128 (module default)
    head_channel, num_class = 32, 2

    x = jax.random.normal(k_x, (N, C, H, W), jnp.float32)
    params = init_params(k_p, decoder_channel=C,
                         head_channel=head_channel, num_class=num_class)

    out = instance_center_regression_head(x, params)
    out = jax.block_until_ready(out)

    assert out.shape == (N, num_class, 4 * H, 4 * W), out.shape
    assert bool(jnp.all(jnp.isfinite(out)))

    ref = _reference_forward(x, params)
    max_err = float(jnp.max(jnp.abs(out - ref)))
    assert bool(jnp.allclose(out, ref, atol=1e-3, rtol=1e-3)), max_err

    print("KERNEL_OK")
</pallas_src>

<mosaic_0001>
module attributes {stable_mosaic.version = 11 : i64} {
  func.func @_fused_head_kernel(%arg0: i32, %arg1: memref<1x16x16x128xf32, #tpu.memory_space<vmem>>, %arg2: memref<25x128xf32, #tpu.memory_space<vmem>>, %arg3: memref<1x128xf32, #tpu.memory_space<vmem>>, %arg4: memref<128x32xf32, #tpu.memory_space<vmem>>, %arg5: memref<1x32xf32, #tpu.memory_space<vmem>>, %arg6: memref<32x2xf32, #tpu.memory_space<vmem>>, %arg7: memref<64x16xf32, #tpu.memory_space<vmem>>, %arg8: memref<2x16x128xf32, #tpu.memory_space<vmem>>, %arg9: memref<1x64x128xf32, #tpu.memory_space<vmem>>, %arg10: memref<20x24x128xf32, #tpu.memory_space<vmem>>, %arg11: memref<256x128xf32, #tpu.memory_space<vmem>>) attributes {dimension_semantics = [#tpu.dimension_semantics<parallel>], iteration_bounds = array<i64: 2>, scalar_prefetch = 0 : i64, scratch_operands = 2 : i64, tpu.core_type = #tpu.core_type<tc>, window_params = [{transform_indices = @transform_0, window_bounds = array<i64: 1, 16, 16, 128>}, {pipeline_mode = #tpu.pipeline_mode<synchronous>, transform_indices = @transform_1, window_bounds = array<i64: 25, 128>}, {pipeline_mode = #tpu.pipeline_mode<synchronous>, transform_indices = @transform_2, window_bounds = array<i64: 1, 128>}, {pipeline_mode = #tpu.pipeline_mode<synchronous>, transform_indices = @transform_3, window_bounds = array<i64: 128, 32>}, {pipeline_mode = #tpu.pipeline_mode<synchronous>, transform_indices = @transform_4, window_bounds = array<i64: 1, 32>}, {pipeline_mode = #tpu.pipeline_mode<synchronous>, transform_indices = @transform_5, window_bounds = array<i64: 32, 2>}, {pipeline_mode = #tpu.pipeline_mode<synchronous>, transform_indices = @transform_6, window_bounds = array<i64: 64, 16>}, {pipeline_mode = #tpu.pipeline_mode<synchronous>, transform_indices = @transform_7, window_bounds = array<i64: 2, 16, 128>}, {transform_indices = @transform_8, window_bounds = array<i64: 1, 64, 128>}]} {
    %c0 = arith.constant 0 : index
    %c0_0 = arith.constant 0 : index
    %0 = vector.load %arg2[%c0, %c0_0] : memref<25x128xf32, #tpu.memory_space<vmem>>, vector<25x128xf32>
    %c0_1 = arith.constant 0 : index
    %c0_2 = arith.constant 0 : index
    %1 = vector.load %arg3[%c0_1, %c0_2] : memref<1x128xf32, #tpu.memory_space<vmem>>, vector<1x128xf32>
    %cst = arith.constant 0.000000e+00 : f32
    %2 = vector.broadcast %cst : f32 to vector<20x24x128xf32>
    %c0_3 = arith.constant 0 : index
    %c0_4 = arith.constant 0 : index
    %c0_5 = arith.constant 0 : index
    %3 = vector.load %arg10[%c0_3, %c0_4, %c0_5] : memref<20x24x128xf32, #tpu.memory_space<vmem>>, vector<20x24x128xf32>
    tpu.vector_store %arg10[%c0_3, %c0_4, %c0_5], %2 {strides = array<i32>} : memref<20x24x128xf32, #tpu.memory_space<vmem>>, vector<20x24x128xf32>,
    %c0_6 = arith.constant 0 : index
    %c0_7 = arith.constant 0 : index
    %c0_8 = arith.constant 0 : index
    %c0_9 = arith.constant 0 : index
    %4 = vector.load %arg1[%c0_6, %c0_7, %c0_8, %c0_9] : memref<1x16x16x128xf32, #tpu.memory_space<vmem>>, vector<1x16x16x128xf32>
    %5 = vector.shape_cast %4 : vector<1x16x16x128xf32> to vector<16x16x128xf32>
    %c2 = arith.constant 2 : index
    %c0_10 = arith.constant 0 : index
    %c0_11 = arith.constant 0 : index
    %6 = vector.load %arg10[%c2, %c0_10, %c0_11] : memref<20x24x128xf32, #tpu.memory_space<vmem>>, vector<16x16x128xf32>
    tpu.vector_store %arg10[%c2, %c0_10, %c0_11], %5 {strides = array<i32>} : memref<20x24x128xf32, #tpu.memory_space<vmem>>, vector<16x16x128xf32>,
    %c0_12 = arith.constant 0 : index
    %c0_13 = arith.constant 0 : index
    %c0_14 = arith.constant 0 : index
    %7 = vector.load %arg10[%c0_12, %c0_13, %c0_14] : memref<20x24x128xf32, #tpu.memory_space<vmem>>, vector<12x24x128xf32>
    %c2_i32 = arith.constant 2 : i32
    %8 = tpu.dynamic_rotate %7 by %c2_i32 dim 1 : vector<12x24x128xf32>, i32 -> vector<12x24x128xf32>
    %9 = vector.extract_strided_slice %8 {offsets = [0, 0, 0], sizes = [8, 16, 128], strides = [1, 1, 1]} : vector<12x24x128xf32> to vector<8x16x128xf32>
    %10 = vector.extract_strided_slice %0 {offsets = [0, 0], sizes = [1, 128], strides = [1, 1]} : vector<25x128xf32> to vector<1x128xf32>
    %11 = vector.shape_cast %10 : vector<1x128xf32> to vector<128xf32>
    %12 = vector.shape_cast %11 : vector<128xf32> to vector<1x1x128xf32>
    %13 = vector.broadcast %12 : vector<1x1x128xf32> to vector<8x16x128xf32>
    %14 = arith.mulf %9, %13 : vector<8x16x128xf32>
    %15 = vector.extract_strided_slice %8 {offsets = [1, 0, 0], sizes = [8, 16, 128], strides = [1, 1, 1]} : vector<12x24x128xf32> to vector<8x16x128xf32>
    %16 = vector.extract_strided_slice %0 {offsets = [1, 0], sizes = [1, 128], strides = [1, 1]} : vector<25x128xf32> to vector<1x128xf32>
    %17 = vector.shape_cast %16 : vector<1x128xf32> to vector<128xf32>
    %18 = vector.shape_cast %17 : vector<128xf32> to vector<1x1x128xf32>
    %19 = vector.broadcast %18 : vector<1x1x128xf32> to vector<8x16x128xf32>
    %20 = arith.mulf %15, %19 : vector<8x16x128xf32>
    %21 = arith.addf %14, %20 : vector<8x16x128xf32>
    %22 = vector.extract_strided_slice %8 {offsets = [2, 0, 0], sizes = [8, 16, 128], strides = [1, 1, 1]} : vector<12x24x128xf32> to vector<8x16x128xf32>
    %23 = vector.extract_strided_slice %0 {offsets = [2, 0], sizes = [1, 128], strides = [1, 1]} : vector<25x128xf32> to vector<1x128xf32>
    %24 = vector.shape_cast %23 : vector<1x128xf32> to vector<128xf32>
    %25 = vector.shape_cast %24 : vector<128xf32> to vector<1x1x128xf32>
    %26 = vector.broadcast %25 : vector<1x1x128xf32> to vector<8x16x128xf32>
    %27 = arith.mulf %22, %26 : vector<8x16x128xf32>
    %28 = arith.addf %21, %27 : vector<8x16x128xf32>
    %29 = vector.extract_strided_slice %8 {offsets = [3, 0, 0], sizes = [8, 16, 128], strides = [1, 1, 1]} : vector<12x24x128xf32> to vector<8x16x128xf32>
    %30 = vector.extract_strided_slice %0 {offsets = [3, 0], sizes = [1, 128], strides = [1, 1]} : vector<25x128xf32> to vector<1x128xf32>
    %31 = vector.shape_cast %30 : vector<1x128xf32> to vector<128xf32>
    %32 = vector.shape_cast %31 : vector<128xf32> to vector<1x1x128xf32>
    %33 = vector.broadcast %32 : vector<1x1x128xf32> to vector<8x16x128xf32>
    %34 = arith.mulf %29, %33 : vector<8x16x128xf32>
    %35 = arith.addf %28, %34 : vector<8x16x128xf32>
    %36 = vector.extract_strided_slice %8 {offsets = [4, 0, 0], sizes = [8, 16, 128], strides = [1, 1, 1]} : vector<12x24x128xf32> to vector<8x16x128xf32>
    %37 = vector.extract_strided_slice %0 {offsets = [4, 0], sizes = [1, 128], strides = [1, 1]} : vector<25x128xf32> to vector<1x128xf32>
    %38 = vector.shape_cast %37 : vector<1x128xf32> to vector<128xf32>
    %39 = vector.shape_cast %38 : vector<128xf32> to vector<1x1x128xf32>
    %40 = vector.broadcast %39 : vector<1x1x128xf32> to vector<8x16x128xf32>
    %41 = arith.mulf %36, %40 : vector<8x16x128xf32>
    %42 = arith.addf %35, %41 : vector<8x16x128xf32>
    %c0_15 = arith.constant 0 : index
    %c0_16 = arith.constant 0 : index
    %c0_17 = arith.constant 0 : index
    %43 = vector.load %arg10[%c0_15, %c0_16, %c0_17] : memref<20x24x128xf32, #tpu.memory_space<vmem>>, vector<12x24x128xf32>
    %c1_i32 = arith.constant 1 : i32
    %44 = tpu.dynamic_rotate %43 by %c1_i32 dim 1 : vector<12x24x128xf32>, i32 -> vector<12x24x128xf32>
    %45 = vector.extract_strided_slice %44 {offsets = [0, 0, 0], sizes = [8, 16, 128], strides = [1, 1, 1]} : vector<12x24x128xf32> to vector<8x16x128xf32>
    %46 = vector.extract_strided_slice %0 {offsets = [5, 0], sizes = [1, 128], strides = [1, 1]} : vector<25x128xf32> to vector<1x128xf32>
    %47 = vector.shape_cast %46 : vector<1x128xf32> to vector<128xf32>
    %48 = vector.shape_cast %47 : vector<128xf32> to vector<1x1x128xf32>
    %49 = vector.broadcast %48 : vector<1x1x128xf32> to vector<8x16x128xf32>
    %50 = arith.mulf %45, %49 : vector<8x16x128xf32>
    %51 = arith.addf %42, %50 : vector<8x16x128xf32>
    %52 = vector.extract_strided_slice %44 {offsets = [1, 0, 0], sizes = [8, 16, 128], strides = [1, 1, 1]} : vector<12x24x128xf32> to vector<8x16x128xf32>
    %53 = vector.extract_strided_slice %0 {offsets = [6, 0], sizes = [1, 128], strides = [1, 1]} : vector<25x128xf32> to vector<1x128xf32>
    %54 = vector.shape_cast %53 : vector<1x128xf32> to vector<128xf32>
    %55 = vector.shape_cast %54 : vector<128xf32> to vector<1x1x128xf32>
    %56 = vector.broadcast %55 : vector<1x1x128xf32> to vector<8x16x128xf32>
    %57 = arith.mulf %52, %56 : vector<8x16x128xf32>
    %58 = arith.addf %51, %57 : vector<8x16x128xf32>
    %59 = vector.extract_strided_slice %44 {offsets = [2, 0, 0], sizes = [8, 16, 128], strides = [1, 1, 1]} : vector<12x24x128xf32> to vector<8x16x128xf32>
    %60 = vector.extract_strided_slice %0 {offsets = [7, 0], sizes = [1, 128], strides = [1, 1]} : vector<25x128xf32> to vector<1x128xf32>
    %61 = vector.shape_cast %60 : vector<1x128xf32> to vector<128xf32>
    %62 = vector.shape_cast %61 : vector<128xf32> to vector<1x1x128xf32>
    %63 = vector.broadcast %62 : vector<1x1x128xf32> to vector<8x16x128xf32>
    %64 = arith.mulf %59, %63 : vector<8x16x128xf32>
    %65 = arith.addf %58, %64 : vector<8x16x128xf32>
    %66 = vector.extract_strided_slice %44 {offsets = [3, 0, 0], sizes = [8, 16, 128], strides = [1, 1, 1]} : vector<12x24x128xf32> to vector<8x16x128xf32>
    %67 = vector.extract_strided_slice %0 {offsets = [8, 0], sizes = [1, 128], strides = [1, 1]} : vector<25x128xf32> to vector<1x128xf32>
    %68 = vector.shape_cast %67 : vector<1x128xf32> to vector<128xf32>
    %69 = vector.shape_cast %68 : vector<128xf32> to vector<1x1x128xf32>
    %70 = vector.broadcast %69 : vector<1x1x128xf32> to vector<8x16x128xf32>
    %71 = arith.mulf %66, %70 : vector<8x16x128xf32>
    %72 = arith.addf %65, %71 : vector<8x16x128xf32>
    %73 = vector.extract_strided_slice %44 {offsets = [4, 0, 0], sizes = [8, 16, 128], strides = [1, 1, 1]} : vector<12x24x128xf32> to vector<8x16x128xf32>
    %74 = vector.extract_strided_slice %0 {offsets = [9, 0], sizes = [1, 128], strides = [1, 1]} : vector<25x128xf32> to vector<1x128xf32>
    %75 = vector.shape_cast %74 : vector<1x128xf32> to vector<128xf32>
    %76 = vector.shape_cast %75 : vector<128xf32> to vector<1x1x128xf32>
    %77 = vector.broadcast %76 : vector<1x1x128xf32> to vector<8x16x128xf32>
    %78 = arith.mulf %73, %77 : vector<8x16x128xf32>
    %79 = arith.addf %72, %78 : vector<8x16x128xf32>
    %c0_18 = arith.constant 0 : index
    %c0_19 = arith.constant 0 : index
    %c0_20 = arith.constant 0 : index
    %80 = vector.load %arg10[%c0_18, %c0_19, %c0_20] : memref<20x24x128xf32, #tpu.memory_space<vmem>>, vector<12x24x128xf32>
    %81 = vector.extract_strided_slice %80 {offsets = [0, 0, 0], sizes = [8, 16, 128], strides = [1, 1, 1]} : vector<12x24x128xf32> to vector<8x16x128xf32>
    %82 = vector.extract_strided_slice %0 {offsets = [10, 0], sizes = [1, 128], strides = [1, 1]} : vector<25x128xf32> to vector<1x128xf32>
    %83 = vector.shape_cast %82 : vector<1x128xf32> to vector<128xf32>
    %84 = vector.shape_cast %83 : vector<128xf32> to vector<1x1x128xf32>
    %85 = vector.broadcast %84 : vector<1x1x128xf32> to vector<8x16x128xf32>
    %86 = arith.mulf %81, %85 : vector<8x16x128xf32>
    %87 = arith.addf %79, %86 : vector<8x16x128xf32>
    %88 = vector.extract_strided_slice %80 {offsets = [1, 0, 0], sizes = [8, 16, 128], strides = [1, 1, 1]} : vector<12x24x128xf32> to vector<8x16x128xf32>
    %89 = vector.extract_strided_slice %0 {offsets = [11, 0], sizes = [1, 128], strides = [1, 1]} : vector<25x128xf32> to vector<1x128xf32>
    %90 = vector.shape_cast %89 : vector<1x128xf32> to vector<128xf32>
    %91 = vector.shape_cast %90 : vector<128xf32> to vector<1x1x128xf32>
    %92 = vector.broadcast %91 : vector<1x1x128xf32> to vector<8x16x128xf32>
    %93 = arith.mulf %88, %92 : vector<8x16x128xf32>
    %94 = arith.addf %87, %93 : vector<8x16x128xf32>
    %95 = vector.extract_strided_slice %80 {offsets = [2, 0, 0], sizes = [8, 16, 128], strides = [1, 1, 1]} : vector<12x24x128xf32> to vector<8x16x128xf32>
    %96 = vector.extract_strided_slice %0 {offsets = [12, 0], sizes = [1, 128], strides = [1, 1]} : vector<25x128xf32> to vector<1x128xf32>
    %97 = vector.shape_cast %96 : vector<1x128xf32> to vector<128xf32>
    %98 = vector.shape_cast %97 : vector<128xf32> to vector<1x1x128xf32>
    %99 = vector.broadcast %98 : vector<1x1x128xf32> to vector<8x16x128xf32>
    %100 = arith.mulf %95, %99 : vector<8x16x128xf32>
    %101 = arith.addf %94, %100 : vector<8x16x128xf32>
    %102 = vector.extract_strided_slice %80 {offsets = [3, 0, 0], sizes = [8, 16, 128], strides = [1, 1, 1]} : vector<12x24x128xf32> to vector<8x16x128xf32>
    %103 = vector.extract_strided_slice %0 {offsets = [13, 0], sizes = [1, 128], strides = [1, 1]} : vector<25x128xf32> to vector<1x128xf32>
    %104 = vector.shape_cast %103 : vector<1x128xf32> to vector<128xf32>
    %105 = vector.shape_cast %104 : vector<128xf32> to vector<1x1x128xf32>
    %106 = vector.broadcast %105 : vector<1x1x128xf32> to vector<8x16x128xf32>
    %107 = arith.mulf %102, %106 : vector<8x16x128xf32>
    %108 = arith.addf %101, %107 : vector<8x16x128xf32>
    %109 = vector.extract_strided_slice %80 {offsets = [4, 0, 0], sizes = [8, 16, 128], strides = [1, 1, 1]} : vector<12x24x128xf32> to vector<8x16x128xf32>
    %110 = vector.extract_strided_slice %0 {offsets = [14, 0], sizes = [1, 128], strides = [1, 1]} : vector<25x128xf32> to vector<1x128xf32>
    %111 = vector.shape_cast %110 : vector<1x128xf32> to vector<128xf32>
    %112 = vector.shape_cast %111 : vector<128xf32> to vector<1x1x128xf32>
    %113 = vector.broadcast %112 : vector<1x1x128xf32> to vector<8x16x128xf32>
    %114 = arith.mulf %109, %113 : vector<8x16x128xf32>
    %115 = arith.addf %108, %114 : vector<8x16x128xf32>
    %c0_21 = arith.constant 0 : index
    %c0_22 = arith.constant 0 : index
    %c0_23 = arith.constant 0 : index
    %116 = vector.load %arg10[%c0_21, %c0_22, %c0_23] : memref<20x24x128xf32, #tpu.memory_space<vmem>>, vector<12x24x128xf32>
    %c23_i32 = arith.constant 23 : i32
    %117 = tpu.dynamic_rotate %116 by %c23_i32 dim 1 : vector<12x24x128xf32>, i32 -> vector<12x24x128xf32>
    %118 = vector.extract_strided_slice %117 {offsets = [0, 0, 0], sizes = [8, 16, 128], strides = [1, 1, 1]} : vector<12x24x128xf32> to vector<8x16x128xf32>
    %119 = vector.extract_strided_slice %0 {offsets = [15, 0], sizes = [1, 128], strides = [1, 1]} : vector<25x128xf32> to vector<1x128xf32>
    %120 = vector.shape_cast %119 : vector<1x128xf32> to vector<128xf32>
    %121 = vector.shape_cast %120 : vector<128xf32> to vector<1x1x128xf32>
    %122 = vector.broadcast %121 : vector<1x1x128xf32> to vector<8x16x128xf32>
    %123 = arith.mulf %118, %122 : vector<8x16x128xf32>
    %124 = arith.addf %115, %123 : vector<8x16x128xf32>
    %125 = vector.extract_strided_slice %117 {offsets = [1, 0, 0], sizes = [8, 16, 128], strides = [1, 1, 1]} : vector<12x24x128xf32> to vector<8x16x128xf32>
    %126 = vector.extract_strided_slice %0 {offsets = [16, 0], sizes = [1, 128], strides = [1, 1]} : vector<25x128xf32> to vector<1x128xf32>
    %127 = vector.shape_cast %126 : vector<1x128xf32> to vector<128xf32>
    %128 = vector.shape_cast %127 : vector<128xf32> to vector<1x1x128xf32>
    %129 = vector.broadcast %128 : vector<1x1x128xf32> to vector<8x16x128xf32>
    %130 = arith.mulf %125, %129 : vector<8x16x128xf32>
    %131 = arith.addf %124, %130 : vector<8x16x128xf32>
    %132 = vector.extract_strided_slice %117 {offsets = [2, 0, 0], sizes = [8, 16, 128], strides = [1, 1, 1]} : vector<12x24x128xf32> to vector<8x16x128xf32>
    %133 = vector.extract_strided_slice %0 {offsets = [17, 0], sizes = [1, 128], strides = [1, 1]} : vector<25x128xf32> to vector<1x128xf32>
    %134 = vector.shape_cast %133 : vector<1x128xf32> to vector<128xf32>
    %135 = vector.shape_cast %134 : vector<128xf32> to vector<1x1x128xf32>
    %136 = vector.broadcast %135 : vector<1x1x128xf32> to vector<8x16x128xf32>
    %137 = arith.mulf %132, %136 : vector<8x16x128xf32>
    %138 = arith.addf %131, %137 : vector<8x16x128xf32>
    %139 = vector.extract_strided_slice %117 {offsets = [3, 0, 0], sizes = [8, 16, 128], strides = [1, 1, 1]} : vector<12x24x128xf32> to vector<8x16x128xf32>
    %140 = vector.extract_strided_slice %0 {offsets = [18, 0], sizes = [1, 128], strides = [1, 1]} : vector<25x128xf32> to vector<1x128xf32>
    %141 = vector.shape_cast %140 : vector<1x128xf32> to vector<128xf32>
    %142 = vector.shape_cast %141 : vector<128xf32> to vector<1x1x128xf32>
    %143 = vector.broadcast %142 : vector<1x1x128xf32> to vector<8x16x128xf32>
    %144 = arith.mulf %139, %143 : vector<8x16x128xf32>
    %145 = arith.addf %138, %144 : vector<8x16x128xf32>
    %146 = vector.extract_strided_slice %117 {offsets = [4, 0, 0], sizes = [8, 16, 128], strides = [1, 1, 1]} : vector<12x24x128xf32> to vector<8x16x128xf32>
    %147 = vector.extract_strided_slice %0 {offsets = [19, 0], sizes = [1, 128], strides = [1, 1]} : vector<25x128xf32> to vector<1x128xf32>
    %148 = vector.shape_cast %147 : vector<1x128xf32> to vector<128xf32>
    %149 = vector.shape_cast %148 : vector<128xf32> to vector<1x1x128xf32>
    %150 = vector.broadcast %149 : vector<1x1x128xf32> to vector<8x16x128xf32>
    %151 = arith.mulf %146, %150 : vector<8x16x128xf32>
    %152 = arith.addf %145, %151 : vector<8x16x128xf32>
    %c0_24 = arith.constant 0 : index
    %c0_25 = arith.constant 0 : index
    %c0_26 = arith.constant 0 : index
    %153 = vector.load %arg10[%c0_24, %c0_25, %c0_26] : memref<20x24x128xf32, #tpu.memory_space<vmem>>, vector<12x24x128xf32>
    %c22_i32 = arith.constant 22 : i32
    %154 = tpu.dynamic_rotate %153 by %c22_i32 dim 1 : vector<12x24x128xf32>, i32 -> vector<12x24x128xf32>
    %155 = vector.extract_strided_slice %154 {offsets = [0, 0, 0], sizes = [8, 16, 128], strides = [1, 1, 1]} : vector<12x24x128xf32> to vector<8x16x128xf32>
    %156 = vector.extract_strided_slice %0 {offsets = [20, 0], sizes = [1, 128], strides = [1, 1]} : vector<25x128xf32> to vector<1x128xf32>
    %157 = vector.shape_cast %156 : vector<1x128xf32> to vector<128xf32>
    %158 = vector.shape_cast %157 : vector<128xf32> to vector<1x1x128xf32>
    %159 = vector.broadcast %158 : vector<1x1x128xf32> to vector<8x16x128xf32>
    %160 = arith.mulf %155, %159 : vector<8x16x128xf32>
    %161 = arith.addf %152, %160 : vector<8x16x128xf32>
    %162 = vector.extract_strided_slice %154 {offsets = [1, 0, 0], sizes = [8, 16, 128], strides = [1, 1, 1]} : vector<12x24x128xf32> to vector<8x16x128xf32>
    %163 = vector.extract_strided_slice %0 {offsets = [21, 0], sizes = [1, 128], strides = [1, 1]} : vector<25x128xf32> to vector<1x128xf32>
    %164 = vector.shape_cast %163 : vector<1x128xf32> to vector<128xf32>
    %165 = vector.shape_cast %164 : vector<128xf32> to vector<1x1x128xf32>
    %166 = vector.broadcast %165 : vector<1x1x128xf32> to vector<8x16x128xf32>
    %167 = arith.mulf %162, %166 : vector<8x16x128xf32>
    %168 = arith.addf %161, %167 : vector<8x16x128xf32>
    %169 = vector.extract_strided_slice %154 {offsets = [2, 0, 0], sizes = [8, 16, 128], strides = [1, 1, 1]} : vector<12x24x128xf32> to vector<8x16x128xf32>
    %170 = vector.extract_strided_slice %0 {offsets = [22, 0], sizes = [1, 128], strides = [1, 1]} : vector<25x128xf32> to vector<1x128xf32>
    %171 = vector.shape_cast %170 : vector<1x128xf32> to vector<128xf32>
    %172 = vector.shape_cast %171 : vector<128xf32> to vector<1x1x128xf32>
    %173 = vector.broadcast %172 : vector<1x1x128xf32> to vector<8x16x128xf32>
    %174 = arith.mulf %169, %173 : vector<8x16x128xf32>
    %175 = arith.addf %168, %174 : vector<8x16x128xf32>
    %176 = vector.extract_strided_slice %154 {offsets = [3, 0, 0], sizes = [8, 16, 128], strides = [1, 1, 1]} : vector<12x24x128xf32> to vector<8x16x128xf32>
    %177 = vector.extract_strided_slice %0 {offsets = [23, 0], sizes = [1, 128], strides = [1, 1]} : vector<25x128xf32> to vector<1x128xf32>
    %178 = vector.shape_cast %177 : vector<1x128xf32> to vector<128xf32>
    %179 = vector.shape_cast %178 : vector<128xf32> to vector<1x1x128xf32>
    %180 = vector.broadcast %179 : vector<1x1x128xf32> to vector<8x16x128xf32>
    %181 = arith.mulf %176, %180 : vector<8x16x128xf32>
    %182 = arith.addf %175, %181 : vector<8x16x128xf32>
    %183 = vector.extract_strided_slice %154 {offsets = [4, 0, 0], sizes = [8, 16, 128], strides = [1, 1, 1]} : vector<12x24x128xf32> to vector<8x16x128xf32>
    %184 = vector.extract_strided_slice %0 {offsets = [24, 0], sizes = [1, 128], strides = [1, 1]} : vector<25x128xf32> to vector<1x128xf32>
    %185 = vector.shape_cast %184 : vector<1x128xf32> to vector<128xf32>
    %186 = vector.shape_cast %185 : vector<128xf32> to vector<1x1x128xf32>
    %187 = vector.broadcast %186 : vector<1x1x128xf32> to vector<8x16x128xf32>
    %188 = arith.mulf %183, %187 : vector<8x16x128xf32>
    %189 = arith.addf %182, %188 : vector<8x16x128xf32>
    %190 = vector.shape_cast %1 : vector<1x128xf32> to vector<1x1x128xf32>
    %191 = vector.broadcast %190 : vector<1x1x128xf32> to vector<8x16x128xf32>
    %192 = arith.addf %189, %191 : vector<8x16x128xf32>
    %cst_27 = arith.constant 0.000000e+00 : f32
    %193 = vector.broadcast %cst_27 : f32 to vector<8x16x128xf32>
    %194 = arith.maximumf %192, %193 : vector<8x16x128xf32>
    %195 = vector.shape_cast %194 : vector<8x16x128xf32> to vector<128x128xf32>
    %c0_28 = arith.constant 0 : index
    %c0_29 = arith.constant 0 : index
    %196 = vector.load %arg11[%c0_28, %c0_29] : memref<256x128xf32, #tpu.memory_space<vmem>>, vector<128x128xf32>
    tpu.vector_store %arg11[%c0_28, %c0_29], %195 {strides = array<i32>} : memref<256x128xf32, #tpu.memory_space<vmem>>, vector<128x128xf32>,
    %c8 = arith.constant 8 : index
    %c0_30 = arith.constant 0 : index
    %c0_31 = arith.constant 0 : index
    %197 = vector.load %arg10[%c8, %c0_30, %c0_31] : memref<20x24x128xf32, #tpu.memory_space<vmem>>, vector<12x24x128xf32>
    %c2_i32_32 = arith.constant 2 : i32
    %198 = tpu.dynamic_rotate %197 by %c2_i32_32 dim 1 : vector<12x24x128xf32>, i32 -> vector<12x24x128xf32>
    %199 = vector.extract_strided_slice %198 {offsets = [0, 0, 0], sizes = [8, 16, 128], strides = [1, 1, 1]} : vector<12x24x128xf32> to vector<8x16x128xf32>
    %200 = vector.extract_strided_slice %0 {offsets = [0, 0], sizes = [1, 128], strides = [1, 1]} : vector<25x128xf32> to vector<1x128xf32>
    %201 = vector.shape_cast %200 : vector<1x128xf32> to vector<128xf32>
    %202 = vector.shape_cast %201 : vector<128xf32> to vector<1x1x128xf32>
    %203 = vector.broadcast %202 : vector<1x1x128xf32> to vector<8x16x128xf32>
    %204 = arith.mulf %199, %203 : vector<8x16x128xf32>
    %205 = vector.extract_strided_slice %198 {offsets = [1, 0, 0], sizes = [8, 16, 128], strides = [1, 1, 1]} : vector<12x24x128xf32> to vector<8x16x128xf32>
    %206 = vector.extract_strided_slice %0 {offsets = [1, 0], sizes = [1, 128], strides = [1, 1]} : vector<25x128xf32> to vector<1x128xf32>
    %207 = vector.shape_cast %206 : vector<1x128xf32> to vector<128xf32>
    %208 = vector.shape_cast %207 : vector<128xf32> to vector<1x1x128xf32>
    %209 = vector.broadcast %208 : vector<1x1x128xf32> to vector<8x16x128xf32>
    %210 = arith.mulf %205, %209 : vector<8x16x128xf32>
    %211 = arith.addf %204, %210 : vector<8x16x128xf32>
    %212 = vector.extract_strided_slice %198 {offsets = [2, 0, 0], sizes = [8, 16, 128], strides = [1, 1, 1]} : vector<12x24x128xf32> to vector<8x16x128xf32>
    %213 = vector.extract_strided_slice %0 {offsets = [2, 0], sizes = [1, 128], strides = [1, 1]} : vector<25x128xf32> to vector<1x128xf32>
    %214 = vector.shape_cast %213 : vector<1x128xf32> to vector<128xf32>
    %215 = vector.shape_cast %214 : vector<128xf32> to vector<1x1x128xf32>
    %216 = vector.broadcast %215 : vector<1x1x128xf32> to vector<8x16x128xf32>
    %217 = arith.mulf %212, %216 : vector<8x16x128xf32>
    %218 = arith.addf %211, %217 : vector<8x16x128xf32>
    %219 = vector.extract_strided_slice %198 {offsets = [3, 0, 0], sizes = [8, 16, 128], strides = [1, 1, 1]} : vector<12x24x128xf32> to vector<8x16x128xf32>
    %220 = vector.extract_strided_slice %0 {offsets = [3, 0], sizes = [1, 128], strides = [1, 1]} : vector<25x128xf32> to vector<1x128xf32>
    %221 = vector.shape_cast %220 : vector<1x128xf32> to vector<128xf32>
    %222 = vector.shape_cast %221 : vector<128xf32> to vector<1x1x128xf32>
    %223 = vector.broadcast %222 : vector<1x1x128xf32> to vector<8x16x128xf32>
    %224 = arith.mulf %219, %223 : vector<8x16x128xf32>
    %225 = arith.addf %218, %224 : vector<8x16x128xf32>
    %226 = vector.extract_strided_slice %198 {offsets = [4, 0, 0], sizes = [8, 16, 128], strides = [1, 1, 1]} : vector<12x24x128xf32> to vector<8x16x128xf32>
    %227 = vector.extract_strided_slice %0 {offsets = [4, 0], sizes = [1, 128], strides = [1, 1]} : vector<25x128xf32> to vector<1x128xf32>
    %228 = vector.shape_cast %227 : vector<1x128xf32> to vector<128xf32>
    %229 = vector.shape_cast %228 : vector<128xf32> to vector<1x1x128xf32>
    %230 = vector.broadcast %229 : vector<1x1x128xf32> to vector<8x16x128xf32>
    %231 = arith.mulf %226, %230 : vector<8x16x128xf32>
    %232 = arith.addf %225, %231 : vector<8x16x128xf32>
    %c8_33 = arith.constant 8 : index
    %c0_34 = arith.constant 0 : index
    %c0_35 = arith.constant 0 : index
    %233 = vector.load %arg10[%c8_33, %c0_34, %c0_35] : memref<20x24x128xf32, #tpu.memory_space<vmem>>, vector<12x24x128xf32>
    %c1_i32_36 = arith.constant 1 : i32
    %234 = tpu.dynamic_rotate %233 by %c1_i32_36 dim 1 : vector<12x24x128xf32>, i32 -> vector<12x24x128xf32>
    %235 = vector.extract_strided_slice %234 {offsets = [0, 0, 0], sizes = [8, 16, 128], strides = [1, 1, 1]} : vector<12x24x128xf32> to vector<8x16x128xf32>
    %236 = vector.extract_strided_slice %0 {offsets = [5, 0], sizes = [1, 128], strides = [1, 1]} : vector<25x128xf32> to vector<1x128xf32>
    %237 = vector.shape_cast %236 : vector<1x128xf32> to vector<128xf32>
    %238 = vector.shape_cast %237 : vector<128xf32> to vector<1x1x128xf32>
    %239 = vector.broadcast %238 : vector<1x1x128xf32> to vector<8x16x128xf32>
    %240 = arith.mulf %235, %239 : vector<8x16x128xf32>
    %241 = arith.addf %232, %240 : vector<8x16x128xf32>
    %242 = vector.extract_strided_slice %234 {offsets = [1, 0, 0], sizes = [8, 16, 128], strides = [1, 1, 1]} : vector<12x24x128xf32> to vector<8x16x128xf32>
    %243 = vector.extract_strided_slice %0 {offsets = [6, 0], sizes = [1, 128], strides = [1, 1]} : vector<25x128xf32> to vector<1x128xf32>
    %244 = vector.shape_cast %243 : vector<1x128xf32> to vector<128xf32>
    %245 = vector.shape_cast %244 : vector<128xf32> to vector<1x1x128xf32>
    %246 = vector.broadcast %245 : vector<1x1x128xf32> to vector<8x16x128xf32>
    %247 = arith.mulf %242, %246 : vector<8x16x128xf32>
    %248 = arith.addf %241, %247 : vector<8x16x128xf32>
    %249 = vector.extract_strided_slice %234 {offsets = [2, 0, 0], sizes = [8, 16, 128], strides = [1, 1, 1]} : vector<12x24x128xf32> to vector<8x16x128xf32>
    %250 = vector.extract_strided_slice %0 {offsets = [7, 0], sizes = [1, 128], strides = [1, 1]} : vector<25x128xf32> to vector<1x128xf32>
    %251 = vector.shape_cast %250 : vector<1x128xf32> to vector<128xf32>
    %252 = vector.shape_cast %251 : vector<128xf32> to vector<1x1x128xf32>
    %253 = vector.broadcast %252 : vector<1x1x128xf32> to vector<8x16x128xf32>
    %254 = arith.mulf %249, %253 : vector<8x16x128xf32>
    %255 = arith.addf %248, %254 : vector<8x16x128xf32>
    %256 = vector.extract_strided_slice %234 {offsets = [3, 0, 0], sizes = [8, 16, 128], strides = [1, 1, 1]} : vector<12x24x128xf32> to vector<8x16x128xf32>
    %257 = vector.extract_strided_slice %0 {offsets = [8, 0], sizes = [1, 128], strides = [1, 1]} : vector<25x128xf32> to vector<1x128xf32>
    %258 = vector.shape_cast %257 : vector<1x128xf32> to vector<128xf32>
    %259 = vector.shape_cast %258 : vector<128xf32> to vector<1x1x128xf32>
    %260 = vector.broadcast %259 : vector<1x1x128xf32> to vector<8x16x128xf32>
    %261 = arith.mulf %256, %260 : vector<8x16x128xf32>
    %262 = arith.addf %255, %261 : vector<8x16x128xf32>
    %263 = vector.extract_strided_slice %234 {offsets = [4, 0, 0], sizes = [8, 16, 128], strides = [1, 1, 1]} : vector<12x24x128xf32> to vector<8x16x128xf32>
    %264 = vector.extract_strided_slice %0 {offsets = [9, 0], sizes = [1, 128], strides = [1, 1]} : vector<25x128xf32> to vector<1x128xf32>
    %265 = vector.shape_cast %264 : vector<1x128xf32> to vector<128xf32>
    %266 = vector.shape_cast %265 : vector<128xf32> to vector<1x1x128xf32>
    %267 = vector.broadcast %266 : vector<1x1x128xf32> to vector<8x16x128xf32>
    %268 = arith.mulf %263, %267 : vector<8x16x128xf32>
    %269 = arith.addf %262, %268 : vector<8x16x128xf32>
    %c8_37 = arith.constant 8 : index
    %c0_38 = arith.constant 0 : index
    %c0_39 = arith.constant 0 : index
    %270 = vector.load %arg10[%c8_37, %c0_38, %c0_39] : memref<20x24x128xf32, #tpu.memory_space<vmem>>, vector<12x24x128xf32>
    %271 = vector.extract_strided_slice %270 {offsets = [0, 0, 0], sizes = [8, 16, 128], strides = [1, 1, 1]} : vector<12x24x128xf32> to vector<8x16x128xf32>
    %272 = vector.extract_strided_slice %0 {offsets = [10, 0], sizes = [1, 128], strides = [1, 1]} : vector<25x128xf32> to vector<1x128xf32>
    %273 = vector.shape_cast %272 : vector<1x128xf32> to vector<128xf32>
    %274 = vector.shape_cast %273 : vector<128xf32> to vector<1x1x128xf32>
    %275 = vector.broadcast %274 : vector<1x1x128xf32> to vector<8x16x128xf32>
    %276 = arith.mulf %271, %275 : vector<8x16x128xf32>
    %277 = arith.addf %269, %276 : vector<8x16x128xf32>
    %278 = vector.extract_strided_slice %270 {offsets = [1, 0, 0], sizes = [8, 16, 128], strides = [1, 1, 1]} : vector<12x24x128xf32> to vector<8x16x128xf32>
    %279 = vector.extract_strided_slice %0 {offsets = [11, 0], sizes = [1, 128], strides = [1, 1]} : vector<25x128xf32> to vector<1x128xf32>
    %280 = vector.shape_cast %279 : vector<1x128xf32> to vector<128xf32>
    %281 = vector.shape_cast %280 : vector<128xf32> to vector<1x1x128xf32>
    %282 = vector.broadcast %281 : vector<1x1x128xf32> to vector<8x16x128xf32>
    %283 = arith.mulf %278, %282 : vector<8x16x128xf32>
    %284 = arith.addf %277, %283 : vector<8x16x128xf32>
    %285 = vector.extract_strided_slice %270 {offsets = [2, 0, 0], sizes = [8, 16, 128], strides = [1, 1, 1]} : vector<12x24x128xf32> to vector<8x16x128xf32>
    %286 = vector.extract_strided_slice %0 {offsets = [12, 0], sizes = [1, 128], strides = [1, 1]} : vector<25x128xf32> to vector<1x128xf32>
    %287 = vector.shape_cast %286 : vector<1x128xf32> to vector<128xf32>
    %288 = vector.shape_cast %287 : vector<128xf32> to vector<1x1x128xf32>
    %289 = vector.broadcast %288 : vector<1x1x128xf32> to vector<8x16x128xf32>
    %290 = arith.mulf %285, %289 : vector<8x16x128xf32>
    %291 = arith.addf %284, %290 : vector<8x16x128xf32>
    %292 = vector.extract_strided_slice %270 {offsets = [3, 0, 0], sizes = [8, 16, 128], strides = [1, 1, 1]} : vector<12x24x128xf32> to vector<8x16x128xf32>
    %293 = vector.extract_strided_slice %0 {offsets = [13, 0], sizes = [1, 128], strides = [1, 1]} : vector<25x128xf32> to vector<1x128xf32>
    %294 = vector.shape_cast %293 : vector<1x128xf32> to vector<128xf32>
    %295 = vector.shape_cast %294 : vector<128xf32> to vector<1x1x128xf32>
    %296 = vector.broadcast %295 : vector<1x1x128xf32> to vector<8x16x128xf32>
    %297 = arith.mulf %292, %296 : vector<8x16x128xf32>
    %298 = arith.addf %291, %297 : vector<8x16x128xf32>
    %299 = vector.extract_strided_slice %270 {offsets = [4, 0, 0], sizes = [8, 16, 128], strides = [1, 1, 1]} : vector<12x24x128xf32> to vector<8x16x128xf32>
    %300 = vector.extract_strided_slice %0 {offsets = [14, 0], sizes = [1, 128], strides = [1, 1]} : vector<25x128xf32> to vector<1x128xf32>
    %301 = vector.shape_cast %300 : vector<1x128xf32> to vector<128xf32>
    %302 = vector.shape_cast %301 : vector<128xf32> to vector<1x1x128xf32>
    %303 = vector.broadcast %302 : vector<1x1x128xf32> to vector<8x16x128xf32>
    %304 = arith.mulf %299, %303 : vector<8x16x128xf32>
    %305 = arith.addf %298, %304 : vector<8x16x128xf32>
    %c8_40 = arith.constant 8 : index
    %c0_41 = arith.constant 0 : index
    %c0_42 = arith.constant 0 : index
    %306 = vector.load %arg10[%c8_40, %c0_41, %c0_42] : memref<20x24x128xf32, #tpu.memory_space<vmem>>, vector<12x24x128xf32>
    %c23_i32_43 = arith.constant 23 : i32
    %307 = tpu.dynamic_rotate %306 by %c23_i32_43 dim 1 : vector<12x24x128xf32>, i32 -> vector<12x24x128xf32>
    %308 = vector.extract_strided_slice %307 {offsets = [0, 0, 0], sizes = [8, 16, 128], strides = [1, 1, 1]} : vector<12x24x128xf32> to vector<8x16x128xf32>
    %309 = vector.extract_strided_slice %0 {offsets = [15, 0], sizes = [1, 128], strides = [1, 1]} : vector<25x128xf32> to vector<1x128xf32>
    %310 = vector.shape_cast %309 : vector<1x128xf32> to vector<128xf32>
    %311 = vector.shape_cast %310 : vector<128xf32> to vector<1x1x128xf32>
    %312 = vector.broadcast %311 : vector<1x1x128xf32> to vector<8x16x128xf32>
    %313 = arith.mulf %308, %312 : vector<8x16x128xf32>
    %314 = arith.addf %305, %313 : vector<8x16x128xf32>
    %315 = vector.extract_strided_slice %307 {offsets = [1, 0, 0], sizes = [8, 16, 128], strides = [1, 1, 1]} : vector<12x24x128xf32> to vector<8x16x128xf32>
    %316 = vector.extract_strided_slice %0 {offsets = [16, 0], sizes = [1, 128], strides = [1, 1]} : vector<25x128xf32> to vector<1x128xf32>
    %317 = vector.shape_cast %316 : vector<1x128xf32> to vector<128xf32>
    %318 = vector.shape_cast %317 : vector<128xf32> to vector<1x1x128xf32>
    %319 = vector.broadcast %318 : vector<1x1x128xf32> to vector<8x16x128xf32>
    %320 = arith.mulf %315, %319 : vector<8x16x128xf32>
    %321 = arith.addf %314, %320 : vector<8x16x128xf32>
    %322 = vector.extract_strided_slice %307 {offsets = [2, 0, 0], sizes = [8, 16, 128], strides = [1, 1, 1]} : vector<12x24x128xf32> to vector<8x16x128xf32>
    %323 = vector.extract_strided_slice %0 {offsets = [17, 0], sizes = [1, 128], strides = [1, 1]} : vector<25x128xf32> to vector<1x128xf32>
    %324 = vector.shape_cast %323 : vector<1x128xf32> to vector<128xf32>
    %325 = vector.shape_cast %324 : vector<128xf32> to vector<1x1x128xf32>
    %326 = vector.broadcast %325 : vector<1x1x128xf32> to vector<8x16x128xf32>
    %327 = arith.mulf %322, %326 : vector<8x16x128xf32>
    %328 = arith.addf %321, %327 : vector<8x16x128xf32>
    %329 = vector.extract_strided_slice %307 {offsets = [3, 0, 0], sizes = [8, 16, 128], strides = [1, 1, 1]} : vector<12x24x128xf32> to vector<8x16x128xf32>
    %330 = vector.extract_strided_slice %0 {offsets = [18, 0], sizes = [1, 128], strides = [1, 1]} : vector<25x128xf32> to vector<1x128xf32>
    %331 = vector.shape_cast %330 : vector<1x128xf32> to vector<128xf32>
    %332 = vector.shape_cast %331 : vector<128xf32> to vector<1x1x128xf32>
    %333 = vector.broadcast %332 : vector<1x1x128xf32> to vector<8x16x128xf32>
    %334 = arith.mulf %329, %333 : vector<8x16x128xf32>
    %335 = arith.addf %328, %334 : vector<8x16x128xf32>
    %336 = vector.extract_strided_slice %307 {offsets = [4, 0, 0], sizes = [8, 16, 128], strides = [1, 1, 1]} : vector<12x24x128xf32> to vector<8x16x128xf32>
    %337 = vector.extract_strided_slice %0 {offsets = [19, 0], sizes = [1, 128], strides = [1, 1]} : vector<25x128xf32> to vector<1x128xf32>
    %338 = vector.shape_cast %337 : vector<1x128xf32> to vector<128xf32>
    %339 = vector.shape_cast %338 : vector<128xf32> to vector<1x1x128xf32>
    %340 = vector.broadcast %339 : vector<1x1x128xf32> to vector<8x16x128xf32>
    %341 = arith.mulf %336, %340 : vector<8x16x128xf32>
    %342 = arith.addf %335, %341 : vector<8x16x128xf32>
    %c8_44 = arith.constant 8 : index
    %c0_45 = arith.constant 0 : index
    %c0_46 = arith.constant 0 : index
    %343 = vector.load %arg10[%c8_44, %c0_45, %c0_46] : memref<20x24x128xf32, #tpu.memory_space<vmem>>, vector<12x24x128xf32>
    %c22_i32_47 = arith.constant 22 : i32
    %344 = tpu.dynamic_rotate %343 by %c22_i32_47 dim 1 : vector<12x24x128xf32>, i32 -> vector<12x24x128xf32>
    %345 = vector.extract_strided_slice %344 {offsets = [0, 0, 0], sizes = [8, 16, 128], strides = [1, 1, 1]} : vector<12x24x128xf32> to vector<8x16x128xf32>
    %346 = vector.extract_strided_slice %0 {offsets = [20, 0], sizes = [1, 128], strides = [1, 1]} : vector<25x128xf32> to vector<1x128xf32>
    %347 = vector.shape_cast %346 : vector<1x128xf32> to vector<128xf32>
    %348 = vector.shape_cast %347 : vector<128xf32> to vector<1x1x128xf32>
    %349 = vector.broadcast %348 : vector<1x1x128xf32> to vector<8x16x128xf32>
    %350 = arith.mulf %345, %349 : vector<8x16x128xf32>
    %351 = arith.addf %342, %350 : vector<8x16x128xf32>
    %352 = vector.extract_strided_slice %344 {offsets = [1, 0, 0], sizes = [8, 16, 128], strides = [1, 1, 1]} : vector<12x24x128xf32> to vector<8x16x128xf32>
    %353 = vector.extract_strided_slice %0 {offsets = [21, 0], sizes = [1, 128], strides = [1, 1]} : vector<25x128xf32> to vector<1x128xf32>
    %354 = vector.shape_cast %353 : vector<1x128xf32> to vector<128xf32>
    %355 = vector.shape_cast %354 : vector<128xf32> to vector<1x1x128xf32>
    %356 = vector.broadcast %355 : vector<1x1x128xf32> to vector<8x16x128xf32>
    %357 = arith.mulf %352, %356 : vector<8x16x128xf32>
    %358 = arith.addf %351, %357 : vector<8x16x128xf32>
    %359 = vector.extract_strided_slice %344 {offsets = [2, 0, 0], sizes = [8, 16, 128], strides = [1, 1, 1]} : vector<12x24x128xf32> to vector<8x16x128xf32>
    %360 = vector.extract_strided_slice %0 {offsets = [22, 0], sizes = [1, 128], strides = [1, 1]} : vector<25x128xf32> to vector<1x128xf32>
    %361 = vector.shape_cast %360 : vector<1x128xf32> to vector<128xf32>
    %362 = vector.shape_cast %361 : vector<128xf32> to vector<1x1x128xf32>
    %363 = vector.broadcast %362 : vector<1x1x128xf32> to vector<8x16x128xf32>
    %364 = arith.mulf %359, %363 : vector<8x16x128xf32>
    %365 = arith.addf %358, %364 : vector<8x16x128xf32>
    %366 = vector.extract_strided_slice %344 {offsets = [3, 0, 0], sizes = [8, 16, 128], strides = [1, 1, 1]} : vector<12x24x128xf32> to vector<8x16x128xf32>
    %367 = vector.extract_strided_slice %0 {offsets = [23, 0], sizes = [1, 128], strides = [1, 1]} : vector<25x128xf32> to vector<1x128xf32>
    %368 = vector.shape_cast %367 : vector<1x128xf32> to vector<128xf32>
    %369 = vector.shape_cast %368 : vector<128xf32> to vector<1x1x128xf32>
    %370 = vector.broadcast %369 : vector<1x1x128xf32> to vector<8x16x128xf32>
    %371 = arith.mulf %366, %370 : vector<8x16x128xf32>
    %372 = arith.addf %365, %371 : vector<8x16x128xf32>
    %373 = vector.extract_strided_slice %344 {offsets = [4, 0, 0], sizes = [8, 16, 128], strides = [1, 1, 1]} : vector<12x24x128xf32> to vector<8x16x128xf32>
    %374 = vector.extract_strided_slice %0 {offsets = [24, 0], sizes = [1, 128], strides = [1, 1]} : vector<25x128xf32> to vector<1x128xf32>
    %375 = vector.shape_cast %374 : vector<1x128xf32> to vector<128xf32>
    %376 = vector.shape_cast %375 : vector<128xf32> to vector<1x1x128xf32>
    %377 = vector.broadcast %376 : vector<1x1x128xf32> to vector<8x16x128xf32>
    %378 = arith.mulf %373, %377 : vector<8x16x128xf32>
    %379 = arith.addf %372, %378 : vector<8x16x128xf32>
    %380 = vector.shape_cast %1 : vector<1x128xf32> to vector<1x1x128xf32>
    %381 = vector.broadcast %380 : vector<1x1x128xf32> to vector<8x16x128xf32>
    %382 = arith.addf %379, %381 : vector<8x16x128xf32>
    %cst_48 = arith.constant 0.000000e+00 : f32
    %383 = vector.broadcast %cst_48 : f32 to vector<8x16x128xf32>
    %384 = arith.maximumf %382, %383 : vector<8x16x128xf32>
    %385 = vector.shape_cast %384 : vector<8x16x128xf32> to vector<128x128xf32>
    %c128 = arith.constant 128 : index
    %c0_49 = arith.constant 0 : index
    %386 = vector.load %arg11[%c128, %c0_49] : memref<256x128xf32, #tpu.memory_space<vmem>>, vector<128x128xf32>
    tpu.vector_store %arg11[%c128, %c0_49], %385 {strides = array<i32>} : memref<256x128xf32, #tpu.memory_space<vmem>>, vector<128x128xf32>,
    %c0_50 = arith.constant 0 : index
    %c0_51 = arith.constant 0 : index
    %387 = vector.load %arg11[%c0_50, %c0_51] : memref<256x128xf32, #tpu.memory_space<vmem>>, vector<256x128xf32>
    %c0_52 = arith.constant 0 : index
    %c0_53 = arith.constant 0 : index
    %388 = vector.load %arg4[%c0_52, %c0_53] : memref<128x32xf32, #tpu.memory_space<vmem>>, vector<128x32xf32>
    %cst_54 = arith.constant dense<0.000000e+00> : vector<256x32xf32>
    %389 = tpu.matmul %387, %388, %cst_54 {dimension_numbers = #tpu.dot_dimension_numbers<[1], [0], [0], [1], [0, 0, 1, 1], [], []>} : vector<256x128xf32>, vector<128x32xf32>, vector<256x32xf32> -> vector<256x32xf32>
    %c0_55 = arith.constant 0 : index
    %c0_56 = arith.constant 0 : index
    %390 = vector.load %arg5[%c0_55, %c0_56] : memref<1x32xf32, #tpu.memory_space<vmem>>, vector<1x32xf32>
    %391 = vector.broadcast %390 : vector<1x32xf32> to vector<256x32xf32>
    %392 = arith.addf %389, %391 : vector<256x32xf32>
    %cst_57 = arith.constant 0.000000e+00 : f32
    %393 = vector.broadcast %cst_57 : f32 to vector<256x32xf32>
    %394 = arith.maximumf %392, %393 : vector<256x32xf32>
    %c0_58 = arith.constant 0 : index
    %c0_59 = arith.constant 0 : index
    %395 = vector.load %arg6[%c0_58, %c0_59] : memref<32x2xf32, #tpu.memory_space<vmem>>, vector<32x2xf32>
    %cst_60 = arith.constant dense<0.000000e+00> : vector<256x2xf32>
    %396 = tpu.matmul %394, %395, %cst_60 {dimension_numbers = #tpu.dot_dimension_numbers<[1], [0], [0], [1], [0, 0, 1, 1], [], []>} : vector<256x32xf32>, vector<32x2xf32>, vector<256x2xf32> -> vector<256x2xf32>
    %397 = vector.extract_strided_slice %396 {offsets = [0, 0], sizes = [16, 1], strides = [1, 1]} : vector<256x2xf32> to vector<16x1xf32>
    %c0_61 = arith.constant 0 : index
    %c0_62 = arith.constant 0 : index
    %c0_63 = arith.constant 0 : index
    %398 = vector.load %arg8[%c0_61, %c0_62, %c0_63] : memref<2x16x128xf32, #tpu.memory_space<vmem>>, vector<1x1x128xf32>
    %399 = vector.shape_cast %398 : vector<1x1x128xf32> to vector<128xf32>
    %400 = vector.shape_cast %399 : vector<128xf32> to vector<1x128xf32>
    %401 = vector.broadcast %397 : vector<16x1xf32> to vector<16x128xf32>
    %402 = vector.broadcast %400 : vector<1x128xf32> to vector<16x128xf32>
    %403 = arith.mulf %401, %402 : vector<16x128xf32>
    %404 = vector.extract_strided_slice %396 {offsets = [16, 0], sizes = [16, 1], strides = [1, 1]} : vector<256x2xf32> to vector<16x1xf32>
    %c0_64 = arith.constant 0 : index
    %c1 = arith.constant 1 : index
    %c0_65 = arith.constant 0 : index
    %405 = vector.load %arg8[%c0_64, %c1, %c0_65] : memref<2x16x128xf32, #tpu.memory_space<vmem>>, vector<1x1x128xf32>
    %406 = vector.shape_cast %405 : vector<1x1x128xf32> to vector<128xf32>
    %407 = vector.shape_cast %406 : vector<128xf32> to vector<1x128xf32>
    %408 = vector.broadcast %404 : vector<16x1xf32> to vector<16x128xf32>
    %409 = vector.broadcast %407 : vector<1x128xf32> to vector<16x128xf32>
    %410 = arith.mulf %408, %409 : vector<16x128xf32>
    %411 = arith.addf %403, %410 : vector<16x128xf32>
    %412 = vector.extract_strided_slice %396 {offsets = [32, 0], sizes = [16, 1], strides = [1, 1]} : vector<256x2xf32> to vector<16x1xf32>
    %c0_66 = arith.constant 0 : index
    %c2_67 = arith.constant 2 : index
    %c0_68 = arith.constant 0 : index
    %413 = vector.load %arg8[%c0_66, %c2_67, %c0_68] : memref<2x16x128xf32, #tpu.memory_space<vmem>>, vector<1x1x128xf32>
    %414 = vector.shape_cast %413 : vector<1x1x128xf32> to vector<128xf32>
    %415 = vector.shape_cast %414 : vector<128xf32> to vector<1x128xf32>
    %416 = vector.broadcast %412 : vector<16x1xf32> to vector<16x128xf32>
    %417 = vector.broadcast %415 : vector<1x128xf32> to vector<16x128xf32>
    %418 = arith.mulf %416, %417 : vector<16x128xf32>
    %419 = arith.addf %411, %418 : vector<16x128xf32>
    %420 = vector.extract_strided_slice %396 {offsets = [48, 0], sizes = [16, 1], strides = [1, 1]} : vector<256x2xf32> to vector<16x1xf32>
    %c0_69 = arith.constant 0 : index
    %c3 = arith.constant 3 : index
    %c0_70 = arith.constant 0 : index
    %421 = vector.load %arg8[%c0_69, %c3, %c0_70] : memref<2x16x128xf32, #tpu.memory_space<vmem>>, vector<1x1x128xf32>
    %422 = vector.shape_cast %421 : vector<1x1x128xf32> to vector<128xf32>
    %423 = vector.shape_cast %422 : vector<128xf32> to vector<1x128xf32>
    %424 = vector.broadcast %420 : vector<16x1xf32> to vector<16x128xf32>
    %425 = vector.broadcast %423 : vector<1x128xf32> to vector<16x128xf32>
    %426 = arith.mulf %424, %425 : vector<16x128xf32>
    %427 = arith.addf %419, %426 : vector<16x128xf32>
    %428 = vector.extract_strided_slice %396 {offsets = [64, 0], sizes = [16, 1], strides = [1, 1]} : vector<256x2xf32> to vector<16x1xf32>
    %c0_71 = arith.constant 0 : index
    %c4 = arith.constant 4 : index
    %c0_72 = arith.constant 0 : index
    %429 = vector.load %arg8[%c0_71, %c4, %c0_72] : memref<2x16x128xf32, #tpu.memory_space<vmem>>, vector<1x1x128xf32>
    %430 = vector.shape_cast %429 : vector<1x1x128xf32> to vector<128xf32>
    %431 = vector.shape_cast %430 : vector<128xf32> to vector<1x128xf32>
    %432 = vector.broadcast %428 : vector<16x1xf32> to vector<16x128xf32>
    %433 = vector.broadcast %431 : vector<1x128xf32> to vector<16x128xf32>
    %434 = arith.mulf %432, %433 : vector<16x128xf32>
    %435 = arith.addf %427, %434 : vector<16x128xf32>
    %436 = vector.extract_strided_slice %396 {offsets = [80, 0], sizes = [16, 1], strides = [1, 1]} : vector<256x2xf32> to vector<16x1xf32>
    %c0_73 = arith.constant 0 : index
    %c5 = arith.constant 5 : index
    %c0_74 = arith.constant 0 : index
    %437 = vector.load %arg8[%c0_73, %c5, %c0_74] : memref<2x16x128xf32, #tpu.memory_space<vmem>>, vector<1x1x128xf32>
    %438 = vector.shape_cast %437 : vector<1x1x128xf32> to vector<128xf32>
    %439 = vector.shape_cast %438 : vector<128xf32> to vector<1x128xf32>
    %440 = vector.broadcast %436 : vector<16x1xf32> to vector<16x128xf32>
    %441 = vector.broadcast %439 : vector<1x128xf32> to vector<16x128xf32>
    %442 = arith.mulf %440, %441 : vector<16x128xf32>
    %443 = arith.addf %435, %442 : vector<16x128xf32>
    %444 = vector.extract_strided_slice %396 {offsets = [96, 0], sizes = [16, 1], strides = [1, 1]} : vector<256x2xf32> to vector<16x1xf32>
    %c0_75 = arith.constant 0 : index
    %c6 = arith.constant 6 : index
    %c0_76 = arith.constant 0 : index
    %445 = vector.load %arg8[%c0_75, %c6, %c0_76] : memref<2x16x128xf32, #tpu.memory_space<vmem>>, vector<1x1x128xf32>
    %446 = vector.shape_cast %445 : vector<1x1x128xf32> to vector<128xf32>
    %447 = vector.shape_cast %446 : vector<128xf32> to vector<1x128xf32>
    %448 = vector.broadcast %444 : vector<16x1xf32> to vector<16x128xf32>
    %449 = vector.broadcast %447 : vector<1x128xf32> to vector<16x128xf32>
    %450 = arith.mulf %448, %449 : vector<16x128xf32>
    %451 = arith.addf %443, %450 : vector<16x128xf32>
    %452 = vector.extract_strided_slice %396 {offsets = [112, 0], sizes = [16, 1], strides = [1, 1]} : vector<256x2xf32> to vector<16x1xf32>
    %c0_77 = arith.constant 0 : index
    %c7 = arith.constant 7 : index
    %c0_78 = arith.constant 0 : index
    %453 = vector.load %arg8[%c0_77, %c7, %c0_78] : memref<2x16x128xf32, #tpu.memory_space<vmem>>, vector<1x1x128xf32>
    %454 = vector.shape_cast %453 : vector<1x1x128xf32> to vector<128xf32>
    %455 = vector.shape_cast %454 : vector<128xf32> to vector<1x128xf32>
    %456 = vector.broadcast %452 : vector<16x1xf32> to vector<16x128xf32>
    %457 = vector.broadcast %455 : vector<1x128xf32> to vector<16x128xf32>
    %458 = arith.mulf %456, %457 : vector<16x128xf32>
    %459 = arith.addf %451, %458 : vector<16x128xf32>
    %460 = vector.extract_strided_slice %396 {offsets = [128, 0], sizes = [16, 1], strides = [1, 1]} : vector<256x2xf32> to vector<16x1xf32>
    %c0_79 = arith.constant 0 : index
    %c8_80 = arith.constant 8 : index
    %c0_81 = arith.constant 0 : index
    %461 = vector.load %arg8[%c0_79, %c8_80, %c0_81] : memref<2x16x128xf32, #tpu.memory_space<vmem>>, vector<1x1x128xf32>
    %462 = vector.shape_cast %461 : vector<1x1x128xf32> to vector<128xf32>
    %463 = vector.shape_cast %462 : vector<128xf32> to vector<1x128xf32>
    %464 = vector.broadcast %460 : vector<16x1xf32> to vector<16x128xf32>
    %465 = vector.broadcast %463 : vector<1x128xf32> to vector<16x128xf32>
    %466 = arith.mulf %464, %465 : vector<16x128xf32>
    %467 = arith.addf %459, %466 : vector<16x128xf32>
    %468 = vector.extract_strided_slice %396 {offsets = [144, 0], sizes = [16, 1], strides = [1, 1]} : vector<256x2xf32> to vector<16x1xf32>
    %c0_82 = arith.constant 0 : index
    %c9 = arith.constant 9 : index
    %c0_83 = arith.constant 0 : index
    %469 = vector.load %arg8[%c0_82, %c9, %c0_83] : memref<2x16x128xf32, #tpu.memory_space<vmem>>, vector<1x1x128xf32>
    %470 = vector.shape_cast %469 : vector<1x1x128xf32> to vector<128xf32>
    %471 = vector.shape_cast %470 : vector<128xf32> to vector<1x128xf32>
    %472 = vector.broadcast %468 : vector<16x1xf32> to vector<16x128xf32>
    %473 = vector.broadcast %471 : vector<1x128xf32> to vector<16x128xf32>
    %474 = arith.mulf %472, %473 : vector<16x128xf32>
    %475 = arith.addf %467, %474 : vector<16x128xf32>
    %476 = vector.extract_strided_slice %396 {offsets = [160, 0], sizes = [16, 1], strides = [1, 1]} : vector<256x2xf32> to vector<16x1xf32>
    %c0_84 = arith.constant 0 : index
    %c10 = arith.constant 10 : index
    %c0_85 = arith.constant 0 : index
    %477 = vector.load %arg8[%c0_84, %c10, %c0_85] : memref<2x16x128xf32, #tpu.memory_space<vmem>>, vector<1x1x128xf32>
    %478 = vector.shape_cast %477 : vector<1x1x128xf32> to vector<128xf32>
    %479 = vector.shape_cast %478 : vector<128xf32> to vector<1x128xf32>
    %480 = vector.broadcast %476 : vector<16x1xf32> to vector<16x128xf32>
    %481 = vector.broadcast %479 : vector<1x128xf32> to vector<16x128xf32>
    %482 = arith.mulf %480, %481 : vector<16x128xf32>
    %483 = arith.addf %475, %482 : vector<16x128xf32>
    %484 = vector.extract_strided_slice %396 {offsets = [176, 0], sizes = [16, 1], strides = [1, 1]} : vector<256x2xf32> to vector<16x1xf32>
    %c0_86 = arith.constant 0 : index
    %c11 = arith.constant 11 : index
    %c0_87 = arith.constant 0 : index
    %485 = vector.load %arg8[%c0_86, %c11, %c0_87] : memref<2x16x128xf32, #tpu.memory_space<vmem>>, vector<1x1x128xf32>
    %486 = vector.shape_cast %485 : vector<1x1x128xf32> to vector<128xf32>
    %487 = vector.shape_cast %486 : vector<128xf32> to vector<1x128xf32>
    %488 = vector.broadcast %484 : vector<16x1xf32> to vector<16x128xf32>
    %489 = vector.broadcast %487 : vector<1x128xf32> to vector<16x128xf32>
    %490 = arith.mulf %488, %489 : vector<16x128xf32>
    %491 = arith.addf %483, %490 : vector<16x128xf32>
    %492 = vector.extract_strided_slice %396 {offsets = [192, 0], sizes = [16, 1], strides = [1, 1]} : vector<256x2xf32> to vector<16x1xf32>
    %c0_88 = arith.constant 0 : index
    %c12 = arith.constant 12 : index
    %c0_89 = arith.constant 0 : index
    %493 = vector.load %arg8[%c0_88, %c12, %c0_89] : memref<2x16x128xf32, #tpu.memory_space<vmem>>, vector<1x1x128xf32>
    %494 = vector.shape_cast %493 : vector<1x1x128xf32> to vector<128xf32>
    %495 = vector.shape_cast %494 : vector<128xf32> to vector<1x128xf32>
    %496 = vector.broadcast %492 : vector<16x1xf32> to vector<16x128xf32>
    %497 = vector.broadcast %495 : vector<1x128xf32> to vector<16x128xf32>
    %498 = arith.mulf %496, %497 : vector<16x128xf32>
    %499 = arith.addf %491, %498 : vector<16x128xf32>
    %500 = vector.extract_strided_slice %396 {offsets = [208, 0], sizes = [16, 1], strides = [1, 1]} : vector<256x2xf32> to vector<16x1xf32>
    %c0_90 = arith.constant 0 : index
    %c13 = arith.constant 13 : index
    %c0_91 = arith.constant 0 : index
    %501 = vector.load %arg8[%c0_90, %c13, %c0_91] : memref<2x16x128xf32, #tpu.memory_space<vmem>>, vector<1x1x128xf32>
    %502 = vector.shape_cast %501 : vector<1x1x128xf32> to vector<128xf32>
    %503 = vector.shape_cast %502 : vector<128xf32> to vector<1x128xf32>
    %504 = vector.broadcast %500 : vector<16x1xf32> to vector<16x128xf32>
    %505 = vector.broadcast %503 : vector<1x128xf32> to vector<16x128xf32>
    %506 = arith.mulf %504, %505 : vector<16x128xf32>
    %507 = arith.addf %499, %506 : vector<16x128xf32>
    %508 = vector.extract_strided_slice %396 {offsets = [224, 0], sizes = [16, 1], strides = [1, 1]} : vector<256x2xf32> to vector<16x1xf32>
    %c0_92 = arith.constant 0 : index
    %c14 = arith.constant 14 : index
    %c0_93 = arith.constant 0 : index
    %509 = vector.load %arg8[%c0_92, %c14, %c0_93] : memref<2x16x128xf32, #tpu.memory_space<vmem>>, vector<1x1x128xf32>
    %510 = vector.shape_cast %509 : vector<1x1x128xf32> to vector<128xf32>
    %511 = vector.shape_cast %510 : vector<128xf32> to vector<1x128xf32>
    %512 = vector.broadcast %508 : vector<16x1xf32> to vector<16x128xf32>
    %513 = vector.broadcast %511 : vector<1x128xf32> to vector<16x128xf32>
    %514 = arith.mulf %512, %513 : vector<16x128xf32>
    %515 = arith.addf %507, %514 : vector<16x128xf32>
    %516 = vector.extract_strided_slice %396 {offsets = [240, 0], sizes = [16, 1], strides = [1, 1]} : vector<256x2xf32> to vector<16x1xf32>
    %c0_94 = arith.constant 0 : index
    %c15 = arith.constant 15 : index
    %c0_95 = arith.constant 0 : index
    %517 = vector.load %arg8[%c0_94, %c15, %c0_95] : memref<2x16x128xf32, #tpu.memory_space<vmem>>, vector<1x1x128xf32>
    %518 = vector.shape_cast %517 : vector<1x1x128xf32> to vector<128xf32>
    %519 = vector.shape_cast %518 : vector<128xf32> to vector<1x128xf32>
    %520 = vector.broadcast %516 : vector<16x1xf32> to vector<16x128xf32>
    %521 = vector.broadcast %519 : vector<1x128xf32> to vector<16x128xf32>
    %522 = arith.mulf %520, %521 : vector<16x128xf32>
    %523 = arith.addf %515, %522 : vector<16x128xf32>
    %524 = vector.extract_strided_slice %396 {offsets = [0, 1], sizes = [16, 1], strides = [1, 1]} : vector<256x2xf32> to vector<16x1xf32>
    %c1_96 = arith.constant 1 : index
    %c0_97 = arith.constant 0 : index
    %c0_98 = arith.constant 0 : index
    %525 = vector.load %arg8[%c1_96, %c0_97, %c0_98] : memref<2x16x128xf32, #tpu.memory_space<vmem>>, vector<1x1x128xf32>
    %526 = vector.shape_cast %525 : vector<1x1x128xf32> to vector<128xf32>
    %527 = vector.shape_cast %526 : vector<128xf32> to vector<1x128xf32>
    %528 = vector.broadcast %524 : vector<16x1xf32> to vector<16x128xf32>
    %529 = vector.broadcast %527 : vector<1x128xf32> to vector<16x128xf32>
    %530 = arith.mulf %528, %529 : vector<16x128xf32>
    %531 = arith.addf %523, %530 : vector<16x128xf32>
    %532 = vector.extract_strided_slice %396 {offsets = [16, 1], sizes = [16, 1], strides = [1, 1]} : vector<256x2xf32> to vector<16x1xf32>
    %c1_99 = arith.constant 1 : index
    %c1_100 = arith.constant 1 : index
    %c0_101 = arith.constant 0 : index
    %533 = vector.load %arg8[%c1_99, %c1_100, %c0_101] : memref<2x16x128xf32, #tpu.memory_space<vmem>>, vector<1x1x128xf32>
    %534 = vector.shape_cast %533 : vector<1x1x128xf32> to vector<128xf32>
    %535 = vector.shape_cast %534 : vector<128xf32> to vector<1x128xf32>
    %536 = vector.broadcast %532 : vector<16x1xf32> to vector<16x128xf32>
    %537 = vector.broadcast %535 : vector<1x128xf32> to vector<16x128xf32>
    %538 = arith.mulf %536, %537 : vector<16x128xf32>
    %539 = arith.addf %531, %538 : vector<16x128xf32>
    %540 = vector.extract_strided_slice %396 {offsets = [32, 1], sizes = [16, 1], strides = [1, 1]} : vector<256x2xf32> to vector<16x1xf32>
    %c1_102 = arith.constant 1 : index
    %c2_103 = arith.constant 2 : index
    %c0_104 = arith.constant 0 : index
    %541 = vector.load %arg8[%c1_102, %c2_103, %c0_104] : memref<2x16x128xf32, #tpu.memory_space<vmem>>, vector<1x1x128xf32>
    %542 = vector.shape_cast %541 : vector<1x1x128xf32> to vector<128xf32>
    %543 = vector.shape_cast %542 : vector<128xf32> to vector<1x128xf32>
    %544 = vector.broadcast %540 : vector<16x1xf32> to vector<16x128xf32>
    %545 = vector.broadcast %543 : vector<1x128xf32> to vector<16x128xf32>
    %546 = arith.mulf %544, %545 : vector<16x128xf32>
    %547 = arith.addf %539, %546 : vector<16x128xf32>
    %548 = vector.extract_strided_slice %396 {offsets = [48, 1], sizes = [16, 1], strides = [1, 1]} : vector<256x2xf32> to vector<16x1xf32>
    %c1_105 = arith.constant 1 : index
    %c3_106 = arith.constant 3 : index
    %c0_107 = arith.constant 0 : index
    %549 = vector.load %arg8[%c1_105, %c3_106, %c0_107] : memref<2x16x128xf32, #tpu.memory_space<vmem>>, vector<1x1x128xf32>
    %550 = vector.shape_cast %549 : vector<1x1x128xf32> to vector<128xf32>
    %551 = vector.shape_cast %550 : vector<128xf32> to vector<1x128xf32>
    %552 = vector.broadcast %548 : vector<16x1xf32> to vector<16x128xf32>
    %553 = vector.broadcast %551 : vector<1x128xf32> to vector<16x128xf32>
    %554 = arith.mulf %552, %553 : vector<16x128xf32>
    %555 = arith.addf %547, %554 : vector<16x128xf32>
    %556 = vector.extract_strided_slice %396 {offsets = [64, 1], sizes = [16, 1], strides = [1, 1]} : vector<256x2xf32> to vector<16x1xf32>
    %c1_108 = arith.constant 1 : index
    %c4_109 = arith.constant 4 : index
    %c0_110 = arith.constant 0 : index
    %557 = vector.load %arg8[%c1_108, %c4_109, %c0_110] : memref<2x16x128xf32, #tpu.memory_space<vmem>>, vector<1x1x128xf32>
    %558 = vector.shape_cast %557 : vector<1x1x128xf32> to vector<128xf32>
    %559 = vector.shape_cast %558 : vector<128xf32> to vector<1x128xf32>
    %560 = vector.broadcast %556 : vector<16x1xf32> to vector<16x128xf32>
    %561 = vector.broadcast %559 : vector<1x128xf32> to vector<16x128xf32>
    %562 = arith.mulf %560, %561 : vector<16x128xf32>
    %563 = arith.addf %555, %562 : vector<16x128xf32>
    %564 = vector.extract_strided_slice %396 {offsets = [80, 1], sizes = [16, 1], strides = [1, 1]} : vector<256x2xf32> to vector<16x1xf32>
    %c1_111 = arith.constant 1 : index
    %c5_112 = arith.constant 5 : index
    %c0_113 = arith.constant 0 : index
    %565 = vector.load %arg8[%c1_111, %c5_112, %c0_113] : memref<2x16x128xf32, #tpu.memory_space<vmem>>, vector<1x1x128xf32>
    %566 = vector.shape_cast %565 : vector<1x1x128xf32> to vector<128xf32>
    %567 = vector.shape_cast %566 : vector<128xf32> to vector<1x128xf32>
    %568 = vector.broadcast %564 : vector<16x1xf32> to vector<16x128xf32>
    %569 = vector.broadcast %567 : vector<1x128xf32> to vector<16x128xf32>
    %570 = arith.mulf %568, %569 : vector<16x128xf32>
    %571 = arith.addf %563, %570 : vector<16x128xf32>
    %572 = vector.extract_strided_slice %396 {offsets = [96, 1], sizes = [16, 1], strides = [1, 1]} : vector<256x2xf32> to vector<16x1xf32>
    %c1_114 = arith.constant 1 : index
    %c6_115 = arith.constant 6 : index
    %c0_116 = arith.constant 0 : index
    %573 = vector.load %arg8[%c1_114, %c6_115, %c0_116] : memref<2x16x128xf32, #tpu.memory_space<vmem>>, vector<1x1x128xf32>
    %574 = vector.shape_cast %573 : vector<1x1x128xf32> to vector<128xf32>
    %575 = vector.shape_cast %574 : vector<128xf32> to vector<1x128xf32>
    %576 = vector.broadcast %572 : vector<16x1xf32> to vector<16x128xf32>
    %577 = vector.broadcast %575 : vector<1x128xf32> to vector<16x128xf32>
    %578 = arith.mulf %576, %577 : vector<16x128xf32>
    %579 = arith.addf %571, %578 : vector<16x128xf32>
    %580 = vector.extract_strided_slice %396 {offsets = [112, 1], sizes = [16, 1], strides = [1, 1]} : vector<256x2xf32> to vector<16x1xf32>
    %c1_117 = arith.constant 1 : index
    %c7_118 = arith.constant 7 : index
    %c0_119 = arith.constant 0 : index
    %581 = vector.load %arg8[%c1_117, %c7_118, %c0_119] : memref<2x16x128xf32, #tpu.memory_space<vmem>>, vector<1x1x128xf32>
    %582 = vector.shape_cast %581 : vector<1x1x128xf32> to vector<128xf32>
    %583 = vector.shape_cast %582 : vector<128xf32> to vector<1x128xf32>
    %584 = vector.broadcast %580 : vector<16x1xf32> to vector<16x128xf32>
    %585 = vector.broadcast %583 : vector<1x128xf32> to vector<16x128xf32>
    %586 = arith.mulf %584, %585 : vector<16x128xf32>
    %587 = arith.addf %579, %586 : vector<16x128xf32>
    %588 = vector.extract_strided_slice %396 {offsets = [128, 1], sizes = [16, 1], strides = [1, 1]} : vector<256x2xf32> to vector<16x1xf32>
    %c1_120 = arith.constant 1 : index
    %c8_121 = arith.constant 8 : index
    %c0_122 = arith.constant 0 : index
    %589 = vector.load %arg8[%c1_120, %c8_121, %c0_122] : memref<2x16x128xf32, #tpu.memory_space<vmem>>, vector<1x1x128xf32>
    %590 = vector.shape_cast %589 : vector<1x1x128xf32> to vector<128xf32>
    %591 = vector.shape_cast %590 : vector<128xf32> to vector<1x128xf32>
    %592 = vector.broadcast %588 : vector<16x1xf32> to vector<16x128xf32>
    %593 = vector.broadcast %591 : vector<1x128xf32> to vector<16x128xf32>
    %594 = arith.mulf %592, %593 : vector<16x128xf32>
    %595 = arith.addf %587, %594 : vector<16x128xf32>
    %596 = vector.extract_strided_slice %396 {offsets = [144, 1], sizes = [16, 1], strides = [1, 1]} : vector<256x2xf32> to vector<16x1xf32>
    %c1_123 = arith.constant 1 : index
    %c9_124 = arith.constant 9 : index
    %c0_125 = arith.constant 0 : index
    %597 = vector.load %arg8[%c1_123, %c9_124, %c0_125] : memref<2x16x128xf32, #tpu.memory_space<vmem>>, vector<1x1x128xf32>
    %598 = vector.shape_cast %597 : vector<1x1x128xf32> to vector<128xf32>
    %599 = vector.shape_cast %598 : vector<128xf32> to vector<1x128xf32>
    %600 = vector.broadcast %596 : vector<16x1xf32> to vector<16x128xf32>
    %601 = vector.broadcast %599 : vector<1x128xf32> to vector<16x128xf32>
    %602 = arith.mulf %600, %601 : vector<16x128xf32>
    %603 = arith.addf %595, %602 : vector<16x128xf32>
    %604 = vector.extract_strided_slice %396 {offsets = [160, 1], sizes = [16, 1], strides = [1, 1]} : vector<256x2xf32> to vector<16x1xf32>
    %c1_126 = arith.constant 1 : index
    %c10_127 = arith.constant 10 : index
    %c0_128 = arith.constant 0 : index
    %605 = vector.load %arg8[%c1_126, %c10_127, %c0_128] : memref<2x16x128xf32, #tpu.memory_space<vmem>>, vector<1x1x128xf32>
    %606 = vector.shape_cast %605 : vector<1x1x128xf32> to vector<128xf32>
    %607 = vector.shape_cast %606 : vector<128xf32> to vector<1x128xf32>
    %608 = vector.broadcast %604 : vector<16x1xf32> to vector<16x128xf32>
    %609 = vector.broadcast %607 : vector<1x128xf32> to vector<16x128xf32>
    %610 = arith.mulf %608, %609 : vector<16x128xf32>
    %611 = arith.addf %603, %610 : vector<16x128xf32>
    %612 = vector.extract_strided_slice %396 {offsets = [176, 1], sizes = [16, 1], strides = [1, 1]} : vector<256x2xf32> to vector<16x1xf32>
    %c1_129 = arith.constant 1 : index
    %c11_130 = arith.constant 11 : index
    %c0_131 = arith.constant 0 : index
    %613 = vector.load %arg8[%c1_129, %c11_130, %c0_131] : memref<2x16x128xf32, #tpu.memory_space<vmem>>, vector<1x1x128xf32>
    %614 = vector.shape_cast %613 : vector<1x1x128xf32> to vector<128xf32>
    %615 = vector.shape_cast %614 : vector<128xf32> to vector<1x128xf32>
    %616 = vector.broadcast %612 : vector<16x1xf32> to vector<16x128xf32>
    %617 = vector.broadcast %615 : vector<1x128xf32> to vector<16x128xf32>
    %618 = arith.mulf %616, %617 : vector<16x128xf32>
    %619 = arith.addf %611, %618 : vector<16x128xf32>
    %620 = vector.extract_strided_slice %396 {offsets = [192, 1], sizes = [16, 1], strides = [1, 1]} : vector<256x2xf32> to vector<16x1xf32>
    %c1_132 = arith.constant 1 : index
    %c12_133 = arith.constant 12 : index
    %c0_134 = arith.constant 0 : index
    %621 = vector.load %arg8[%c1_132, %c12_133, %c0_134] : memref<2x16x128xf32, #tpu.memory_space<vmem>>, vector<1x1x128xf32>
    %622 = vector.shape_cast %621 : vector<1x1x128xf32> to vector<128xf32>
    %623 = vector.shape_cast %622 : vector<128xf32> to vector<1x128xf32>
    %624 = vector.broadcast %620 : vector<16x1xf32> to vector<16x128xf32>
    %625 = vector.broadcast %623 : vector<1x128xf32> to vector<16x128xf32>
    %626 = arith.mulf %624, %625 : vector<16x128xf32>
    %627 = arith.addf %619, %626 : vector<16x128xf32>
    %628 = vector.extract_strided_slice %396 {offsets = [208, 1], sizes = [16, 1], strides = [1, 1]} : vector<256x2xf32> to vector<16x1xf32>
    %c1_135 = arith.constant 1 : index
    %c13_136 = arith.constant 13 : index
    %c0_137 = arith.constant 0 : index
    %629 = vector.load %arg8[%c1_135, %c13_136, %c0_137] : memref<2x16x128xf32, #tpu.memory_space<vmem>>, vector<1x1x128xf32>
    %630 = vector.shape_cast %629 : vector<1x1x128xf32> to vector<128xf32>
    %631 = vector.shape_cast %630 : vector<128xf32> to vector<1x128xf32>
    %632 = vector.broadcast %628 : vector<16x1xf32> to vector<16x128xf32>
    %633 = vector.broadcast %631 : vector<1x128xf32> to vector<16x128xf32>
    %634 = arith.mulf %632, %633 : vector<16x128xf32>
    %635 = arith.addf %627, %634 : vector<16x128xf32>
    %636 = vector.extract_strided_slice %396 {offsets = [224, 1], sizes = [16, 1], strides = [1, 1]} : vector<256x2xf32> to vector<16x1xf32>
    %c1_138 = arith.constant 1 : index
    %c14_139 = arith.constant 14 : index
    %c0_140 = arith.constant 0 : index
    %637 = vector.load %arg8[%c1_138, %c14_139, %c0_140] : memref<2x16x128xf32, #tpu.memory_space<vmem>>, vector<1x1x128xf32>
    %638 = vector.shape_cast %637 : vector<1x1x128xf32> to vector<128xf32>
    %639 = vector.shape_cast %638 : vector<128xf32> to vector<1x128xf32>
    %640 = vector.broadcast %636 : vector<16x1xf32> to vector<16x128xf32>
    %641 = vector.broadcast %639 : vector<1x128xf32> to vector<16x128xf32>
    %642 = arith.mulf %640, %641 : vector<16x128xf32>
    %643 = arith.addf %635, %642 : vector<16x128xf32>
    %644 = vector.extract_strided_slice %396 {offsets = [240, 1], sizes = [16, 1], strides = [1, 1]} : vector<256x2xf32> to vector<16x1xf32>
    %c1_141 = arith.constant 1 : index
    %c15_142 = arith.constant 15 : index
    %c0_143 = arith.constant 0 : index
    %645 = vector.load %arg8[%c1_141, %c15_142, %c0_143] : memref<2x16x128xf32, #tpu.memory_space<vmem>>, vector<1x1x128xf32>
    %646 = vector.shape_cast %645 : vector<1x1x128xf32> to vector<128xf32>
    %647 = vector.shape_cast %646 : vector<128xf32> to vector<1x128xf32>
    %648 = vector.broadcast %644 : vector<16x1xf32> to vector<16x128xf32>
    %649 = vector.broadcast %647 : vector<1x128xf32> to vector<16x128xf32>
    %650 = arith.mulf %648, %649 : vector<16x128xf32>
    %651 = arith.addf %643, %650 : vector<16x128xf32>
    %c0_144 = arith.constant 0 : index
    %c0_145 = arith.constant 0 : index
    %652 = vector.load %arg7[%c0_144, %c0_145] : memref<64x16xf32, #tpu.memory_space<vmem>>, vector<64x16xf32>
    %cst_146 = arith.constant dense<0.000000e+00> : vector<64x128xf32>
    %653 = tpu.matmul %652, %651, %cst_146 {dimension_numbers = #tpu.dot_dimension_numbers<[1], [0], [0], [1], [0, 0, 1, 1], [], []>} : vector<64x16xf32>, vector<16x128xf32>, vector<64x128xf32> -> vector<64x128xf32>
    %c0_147 = arith.constant 0 : index
    %c0_148 = arith.constant 0 : index
    %c0_149 = arith.constant 0 : index
    %654 = vector.load %arg9[%c0_147, %c0_148, %c0_149] : memref<1x64x128xf32, #tpu.memory_space<vmem>>, vector<1x64x128xf32>
    %655 = vector.shape_cast %654 : vector<1x64x128xf32> to vector<64x128xf32>
    %656 = vector.shape_cast %653 : vector<64x128xf32> to vector<1x64x128xf32>
    tpu.vector_store %arg9[%c0_147, %c0_148, %c0_149], %656 {strides = array<i32>} : memref<1x64x128xf32, #tpu.memory_space<vmem>>, vector<1x64x128xf32>,
    return
  }
  func.func @transform_0(%arg0: i32) -> (i32, i32, i32, i32) {
    %c0_i32 = arith.constant 0 : i32
    %c0_i32_0 = arith.constant 0 : i32
    %c0_i32_1 = arith.constant 0 : i32
    %c0_i32_2 = arith.constant 0 : i32
    return %arg0, %c0_i32, %c0_i32_0, %c0_i32_1 : i32, i32, i32, i32
  }
  func.func @transform_1(%arg0: i32) -> (i32, i32) {
    %c0_i32 = arith.constant 0 : i32
    %c0_i32_0 = arith.constant 0 : i32
    %c0_i32_1 = arith.constant 0 : i32
    return %c0_i32, %c0_i32_0 : i32, i32
  }
  func.func @transform_2(%arg0: i32) -> (i32, i32) {
    %c0_i32 = arith.constant 0 : i32
    %c0_i32_0 = arith.constant 0 : i32
    %c0_i32_1 = arith.constant 0 : i32
    return %c0_i32, %c0_i32_0 : i32, i32
  }
  func.func @transform_3(%arg0: i32) -> (i32, i32) {
    %c0_i32 = arith.constant 0 : i32
    %c0_i32_0 = arith.constant 0 : i32
    %c0_i32_1 = arith.constant 0 : i32
    return %c0_i32, %c0_i32_0 : i32, i32
  }
  func.func @transform_4(%arg0: i32) -> (i32, i32) {
    %c0_i32 = arith.constant 0 : i32
    %c0_i32_0 = arith.constant 0 : i32
    %c0_i32_1 = arith.constant 0 : i32
    return %c0_i32, %c0_i32_0 : i32, i32
  }
  func.func @transform_5(%arg0: i32) -> (i32, i32) {
    %c0_i32 = arith.constant 0 : i32
    %c0_i32_0 = arith.constant 0 : i32
    %c0_i32_1 = arith.constant 0 : i32
    return %c0_i32, %c0_i32_0 : i32, i32
  }
  func.func @transform_6(%arg0: i32) -> (i32, i32) {
    %c0_i32 = arith.constant 0 : i32
    %c0_i32_0 = arith.constant 0 : i32
    %c0_i32_1 = arith.constant 0 : i32
    return %c0_i32, %c0_i32_0 : i32, i32
  }
  func.func @transform_7(%arg0: i32) -> (i32, i32, i32) {
    %c0_i32 = arith.constant 0 : i32
    %c0_i32_0 = arith.constant 0 : i32
    %c0_i32_1 = arith.constant 0 : i32
    %c0_i32_2 = arith.constant 0 : i32
    return %c0_i32, %c0_i32_0, %c0_i32_1 : i32, i32, i32
  }
  func.func @transform_8(%arg0: i32) -> (i32, i32, i32) {
    %c0_i32 = arith.constant 0 : i32
    %c0_i32_0 = arith.constant 0 : i32
    %c0_i32_1 = arith.constant 0 : i32
    return %arg0, %c0_i32, %c0_i32_0 : i32, i32, i32
  }
}

</mosaic_0001>

<llo_original>
// kernel: instance_center_regression_head.1
$region0: #{instance_center_regression_head.1}
  #allocation0 [shape = 'u32[]', space=smem, size = 0x4, offset = 0x4, fixed_abs, tag = 'smem constant byte address 0x4 - core index']
  #allocation1 [shape = 'u32[144,128]{1,0:T(1,128)}', space=vmem, size = 0x12000, scoped, tag = 'internal scratch']
  #allocation2 [shape = 'f32[20,24,128]{2,1,0:T(8,128)}', space=vmem, size = 0x3c000, scoped, tag = 'scratch operand']
  #allocation3 [shape = 'f32[256,128]{1,0:T(8,128)}', space=vmem, size = 0x20000, scoped, tag = 'scratch operand']
  %s0 = inlined_call_operand.vmem [shape: f32[2,16,16,128], index: 0, kind: input, shape index: {}]
  %s1 = inlined_call_operand.vmem [shape: f32[25,128], index: 1, kind: input, shape index: {}]
  %s2 = inlined_call_operand.vmem [shape: f32[1,128], index: 2, kind: input, shape index: {}]
  %s3 = inlined_call_operand.vmem [shape: f32[128,32], index: 3, kind: input, shape index: {}]
  %s4 = inlined_call_operand.vmem [shape: f32[1,32], index: 4, kind: input, shape index: {}]
  %s5 = inlined_call_operand.vmem [shape: f32[32,2], index: 5, kind: input, shape index: {}]
  %s6 = inlined_call_operand.vmem [shape: f32[64,16], index: 6, kind: input, shape index: {}]
  %s7 = inlined_call_operand.vmem [shape: f32[2,16,128], index: 7, kind: input, shape index: {}]
  %s8 = inlined_call_operand.vmem [shape: f32[2,64,128], index: 8, kind: output, shape index: {}]
  %s9 = sld [smem:[#allocation0]]
  $region65: #{instance_center_regression_head.1} parent=0
    _
  %s11 = ssub.s32 1, %s9
  %s12 = scalar_select 0, %s11, %s9
  loop: start=0, step=1, limit=4
  $region2: #{instance_center_regression_head.1} parent=0 // loop_pre_header
    _
  $region3: #{instance_center_regression_head.1} parent=0 // loop_header
    %s14 = sphi 0, %s18
    %p15 = scmp.ge.s32.totalorder %s14, 4
    %s24 = sphi 0, %s26
    %s27 = sphi 0, %s24
    %s28 = sphi 0, %s27
    %s44 = sphi 0, %s28
    %s48 = sphi 0, %s48
    %s50 = sphi 0, %s48
    %s51 = sphi 0, %s50
    %s65 = sphi 0, %s51
    %s69 = sphi 0, %s69
    %s71 = sphi 0, %s69
    %s72 = sphi 0, %s71
    %s86 = sphi 0, %s72
    %s90 = sphi 0, %s90
    %s92 = sphi 0, %s90
    %s93 = sphi 0, %s92
    %s107 = sphi 0, %s93
    %s111 = sphi 0, %s111
    %s113 = sphi 0, %s111
    %s114 = sphi 0, %s113
    %s128 = sphi 0, %s114
    %s132 = sphi 0, %s132
    %s134 = sphi 0, %s132
    %s135 = sphi 0, %s134
    %s149 = sphi 0, %s135
    %s153 = sphi 0, %s153
    %s155 = sphi 0, %s153
    %s156 = sphi 0, %s155
    %s170 = sphi 0, %s156
    %s174 = sphi 0, %s174
    %s176 = sphi 0, %s174
    %s177 = sphi 0, %s176
    %s191 = sphi 0, %s177
    %s197 = sphi 0, %s199
    %s200 = sphi 0, %s197
    %s201 = sphi 0, %s200
    %s217 = sphi 0, %s201
  $region4: #{instance_center_regression_head.1} parent=0 // loop_header_branch
    %17 = sbr.rel (%p15) target = $region8
  $region5: #{instance_center_regression_head.1} parent=0 // loop_body
    %s19 = ssub.s32 %s14, 1
    %s20 = ssub.s32 %s14, 2
    %s21 = sadd.s32 %s14, 1
    %s22 = ssub.s32 %s14, %s21
    %p23 = scmp.eq.s32.totalorder %s22, 0
    %s25 = sadd.s32 %s24, 1
    %s26 = scalar_select %p23, %s24, %s25
    %p29 = pneg %p23
    %p30 = scmp.eq.s32.totalorder %s14, 1
    %p31 = por %p29, %p30
    %p32 = scmp.ne.s32.totalorder %s24, %s27
    %p33 = scmp.eq.s32.totalorder %s14, 0
    %p34 = por %p32, %p33
    %p35 = scmp.ne.s32.totalorder %s24, %s27
    %p36 = scmp.eq.s32.totalorder %s19, 1
    %p37 = por %p35, %p36
    %p38 = scmp.ne.s32.totalorder %s27, %s28
    %p39 = scmp.eq.s32.totalorder %s19, 0
    %p40 = por %p38, %p39
    %p41 = scmp.ne.s32.totalorder %s27, %s28
    %p42 = scmp.eq.s32.totalorder %s20, 1
    %p43 = por %p41, %p42
    %p45 = scmp.ne.s32.totalorder %s28, %s44
    %p46 = scmp.eq.s32.totalorder %s20, 0
    %p47 = por %p45, %p46
    %s49 = sadd.s32 %s48, 1
    %p52 = scmp.eq.s32.totalorder %s14, 1
    %p53 = scmp.ne.s32.totalorder %s48, %s50
    %p54 = scmp.eq.s32.totalorder %s14, 0
    %p55 = por %p53, %p54
    %p56 = scmp.ne.s32.totalorder %s48, %s50
    %p57 = scmp.eq.s32.totalorder %s19, 1
    %p58 = por %p56, %p57
    %p59 = scmp.ne.s32.totalorder %s50, %s51
    %p60 = scmp.eq.s32.totalorder %s19, 0
    %p61 = por %p59, %p60
    %p62 = scmp.ne.s32.totalorder %s50, %s51
    %p63 = scmp.eq.s32.totalorder %s20, 1
    %p64 = por %p62, %p63
    %p66 = scmp.ne.s32.totalorder %s51, %s65
    %p67 = scmp.eq.s32.totalorder %s20, 0
    %p68 = por %p66, %p67
    %s70 = sadd.s32 %s69, 1
    %p73 = scmp.eq.s32.totalorder %s14, 1
    %p74 = scmp.ne.s32.totalorder %s69, %s71
    %p75 = scmp.eq.s32.totalorder %s14, 0
    %p76 = por %p74, %p75
    %p77 = scmp.ne.s32.totalorder %s69, %s71
    %p78 = scmp.eq.s32.totalorder %s19, 1
    %p79 = por %p77, %p78
    %p80 = scmp.ne.s32.totalorder %s71, %s72
    %p81 = scmp.eq.s32.totalorder %s19, 0
    %p82 = por %p80, %p81
    %p83 = scmp.ne.s32.totalorder %s71, %s72
    %p84 = scmp.eq.s32.totalorder %s20, 1
    %p85 = por %p83, %p84
    %p87 = scmp.ne.s32.totalorder %s72, %s86
    %p88 = scmp.eq.s32.totalorder %s20, 0
    %p89 = por %p87, %p88
    %s91 = sadd.s32 %s90, 1
    %p94 = scmp.eq.s32.totalorder %s14, 1
    %p95 = scmp.ne.s32.totalorder %s90, %s92
    %p96 = scmp.eq.s32.totalorder %s14, 0
    %p97 = por %p95, %p96
    %p98 = scmp.ne.s32.totalorder %s90, %s92
    %p99 = scmp.eq.s32.totalorder %s19, 1
    %p100 = por %p98, %p99
    %p101 = scmp.ne.s32.totalorder %s92, %s93
    %p102 = scmp.eq.s32.totalorder %s19, 0
    %p103 = por %p101, %p102
    %p104 = scmp.ne.s32.totalorder %s92, %s93
    %p105 = scmp.eq.s32.totalorder %s20, 1
    %p106 = por %p104, %p105
    %p108 = scmp.ne.s32.totalorder %s93, %s107
    %p109 = scmp.eq.s32.totalorder %s20, 0
    %p110 = por %p108, %p109
    %s112 = sadd.s32 %s111, 1
    %p115 = scmp.eq.s32.totalorder %s14, 1
    %p116 = scmp.ne.s32.totalorder %s111, %s113
    %p117 = scmp.eq.s32.totalorder %s14, 0
    %p118 = por %p116, %p117
    %p119 = scmp.ne.s32.totalorder %s111, %s113
    %p120 = scmp.eq.s32.totalorder %s19, 1
    %p121 = por %p119, %p120
    %p122 = scmp.ne.s32.totalorder %s113, %s114
    %p123 = scmp.eq.s32.totalorder %s19, 0
    %p124 = por %p122, %p123
    %p125 = scmp.ne.s32.totalorder %s113, %s114
    %p126 = scmp.eq.s32.totalorder %s20, 1
    %p127 = por %p125, %p126
    %p129 = scmp.ne.s32.totalorder %s114, %s128
    %p130 = scmp.eq.s32.totalorder %s20, 0
    %p131 = por %p129, %p130
    %s133 = sadd.s32 %s132, 1
    %p136 = scmp.eq.s32.totalorder %s14, 1
    %p137 = scmp.ne.s32.totalorder %s132, %s134
    %p138 = scmp.eq.s32.totalorder %s14, 0
    %p139 = por %p137, %p138
    %p140 = scmp.ne.s32.totalorder %s132, %s134
    %p141 = scmp.eq.s32.totalorder %s19, 1
    %p142 = por %p140, %p141
    %p143 = scmp.ne.s32.totalorder %s134, %s135
    %p144 = scmp.eq.s32.totalorder %s19, 0
    %p145 = por %p143, %p144
    %p146 = scmp.ne.s32.totalorder %s134, %s135
    %p147 = scmp.eq.s32.totalorder %s20, 1
    %p148 = por %p146, %p147
    %p150 = scmp.ne.s32.totalorder %s135, %s149
    %p151 = scmp.eq.s32.totalorder %s20, 0
    %p152 = por %p150, %p151
    %s154 = sadd.s32 %s153, 1
    %p157 = scmp.eq.s32.totalorder %s14, 1
    %p158 = scmp.ne.s32.totalorder %s153, %s155
    %p159 = scmp.eq.s32.totalorder %s14, 0
    %p160 = por %p158, %p159
    %p161 = scmp.ne.s32.totalorder %s153, %s155
    %p162 = scmp.eq.s32.totalorder %s19, 1
    %p163 = por %p161, %p162
    %p164 = scmp.ne.s32.totalorder %s155, %s156
    %p165 = scmp.eq.s32.totalorder %s19, 0
    %p166 = por %p164, %p165
    %p167 = scmp.ne.s32.totalorder %s155, %s156
    %p168 = scmp.eq.s32.totalorder %s20, 1
    %p169 = por %p167, %p168
    %p171 = scmp.ne.s32.totalorder %s156, %s170
    %p172 = scmp.eq.s32.totalorder %s20, 0
    %p173 = por %p171, %p172
    %s175 = sadd.s32 %s174, 1
    %p178 = scmp.eq.s32.totalorder %s14, 1
    %p179 = scmp.ne.s32.totalorder %s174, %s176
    %p180 = scmp.eq.s32.totalorder %s14, 0
    %p181 = por %p179, %p180
    %p182 = scmp.ne.s32.totalorder %s174, %s176
    %p183 = scmp.eq.s32.totalorder %s19, 1
    %p184 = por %p182, %p183
    %p185 = scmp.ne.s32.totalorder %s176, %s177
    %p186 = scmp.eq.s32.totalorder %s19, 0
    %p187 = por %p185, %p186
    %p188 = scmp.ne.s32.totalorder %s176, %s177
    %p189 = scmp.eq.s32.totalorder %s20, 1
    %p190 = por %p188, %p189
    %p192 = scmp.ne.s32.totalorder %s177, %s191
    %p193 = scmp.eq.s32.totalorder %s20, 0
    %p194 = por %p192, %p193
    %s195 = ssub.s32 %s14, %s21
    %p196 = scmp.eq.s32.totalorder %s195, 0
    %s198 = sadd.s32 %s197, 1
    %s199 = scalar_select %p196, %s197, %s198
    %p202 = pneg %p196
    %p203 = scmp.eq.s32.totalorder %s14, 1
    %p204 = por %p202, %p203
    %p205 = scmp.ne.s32.totalorder %s197, %s200
    %p206 = scmp.eq.s32.totalorder %s14, 0
    %p207 = por %p205, %p206
    %p208 = scmp.ne.s32.totalorder %s197, %s200
    %p209 = scmp.eq.s32.totalorder %s19, 1
    %p210 = por %p208, %p209
    %p211 = scmp.ne.s32.totalorder %s200, %s201
    %p212 = scmp.eq.s32.totalorder %s19, 0
    %p213 = por %p211, %p212
    %p214 = scmp.ne.s32.totalorder %s200, %s201
    %p215 = scmp.eq.s32.totalorder %s20, 1
    %p216 = por %p214, %p215
    %p218 = scmp.ne.s32.totalorder %s201, %s217
    %p219 = scmp.eq.s32.totalorder %s20, 0
    %p220 = por %p218, %p219
    %p221 = scmp.le.s32.totalorder 1, %s14
    %p222 = scmp.lt.s32.totalorder %s14, 3
    %p223 = pnand %p221, %p222
    %p224 = pneg %p223
    // Predicated region
    $region9: #{instance_center_regression_head.1} parent=5 // pred_check
      _
    $region10: #{instance_center_regression_head.1} parent=5 // pred_check_branch
      %226 = sbr.rel (%p223) target = $region12
    $region11: #{instance_center_regression_head.1} parent=5 // pred_region
      %s227 = ssub.s32 %s14, 1
      // Predicated region
      $region13: #{instance_center_regression_head.1} parent=11 // pred_check
        %p228 = pneg %p61
      $region14: #{instance_center_regression_head.1} parent=11 // pred_check_branch
        %230 = sbr.rel (%p228) target = $region16
      $region15: #{instance_center_regression_head.1} parent=11 // pred_region
        _
      $region16: #{instance_center_regression_head.1} parent=11 // pred_fallthru
        _
      // Predicated region
      $region17: #{instance_center_regression_head.1} parent=11 // pred_check
        %p231 = pneg %p82
      $region18: #{instance_center_regression_head.1} parent=11 // pred_check_branch
        %233 = sbr.rel (%p231) target = $region20
      $region19: #{instance_center_regression_head.1} parent=11 // pred_region
        _
      $region20: #{instance_center_regression_head.1} parent=11 // pred_fallthru
        _
      // Predicated region
      $region21: #{instance_center_regression_head.1} parent=11 // pred_check
        %p234 = pneg %p103
      $region22: #{instance_center_regression_head.1} parent=11 // pred_check_branch
        %236 = sbr.rel (%p234) target = $region24
      $region23: #{instance_center_regression_head.1} parent=11 // pred_region
        _
      $region24: #{instance_center_regression_head.1} parent=11 // pred_fallthru
        _
      // Predicated region
      $region25: #{instance_center_regression_head.1} parent=11 // pred_check
        %p237 = pneg %p124
      $region26: #{instance_center_regression_head.1} parent=11 // pred_check_branch
        %239 = sbr.rel (%p237) target = $region28
      $region27: #{instance_center_regression_head.1} parent=11 // pred_region
        _
      $region28: #{instance_center_regression_head.1} parent=11 // pred_fallthru
        _
      // Predicated region
      $region29: #{instance_center_regression_head.1} parent=11 // pred_check
        %p240 = pneg %p145
      $region30: #{instance_center_regression_head.1} parent=11 // pred_check_branch
        %242 = sbr.rel (%p240) target = $region32
      $region31: #{instance_center_regression_head.1} parent=11 // pred_region
        _
      $region32: #{instance_center_regression_head.1} parent=11 // pred_fallthru
        _
      // Predicated region
      $region33: #{instance_center_regression_head.1} parent=11 // pred_check
        %p243 = pneg %p166
      $region34: #{instance_center_regression_head.1} parent=11 // pred_check_branch
        %245 = sbr.rel (%p243) target = $region36
      $region35: #{instance_center_regression_head.1} parent=11 // pred_region
        _
      $region36: #{instance_center_regression_head.1} parent=11 // pred_fallthru
        _
      // Predicated region
      $region37: #{instance_center_regression_head.1} parent=11 // pred_check
        %p246 = pneg %p187
      $region38: #{instance_center_regression_head.1} parent=11 // pred_check_branch
        %248 = sbr.rel (%p246) target = $region40
      $region39: #{instance_center_regression_head.1} parent=11 // pred_region
        _
      $region40: #{instance_center_regression_head.1} parent=11 // pred_fallthru
        _
    $region12: #{instance_center_regression_head.1} parent=5 // pred_fallthru
      _
    %p249 = scmp.lt.s32.totalorder %s14, 2
    // Predicated region
    $region41: #{instance_center_regression_head.1} parent=5 // pred_check
      %p250 = pneg %p249
    $region42: #{instance_center_regression_head.1} parent=5 // pred_check_branch
      %252 = sbr.rel (%p250) target = $region44
    $region43: #{instance_center_regression_head.1} parent=5 // pred_region
      // Predicated region
      $region45: #{instance_center_regression_head.1} parent=43 // pred_check
        %p253 = pneg %p34
      $region46: #{instance_center_regression_head.1} parent=43 // pred_check_branch
        %255 = sbr.rel (%p253) target = $region48
      $region47: #{instance_center_regression_head.1} parent=43 // pred_region
        %p256 = scmp.lt.s32.totalorder %s14, 1
        %s257 = scalar_select %p256, %s14, 1
        %s258 = smul.addr %s257, 32
        %s259 = smul.addr %s258, 8
        %s260 = scalar_lea.vmem %s0, %s259
      $region48: #{instance_center_regression_head.1} parent=43 // pred_fallthru
        _
    $region44: #{instance_center_regression_head.1} parent=5 // pred_fallthru
      _
    %p261 = scmp.le.s32.totalorder 1, %s14
    %p262 = scmp.lt.s32.totalorder %s14, 3
    %p263 = pnand %p261, %p262
    %p264 = pneg %p263
    // Predicated region
    $region49: #{instance_center_regression_head.1} parent=5 // pred_check
      _
    $region50: #{instance_center_regression_head.1} parent=5 // pred_check_branch
      %266 = sbr.rel (%p263) target = $region52
    $region51: #{instance_center_regression_head.1} parent=5 // pred_region
      %s267 = ssub.s32 %s14, 1
      %p268 = scmp.lt.s32.totalorder %s19, 1
      %s269 = scalar_select %p268, %s19, 1
      %s270 = smul.addr %s269, 32
      %s271 = smul.addr %s270, 8
      %s272 = scalar_lea.vmem %s0, %s271
      %p273 = pneg %p40
      %p274 = pneg %p37
      %p275 = pneg %p61
      %p276 = pneg %p58
      %p277 = pneg %p82
      %p278 = pneg %p79
      %p279 = pneg %p103
      %p280 = pneg %p100
      %p281 = pneg %p124
      %p282 = pneg %p121
      %p283 = pneg %p145
      %p284 = pneg %p142
      %p285 = pneg %p166
      %p286 = pneg %p163
      %p287 = pneg %p187
      %p288 = pneg %p184
      %p289 = pneg %p213
      %p290 = pneg %p210
      %p291 = scmp.lt.s32.totalorder %s19, 1
      %s292 = scalar_select %p291, %s19, 1
      %s293 = smul.addr %s292, 8
      %s294 = smul.addr %s293, 8
      %s295 = scalar_lea.vmem %s8, %s294
      %p296 = scmp.lt.s32.totalorder %s19, 1
      %s297 = scalar_select %p296, %s19, 1
      %s298 = smul.addr %s297, 32
      %s299 = smul.addr %s298, 8
      %s300 = scalar_lea.vmem %s0, %s299
      %p301 = scmp.lt.s32.totalorder %s19, 1
      %s302 = scalar_select %p301, %s19, 1
      %s303 = smul.addr %s302, 8
      %s304 = smul.addr %s303, 8
      %s305 = scalar_lea.vmem %s8, %s304
      %v306 = vld [vmem:[%s1] sm:$0xff]
      %v307 = vld [vmem:[%s1 + $0x8] sm:$0xff]
      %v308 = vld [vmem:[%s1 + $0x10] sm:$0xff]
      %v309 = vld [vmem:[%s1 + $0x18] sm:$0x1]
      %v310 = vld [vmem:[%s2] sm:$0x1]
      %311 = vst [vmem:[#allocation2] sm:$0xff] 0.0
      %312 = vst [vmem:[#allocation2 + $0x8] sm:$0xff] 0.0
      %313 = vst [vmem:[#allocation2 + $0x10] sm:$0xff] 0.0
      %314 = vst [vmem:[#allocation2 + $0x18] sm:$0xff] 0.0
      %315 = vst [vmem:[#allocation2 + $0x20] sm:$0xff] 0.0
      %316 = vst [vmem:[#allocation2 + $0x28] sm:$0xff] 0.0
      %317 = vst [vmem:[#allocation2 + $0x30] sm:$0xff] 0.0
      %318 = vst [vmem:[#allocation2 + $0x38] sm:$0xff] 0.0
      %319 = vst [vmem:[#allocation2 + $0x40] sm:$0xff] 0.0
      %320 = vst [vmem:[#allocation2 + $0x48] sm:$0xff] 0.0
      %321 = vst [vmem:[#allocation2 + $0x50] sm:$0xff] 0.0
      %322 = vst [vmem:[#allocation2 + $0x58] sm:$0xff] 0.0
      %323 = vst [vmem:[#allocation2 + $0x60] sm:$0xff] 0.0
      %324 = vst [vmem:[#allocation2 + $0x68] sm:$0xff] 0.0
      %325 = vst [vmem:[#allocation2 + $0x70] sm:$0xff] 0.0
      %326 = vst [vmem:[#allocation2 + $0x78] sm:$0xff] 0.0
      %327 = vst [vmem:[#allocation2 + $0x80] sm:$0xff] 0.0
      %328 = vst [vmem:[#allocation2 + $0x88] sm:$0xff] 0.0
      %329 = vst [vmem:[#allocation2 + $0x90] sm:$0xff] 0.0
      %330 = vst [vmem:[#allocation2 + $0x98] sm:$0xff] 0.0
      %331 = vst [vmem:[#allocation2 + $0xa0] sm:$0xff] 0.0
      %332 = vst [vmem:[#allocation2 + $0xa8] sm:$0xff] 0.0
      %333 = vst [vmem:[#allocation2 + $0xb0] sm:$0xff] 0.0
      %334 = vst [vmem:[#allocation2 + $0xb8] sm:$0xff] 0.0
      %335 = vst [vmem:[#allocation2 + $0xc0] sm:$0xff] 0.0
      %336 = vst [vmem:[#allocation2 + $0xc8] sm:$0xff] 0.0
      %337 = vst [vmem:[#allocation2 + $0xd0] sm:$0xff] 0.0
      %338 = vst [vmem:[#allocation2 + $0xd8] sm:$0xff] 0.0
      %339 = vst [vmem:[#allocation2 + $0xe0] sm:$0xff] 0.0
      %340 = vst [vmem:[#allocation2 + $0xe8] sm:$0xff] 0.0
      %341 = vst [vmem:[#allocation2 + $0xf0] sm:$0xff] 0.0
      %342 = vst [vmem:[#allocation2 + $0xf8] sm:$0xff] 0.0
      %343 = vst [vmem:[#allocation2 + $0x100] sm:$0xff] 0.0
      %344 = vst [vmem:[#allocation2 + $0x108] sm:$0xff] 0.0
      %345 = vst [vmem:[#allocation2 + $0x110] sm:$0xff] 0.0
      %346 = vst [vmem:[#allocation2 + $0x118] sm:$0xff] 0.0
      %347 = vst [vmem:[#allocation2 + $0x120] sm:$0xff] 0.0
      %348 = vst [vmem:[#allocation2 + $0x128] sm:$0xff] 0.0
      %349 = vst [vmem:[#allocation2 + $0x130] sm:$0xff] 0.0
      %350 = vst [vmem:[#allocation2 + $0x138] sm:$0xff] 0.0
      %351 = vst [vmem:[#allocation2 + $0x140] sm:$0xff] 0.0
      %352 = vst [vmem:[#allocation2 + $0x148] sm:$0xff] 0.0
      %353 = vst [vmem:[#allocation2 + $0x150] sm:$0xff] 0.0
      %354 = vst [vmem:[#allocation2 + $0x158] sm:$0xff] 0.0
      %355 = vst [vmem:[#allocation2 + $0x160] sm:$0xff] 0.0
      %356 = vst [vmem:[#allocation2 + $0x168] sm:$0xff] 0.0
      %357 = vst [vmem:[#allocation2 + $0x170] sm:$0xff] 0.0
      %358 = vst [vmem:[#allocation2 + $0x178] sm:$0xff] 0.0
      %359 = vst [vmem:[#allocation2 + $0x180] sm:$0xff] 0.0
      %360 = vst [vmem:[#allocation2 + $0x188] sm:$0xff] 0.0
      %361 = vst [vmem:[#allocation2 + $0x190] sm:$0xff] 0.0
      %362 = vst [vmem:[#allocation2 + $0x198] sm:$0xff] 0.0
      %363 = vst [vmem:[#allocation2 + $0x1a0] sm:$0xff] 0.0
      %364 = vst [vmem:[#allocation2 + $0x1a8] sm:$0xff] 0.0
      %365 = vst [vmem:[#allocation2 + $0x1b0] sm:$0xff] 0.0
      %366 = vst [vmem:[#allocation2 + $0x1b8] sm:$0xff] 0.0
      %367 = vst [vmem:[#allocation2 + $0x1c0] sm:$0xff] 0.0
      %368 = vst [vmem:[#allocation2 + $0x1c8] sm:$0xff] 0.0
      %369 = vst [vmem:[#allocation2 + $0x1d0] sm:$0xff] 0.0
      %370 = vst [vmem:[#allocation2 + $0x1d8] sm:$0xff] 0.0
      %v371 = vld [vmem:[%s300] sm:$0xff]
      %v372 = vld [vmem:[%s300 + $0x8] sm:$0xff]
      %v373 = vld [vmem:[%s300 + $0x10] sm:$0xff]
      %v374 = vld [vmem:[%s300 + $0x18] sm:$0xff]
      %v375 = vld [vmem:[%s300 + $0x20] sm:$0xff]
      %v376 = vld [vmem:[%s300 + $0x28] sm:$0xff]
      %v377 = vld [vmem:[%s300 + $0x30] sm:$0xff]
      %v378 = vld [vmem:[%s300 + $0x38] sm:$0xff]
      %v379 = vld [vmem:[%s300 + $0x40] sm:$0xff]
      %v380 = vld [vmem:[%s300 + $0x48] sm:$0xff]
      %v381 = vld [vmem:[%s300 + $0x50] sm:$0xff]
      %v382 = vld [vmem:[%s300 + $0x58] sm:$0xff]
      %v383 = vld [vmem:[%s300 + $0x60] sm:$0xff]
      %v384 = vld [vmem:[%s300 + $0x68] sm:$0xff]
      %v385 = vld [vmem:[%s300 + $0x70] sm:$0xff]
      %v386 = vld [vmem:[%s300 + $0x78] sm:$0xff]
      %v387 = vld [vmem:[%s300 + $0x80] sm:$0xff]
      %v388 = vld [vmem:[%s300 + $0x88] sm:$0xff]
      %v389 = vld [vmem:[%s300 + $0x90] sm:$0xff]
      %v390 = vld [vmem:[%s300 + $0x98] sm:$0xff]
      %v391 = vld [vmem:[%s300 + $0xa0] sm:$0xff]
      %v392 = vld [vmem:[%s300 + $0xa8] sm:$0xff]
      %v393 = vld [vmem:[%s300 + $0xb0] sm:$0xff]
      %v394 = vld [vmem:[%s300 + $0xb8] sm:$0xff]
      %v395 = vld [vmem:[%s300 + $0xc0] sm:$0xff]
      %v396 = vld [vmem:[%s300 + $0xc8] sm:$0xff]
      %v397 = vld [vmem:[%s300 + $0xd0] sm:$0xff]
      %v398 = vld [vmem:[%s300 + $0xd8] sm:$0xff]
      %v399 = vld [vmem:[%s300 + $0xe0] sm:$0xff]
      %v400 = vld [vmem:[%s300 + $0xe8] sm:$0xff]
      %v401 = vld [vmem:[%s300 + $0xf0] sm:$0xff]
      %v402 = vld [vmem:[%s300 + $0xf8] sm:$0xff]
      %s403 = scalar_lea.vmem [#allocation2], 48
      %404 = vst [vmem:[%s403] sm:$0xff] %v371
      %405 = vst [vmem:[%s403 + $0x8] sm:$0xff] %v372
      %406 = vst [vmem:[%s403 + $0x18] sm:$0xff] %v373
      %407 = vst [vmem:[%s403 + $0x20] sm:$0xff] %v374
      %408 = vst [vmem:[%s403 + $0x30] sm:$0xff] %v375
      %409 = vst [vmem:[%s403 + $0x38] sm:$0xff] %v376
      %410 = vst [vmem:[%s403 + $0x48] sm:$0xff] %v377
      %411 = vst [vmem:[%s403 + $0x50] sm:$0xff] %v378
      %412 = vst [vmem:[%s403 + $0x60] sm:$0xff] %v379
      %413 = vst [vmem:[%s403 + $0x68] sm:$0xff] %v380
      %414 = vst [vmem:[%s403 + $0x78] sm:$0xff] %v381
      %415 = vst [vmem:[%s403 + $0x80] sm:$0xff] %v382
      %416 = vst [vmem:[%s403 + $0x90] sm:$0xff] %v383
      %417 = vst [vmem:[%s403 + $0x98] sm:$0xff] %v384
      %418 = vst [vmem:[%s403 + $0xa8] sm:$0xff] %v385
      %419 = vst [vmem:[%s403 + $0xb0] sm:$0xff] %v386
      %420 = vst [vmem:[%s403 + $0xc0] sm:$0xff] %v387
      %421 = vst [vmem:[%s403 + $0xc8] sm:$0xff] %v388
      %422 = vst [vmem:[%s403 + $0xd8] sm:$0xff] %v389
      %423 = vst [vmem:[%s403 + $0xe0] sm:$0xff] %v390
      %424 = vst [vmem:[%s403 + $0xf0] sm:$0xff] %v391
      %425 = vst [vmem:[%s403 + $0xf8] sm:$0xff] %v392
      %426 = vst [vmem:[%s403 + $0x108] sm:$0xff] %v393
      %427 = vst [vmem:[%s403 + $0x110] sm:$0xff] %v394
      %428 = vst [vmem:[%s403 + $0x120] sm:$0xff] %v395
      %429 = vst [vmem:[%s403 + $0x128] sm:$0xff] %v396
      %430 = vst [vmem:[%s403 + $0x138] sm:$0xff] %v397
      %431 = vst [vmem:[%s403 + $0x140] sm:$0xff] %v398
      %432 = vst [vmem:[%s403 + $0x150] sm:$0xff] %v399
      %433 = vst [vmem:[%s403 + $0x158] sm:$0xff] %v400
      %434 = vst [vmem:[%s403 + $0x168] sm:$0xff] %v401
      %435 = vst [vmem:[%s403 + $0x170] sm:$0xff] %v402
      %v436 = vld [vmem:[#allocation2] sm:$0xff]
      %v437 = vld [vmem:[#allocation2 + $0x8] sm:$0xff]
      %v438 = vld [vmem:[#allocation2 + $0x10] sm:$0xff]
      %v439 = vld [vmem:[#allocation2 + $0x18] sm:$0xff]
      %v440 = vld [vmem:[#allocation2 + $0x20] sm:$0xff]
      %v441 = vld [vmem:[#allocation2 + $0x28] sm:$0xff]
      %v442 = vld [vmem:[#allocation2 + $0x30] sm:$0xff]
      %v443 = vld [vmem:[#allocation2 + $0x38] sm:$0xff]
      %v444 = vld [vmem:[#allocation2 + $0x40] sm:$0xff]
      %v445 = vld [vmem:[#allocation2 + $0x48] sm:$0xff]
      %v446 = vld [vmem:[#allocation2 + $0x50] sm:$0xff]
      %v447 = vld [vmem:[#allocation2 + $0x58] sm:$0xff]
      %v448 = vld [vmem:[#allocation2 + $0x60] sm:$0xff]
      %v449 = vld [vmem:[#allocation2 + $0x68] sm:$0xff]
      %v450 = vld [vmem:[#allocation2 + $0x70] sm:$0xff]
      %v451 = vld [vmem:[#allocation2 + $0x78] sm:$0xff]
      %v452 = vld [vmem:[#allocation2 + $0x80] sm:$0xff]
      %v453 = vld [vmem:[#allocation2 + $0x88] sm:$0xff]
      %v454 = vld [vmem:[#allocation2 + $0x90] sm:$0xff]
      %v455 = vld [vmem:[#allocation2 + $0x98] sm:$0xff]
      %v456 = vld [vmem:[#allocation2 + $0xa0] sm:$0xff]
      %v457 = vld [vmem:[#allocation2 + $0xa8] sm:$0xff]
      %v458 = vld [vmem:[#allocation2 + $0xb0] sm:$0xff]
      %v459 = vld [vmem:[#allocation2 + $0xb8] sm:$0xff]
      %v460 = vld [vmem:[#allocation2 + $0xc0] sm:$0xff]
      %v461 = vld [vmem:[#allocation2 + $0xc8] sm:$0xff]
      %v462 = vld [vmem:[#allocation2 + $0xd0] sm:$0xff]
      %v463 = vld [vmem:[#allocation2 + $0xd8] sm:$0xff]
      %v464 = vld [vmem:[#allocation2 + $0xe0] sm:$0xff]
      %v465 = vld [vmem:[#allocation2 + $0xe8] sm:$0xff]
      %v466 = vld [vmem:[#allocation2 + $0xf0] sm:$0xff]
      %v467 = vld [vmem:[#allocation2 + $0xf8] sm:$0xff]
      %v468 = vld [vmem:[#allocation2 + $0x100] sm:$0xff]
      %v469 = vld [vmem:[#allocation2 + $0x108] sm:$0xff]
      %v470 = vld [vmem:[#allocation2 + $0x110] sm:$0xff]
      %v471 = vld [vmem:[#allocation2 + $0x118] sm:$0xff]
      %v472 = vrot.slane %v436, 6
      %v473 = vrot.slane %v439, 6
      %v474 = vrot.slane %v442, 6
      %v475 = vrot.slane %v445, 6
      %v476 = vrot.slane %v448, 6
      %v477 = vrot.slane %v451, 6
      %v478 = vrot.slane %v454, 6
      %v479 = vrot.slane %v457, 6
      %v480 = vrot.slane %v460, 6
      %v481 = vrot.slane %v463, 6
      %v482 = vrot.slane %v466, 6
      %v483 = vrot.slane %v469, 6
      %v484 = vrot.slane %v437, 6
      %v485 = vrot.slane %v440, 6
      %v486 = vrot.slane %v443, 6
      %v487 = vrot.slane %v446, 6
      %v488 = vrot.slane %v449, 6
      %v489 = vrot.slane %v452, 6
      %v490 = vrot.slane %v455, 6
      %v491 = vrot.slane %v458, 6
      %v492 = vrot.slane %v461, 6
      %v493 = vrot.slane %v464, 6
      %v494 = vrot.slane %v467, 6
      %v495 = vrot.slane %v470, 6
      %v496 = vrot.slane %v438, 6
      %v497 = vrot.slane %v441, 6
      %v498 = vrot.slane %v444, 6
      %v499 = vrot.slane %v447, 6
      %v500 = vrot.slane %v450, 6
      %v501 = vrot.slane %v453, 6
      %v502 = vrot.slane %v456, 6
      %v503 = vrot.slane %v459, 6
      %v504 = vrot.slane %v462, 6
      %v505 = vrot.slane %v465, 6
      %v506 = vrot.slane %v468, 6
      %v507 = vrot.slane %v471, 6
      %v508 = vlaneseq
      %v509 = vshrl.u32 %v508, 7
      %vm510 = vcmp.lt.s32.totalorder %v509, 2
      %v511 = vsel %vm510, %v472, %v484
      %v512 = vsel %vm510, %v473, %v485
      %v513 = vsel %vm510, %v474, %v486
      %v514 = vsel %vm510, %v475, %v487
      %v515 = vsel %vm510, %v476, %v488
      %v516 = vsel %vm510, %v477, %v489
      %v517 = vsel %vm510, %v478, %v490
      %v518 = vsel %vm510, %v479, %v491
      %v519 = vsel %vm510, %v480, %v492
      %v520 = vsel %vm510, %v481, %v493
      %v521 = vsel %vm510, %v482, %v494
      %v522 = vsel %vm510, %v483, %v495
      %v523 = vsel %vm510, %v496, %v472
      %v524 = vsel %vm510, %v497, %v473
      %v525 = vsel %vm510, %v498, %v474
      %v526 = vsel %vm510, %v499, %v475
      %v527 = vsel %vm510, %v500, %v476
      %v528 = vsel %vm510, %v501, %v477
      %v529 = vsel %vm510, %v502, %v478
      %v530 = vsel %vm510, %v503, %v479
      %v531 = vsel %vm510, %v504, %v480
      %v532 = vsel %vm510, %v505, %v481
      %v533 = vsel %vm510, %v506, %v482
      %v534 = vsel %vm510, %v507, %v483
      %v535 = vlaneseq
      %v536 = vshrl.u32 %v535, 7
      %v537 = vsub.s32 0, %v536
      %v538 = vrot.slane %v306, %v537
      %v539 = vmul.f32 %v523, %v538
      %v540 = vmul.f32 %v511, %v538
      %v541 = vmul.f32 %v524, %v538
      %v542 = vmul.f32 %v512, %v538
      %v543 = vmul.f32 %v525, %v538
      %v544 = vmul.f32 %v513, %v538
      %v545 = vmul.f32 %v526, %v538
      %v546 = vmul.f32 %v514, %v538
      %v547 = vmul.f32 %v527, %v538
      %v548 = vmul.f32 %v515, %v538
      %v549 = vmul.f32 %v528, %v538
      %v550 = vmul.f32 %v516, %v538
      %v551 = vmul.f32 %v529, %v538
      %v552 = vmul.f32 %v517, %v538
      %v553 = vmul.f32 %v530, %v538
      %v554 = vmul.f32 %v518, %v538
      %v555 = vlaneseq
      %v556 = vshrl.u32 %v555, 7
      %v557 = vsub.s32 1, %v556
      %v558 = vrot.slane %v306, %v557
      %v559 = vmul.f32 %v524, %v558
      %v560 = vmul.f32 %v512, %v558
      %v561 = vmul.f32 %v525, %v558
      %v562 = vmul.f32 %v513, %v558
      %v563 = vmul.f32 %v526, %v558
      %v564 = vmul.f32 %v514, %v558
      %v565 = vmul.f32 %v527, %v558
      %v566 = vmul.f32 %v515, %v558
      %v567 = vmul.f32 %v528, %v558
      %v568 = vmul.f32 %v516, %v558
      %v569 = vmul.f32 %v529, %v558
      %v570 = vmul.f32 %v517, %v558
      %v571 = vmul.f32 %v530, %v558
      %v572 = vmul.f32 %v518, %v558
      %v573 = vmul.f32 %v531, %v558
      %v574 = vmul.f32 %v519, %v558
      %v575 = vadd.f32 %v539, %v559
      %v576 = vadd.f32 %v540, %v560
      %v577 = vadd.f32 %v541, %v561
      %v578 = vadd.f32 %v542, %v562
      %v579 = vadd.f32 %v543, %v563
      %v580 = vadd.f32 %v544, %v564
      %v581 = vadd.f32 %v545, %v565
      %v582 = vadd.f32 %v546, %v566
      %v583 = vadd.f32 %v547, %v567
      %v584 = vadd.f32 %v548, %v568
      %v585 = vadd.f32 %v549, %v569
      %v586 = vadd.f32 %v550, %v570
      %v587 = vadd.f32 %v551, %v571
      %v588 = vadd.f32 %v552, %v572
      %v589 = vadd.f32 %v553, %v573
      %v590 = vadd.f32 %v554, %v574
      %v591 = vlaneseq
      %v592 = vshrl.u32 %v591, 7
      %v593 = vsub.s32 2, %v592
      %v594 = vrot.slane %v306, %v593
      %v595 = vmul.f32 %v525, %v594
      %v596 = vmul.f32 %v513, %v594
      %v597 = vmul.f32 %v526, %v594
      %v598 = vmul.f32 %v514, %v594
      %v599 = vmul.f32 %v527, %v594
      %v600 = vmul.f32 %v515, %v594
      %v601 = vmul.f32 %v528, %v594
      %v602 = vmul.f32 %v516, %v594
      %v603 = vmul.f32 %v529, %v594
      %v604 = vmul.f32 %v517, %v594
      %v605 = vmul.f32 %v530, %v594
      %v606 = vmul.f32 %v518, %v594
      %v607 = vmul.f32 %v531, %v594
      %v608 = vmul.f32 %v519, %v594
      %v609 = vmul.f32 %v532, %v594
      %v610 = vmul.f32 %v520, %v594
      %v611 = vadd.f32 %v575, %v595
      %v612 = vadd.f32 %v576, %v596
      %v613 = vadd.f32 %v577, %v597
      %v614 = vadd.f32 %v578, %v598
      %v615 = vadd.f32 %v579, %v599
      %v616 = vadd.f32 %v580, %v600
      %v617 = vadd.f32 %v581, %v601
      %v618 = vadd.f32 %v582, %v602
      %v619 = vadd.f32 %v583, %v603
      %v620 = vadd.f32 %v584, %v604
      %v621 = vadd.f32 %v585, %v605
      %v622 = vadd.f32 %v586, %v606
      %v623 = vadd.f32 %v587, %v607
      %v624 = vadd.f32 %v588, %v608
      %v625 = vadd.f32 %v589, %v609
      %v626 = vadd.f32 %v590, %v610
      %v627 = vlaneseq
      %v628 = vshrl.u32 %v627, 7
      %v629 = vsub.s32 3, %v628
      %v630 = vrot.slane %v306, %v629
      %v631 = vmul.f32 %v526, %v630
      %v632 = vmul.f32 %v514, %v630
      %v633 = vmul.f32 %v527, %v630
      %v634 = vmul.f32 %v515, %v630
      %v635 = vmul.f32 %v528, %v630
      %v636 = vmul.f32 %v516, %v630
      %v637 = vmul.f32 %v529, %v630
      %v638 = vmul.f32 %v517, %v630
      %v639 = vmul.f32 %v530, %v630
      %v640 = vmul.f32 %v518, %v630
      %v641 = vmul.f32 %v531, %v630
      %v642 = vmul.f32 %v519, %v630
      %v643 = vmul.f32 %v532, %v630
      %v644 = vmul.f32 %v520, %v630
      %v645 = vmul.f32 %v533, %v630
      %v646 = vmul.f32 %v521, %v630
      %v647 = vadd.f32 %v611, %v631
      %v648 = vadd.f32 %v612, %v632
      %v649 = vadd.f32 %v613, %v633
      %v650 = vadd.f32 %v614, %v634
      %v651 = vadd.f32 %v615, %v635
      %v652 = vadd.f32 %v616, %v636
      %v653 = vadd.f32 %v617, %v637
      %v654 = vadd.f32 %v618, %v638
      %v655 = vadd.f32 %v619, %v639
      %v656 = vadd.f32 %v620, %v640
      %v657 = vadd.f32 %v621, %v641
      %v658 = vadd.f32 %v622, %v642
      %v659 = vadd.f32 %v623, %v643
      %v660 = vadd.f32 %v624, %v644
      %v661 = vadd.f32 %v625, %v645
      %v662 = vadd.f32 %v626, %v646
      %v663 = vlaneseq
      %v664 = vshrl.u32 %v663, 7
      %v665 = vsub.s32 4, %v664
      %v666 = vrot.slane %v306, %v665
      %v667 = vmul.f32 %v527, %v666
      %v668 = vmul.f32 %v515, %v666
      %v669 = vmul.f32 %v528, %v666
      %v670 = vmul.f32 %v516, %v666
      %v671 = vmul.f32 %v529, %v666
      %v672 = vmul.f32 %v517, %v666
      %v673 = vmul.f32 %v530, %v666
      %v674 = vmul.f32 %v518, %v666
      %v675 = vmul.f32 %v531, %v666
      %v676 = vmul.f32 %v519, %v666
      %v677 = vmul.f32 %v532, %v666
      %v678 = vmul.f32 %v520, %v666
      %v679 = vmul.f32 %v533, %v666
      %v680 = vmul.f32 %v521, %v666
      %v681 = vmul.f32 %v534, %v666
      %v682 = vmul.f32 %v522, %v666
      %v683 = vadd.f32 %v647, %v667
      %v684 = vadd.f32 %v648, %v668
      %v685 = vadd.f32 %v649, %v669
      %v686 = vadd.f32 %v650, %v670
      %v687 = vadd.f32 %v651, %v671
      %v688 = vadd.f32 %v652, %v672
      %v689 = vadd.f32 %v653, %v673
      %v690 = vadd.f32 %v654, %v674
      %v691 = vadd.f32 %v655, %v675
      %v692 = vadd.f32 %v656, %v676
      %v693 = vadd.f32 %v657, %v677
      %v694 = vadd.f32 %v658, %v678
      %v695 = vadd.f32 %v659, %v679
      %v696 = vadd.f32 %v660, %v680
      %v697 = vadd.f32 %v661, %v681
      %v698 = vadd.f32 %v662, %v682
      %v699 = vrot.slane %v436, 7
      %v700 = vrot.slane %v439, 7
      %v701 = vrot.slane %v442, 7
      %v702 = vrot.slane %v445, 7
      %v703 = vrot.slane %v448, 7
      %v704 = vrot.slane %v451, 7
      %v705 = vrot.slane %v454, 7
      %v706 = vrot.slane %v457, 7
      %v707 = vrot.slane %v460, 7
      %v708 = vrot.slane %v463, 7
      %v709 = vrot.slane %v466, 7
      %v710 = vrot.slane %v469, 7
      %v711 = vrot.slane %v437, 7
      %v712 = vrot.slane %v440, 7
      %v713 = vrot.slane %v443, 7
      %v714 = vrot.slane %v446, 7
      %v715 = vrot.slane %v449, 7
      %v716 = vrot.slane %v452, 7
      %v717 = vrot.slane %v455, 7
      %v718 = vrot.slane %v458, 7
      %v719 = vrot.slane %v461, 7
      %v720 = vrot.slane %v464, 7
      %v721 = vrot.slane %v467, 7
      %v722 = vrot.slane %v470, 7
      %v723 = vrot.slane %v438, 7
      %v724 = vrot.slane %v441, 7
      %v725 = vrot.slane %v444, 7
      %v726 = vrot.slane %v447, 7
      %v727 = vrot.slane %v450, 7
      %v728 = vrot.slane %v453, 7
      %v729 = vrot.slane %v456, 7
      %v730 = vrot.slane %v459, 7
      %v731 = vrot.slane %v462, 7
      %v732 = vrot.slane %v465, 7
      %v733 = vrot.slane %v468, 7
      %v734 = vrot.slane %v471, 7
      %vm735 = vcmp.lt.s32.totalorder %v509, 1
      %v736 = vsel %vm735, %v699, %v711
      %v737 = vsel %vm735, %v700, %v712
      %v738 = vsel %vm735, %v701, %v713
      %v739 = vsel %vm735, %v702, %v714
      %v740 = vsel %vm735, %v703, %v715
      %v741 = vsel %vm735, %v704, %v716
      %v742 = vsel %vm735, %v705, %v717
      %v743 = vsel %vm735, %v706, %v718
      %v744 = vsel %vm735, %v707, %v719
      %v745 = vsel %vm735, %v708, %v720
      %v746 = vsel %vm735, %v709, %v721
      %v747 = vsel %vm735, %v710, %v722
      %v748 = vsel %vm735, %v723, %v699
      %v749 = vsel %vm735, %v724, %v700
      %v750 = vsel %vm735, %v725, %v701
      %v751 = vsel %vm735, %v726, %v702
      %v752 = vsel %vm735, %v727, %v703
      %v753 = vsel %vm735, %v728, %v704
      %v754 = vsel %vm735, %v729, %v705
      %v755 = vsel %vm735, %v730, %v706
      %v756 = vsel %vm735, %v731, %v707
      %v757 = vsel %vm735, %v732, %v708
      %v758 = vsel %vm735, %v733, %v709
      %v759 = vsel %vm735, %v734, %v710
      %v760 = vlaneseq
      %v761 = vshrl.u32 %v760, 7
      %v762 = vsub.s32 5, %v761
      %v763 = vrot.slane %v306, %v762
      %v764 = vmul.f32 %v748, %v763
      %v765 = vmul.f32 %v736, %v763
      %v766 = vmul.f32 %v749, %v763
      %v767 = vmul.f32 %v737, %v763
      %v768 = vmul.f32 %v750, %v763
      %v769 = vmul.f32 %v738, %v763
      %v770 = vmul.f32 %v751, %v763
      %v771 = vmul.f32 %v739, %v763
      %v772 = vmul.f32 %v752, %v763
      %v773 = vmul.f32 %v740, %v763
      %v774 = vmul.f32 %v753, %v763
      %v775 = vmul.f32 %v741, %v763
      %v776 = vmul.f32 %v754, %v763
      %v777 = vmul.f32 %v742, %v763
      %v778 = vmul.f32 %v755, %v763
      %v779 = vmul.f32 %v743, %v763
      %v780 = vadd.f32 %v683, %v764
      %v781 = vadd.f32 %v684, %v765
      %v782 = vadd.f32 %v685, %v766
      %v783 = vadd.f32 %v686, %v767
      %v784 = vadd.f32 %v687, %v768
      %v785 = vadd.f32 %v688, %v769
      %v786 = vadd.f32 %v689, %v770
      %v787 = vadd.f32 %v690, %v771
      %v788 = vadd.f32 %v691, %v772
      %v789 = vadd.f32 %v692, %v773
      %v790 = vadd.f32 %v693, %v774
      %v791 = vadd.f32 %v694, %v775
      %v792 = vadd.f32 %v695, %v776
      %v793 = vadd.f32 %v696, %v777
      %v794 = vadd.f32 %v697, %v778
      %v795 = vadd.f32 %v698, %v779
      %v796 = vlaneseq
      %v797 = vshrl.u32 %v796, 7
      %v798 = vsub.s32 6, %v797
      %v799 = vrot.slane %v306, %v798
      %v800 = vmul.f32 %v749, %v799
      %v801 = vmul.f32 %v737, %v799
      %v802 = vmul.f32 %v750, %v799
      %v803 = vmul.f32 %v738, %v799
      %v804 = vmul.f32 %v751, %v799
      %v805 = vmul.f32 %v739, %v799
      %v806 = vmul.f32 %v752, %v799
      %v807 = vmul.f32 %v740, %v799
      %v808 = vmul.f32 %v753, %v799
      %v809 = vmul.f32 %v741, %v799
      %v810 = vmul.f32 %v754, %v799
      %v811 = vmul.f32 %v742, %v799
      %v812 = vmul.f32 %v755, %v799
      %v813 = vmul.f32 %v743, %v799
      %v814 = vmul.f32 %v756, %v799
      %v815 = vmul.f32 %v744, %v799
      %v816 = vadd.f32 %v780, %v800
      %v817 = vadd.f32 %v781, %v801
      %v818 = vadd.f32 %v782, %v802
      %v819 = vadd.f32 %v783, %v803
      %v820 = vadd.f32 %v784, %v804
      %v821 = vadd.f32 %v785, %v805
      %v822 = vadd.f32 %v786, %v806
      %v823 = vadd.f32 %v787, %v807
      %v824 = vadd.f32 %v788, %v808
      %v825 = vadd.f32 %v789, %v809
      %v826 = vadd.f32 %v790, %v810
      %v827 = vadd.f32 %v791, %v811
      %v828 = vadd.f32 %v792, %v812
      %v829 = vadd.f32 %v793, %v813
      %v830 = vadd.f32 %v794, %v814
      %v831 = vadd.f32 %v795, %v815
      %v832 = vlaneseq
      %v833 = vshrl.u32 %v832, 7
      %v834 = vsub.s32 7, %v833
      %v835 = vrot.slane %v306, %v834
      %v836 = vmul.f32 %v750, %v835
      %v837 = vmul.f32 %v738, %v835
      %v838 = vmul.f32 %v751, %v835
      %v839 = vmul.f32 %v739, %v835
      %v840 = vmul.f32 %v752, %v835
      %v841 = vmul.f32 %v740, %v835
      %v842 = vmul.f32 %v753, %v835
      %v843 = vmul.f32 %v741, %v835
      %v844 = vmul.f32 %v754, %v835
      %v845 = vmul.f32 %v742, %v835
      %v846 = vmul.f32 %v755, %v835
      %v847 = vmul.f32 %v743, %v835
      %v848 = vmul.f32 %v756, %v835
      %v849 = vmul.f32 %v744, %v835
      %v850 = vmul.f32 %v757, %v835
      %v851 = vmul.f32 %v745, %v835
      %v852 = vadd.f32 %v816, %v836
      %v853 = vadd.f32 %v817, %v837
      %v854 = vadd.f32 %v818, %v838
      %v855 = vadd.f32 %v819, %v839
      %v856 = vadd.f32 %v820, %v840
      %v857 = vadd.f32 %v821, %v841
      %v858 = vadd.f32 %v822, %v842
      %v859 = vadd.f32 %v823, %v843
      %v860 = vadd.f32 %v824, %v844
      %v861 = vadd.f32 %v825, %v845
      %v862 = vadd.f32 %v826, %v846
      %v863 = vadd.f32 %v827, %v847
      %v864 = vadd.f32 %v828, %v848
      %v865 = vadd.f32 %v829, %v849
      %v866 = vadd.f32 %v830, %v850
      %v867 = vadd.f32 %v831, %v851
      %v868 = vlaneseq
      %v869 = vshrl.u32 %v868, 7
      %v870 = vsub.s32 0, %v869
      %v871 = vrot.slane %v307, %v870
      %v872 = vmul.f32 %v751, %v871
      %v873 = vmul.f32 %v739, %v871
      %v874 = vmul.f32 %v752, %v871
      %v875 = vmul.f32 %v740, %v871
      %v876 = vmul.f32 %v753, %v871
      %v877 = vmul.f32 %v741, %v871
      %v878 = vmul.f32 %v754, %v871
      %v879 = vmul.f32 %v742, %v871
      %v880 = vmul.f32 %v755, %v871
      %v881 = vmul.f32 %v743, %v871
      %v882 = vmul.f32 %v756, %v871
      %v883 = vmul.f32 %v744, %v871
      %v884 = vmul.f32 %v757, %v871
      %v885 = vmul.f32 %v745, %v871
      %v886 = vmul.f32 %v758, %v871
      %v887 = vmul.f32 %v746, %v871
      %v888 = vadd.f32 %v852, %v872
      %v889 = vadd.f32 %v853, %v873
      %v890 = vadd.f32 %v854, %v874
      %v891 = vadd.f32 %v855, %v875
      %v892 = vadd.f32 %v856, %v876
      %v893 = vadd.f32 %v857, %v877
      %v894 = vadd.f32 %v858, %v878
      %v895 = vadd.f32 %v859, %v879
      %v896 = vadd.f32 %v860, %v880
      %v897 = vadd.f32 %v861, %v881
      %v898 = vadd.f32 %v862, %v882
      %v899 = vadd.f32 %v863, %v883
      %v900 = vadd.f32 %v864, %v884
      %v901 = vadd.f32 %v865, %v885
      %v902 = vadd.f32 %v866, %v886
      %v903 = vadd.f32 %v867, %v887
      %v904 = vlaneseq
      %v905 = vshrl.u32 %v904, 7
      %v906 = vsub.s32 1, %v905
      %v907 = vrot.slane %v307, %v906
      %v908 = vmul.f32 %v752, %v907
      %v909 = vmul.f32 %v740, %v907
      %v910 = vmul.f32 %v753, %v907
      %v911 = vmul.f32 %v741, %v907
      %v912 = vmul.f32 %v754, %v907
      %v913 = vmul.f32 %v742, %v907
      %v914 = vmul.f32 %v755, %v907
      %v915 = vmul.f32 %v743, %v907
      %v916 = vmul.f32 %v756, %v907
      %v917 = vmul.f32 %v744, %v907
      %v918 = vmul.f32 %v757, %v907
      %v919 = vmul.f32 %v745, %v907
      %v920 = vmul.f32 %v758, %v907
      %v921 = vmul.f32 %v746, %v907
      %v922 = vmul.f32 %v759, %v907
      %v923 = vmul.f32 %v747, %v907
      %v924 = vadd.f32 %v888, %v908
      %v925 = vadd.f32 %v889, %v909
      %v926 = vadd.f32 %v890, %v910
      %v927 = vadd.f32 %v891, %v911
      %v928 = vadd.f32 %v892, %v912
      %v929 = vadd.f32 %v893, %v913
      %v930 = vadd.f32 %v894, %v914
      %v931 = vadd.f32 %v895, %v915
      %v932 = vadd.f32 %v896, %v916
      %v933 = vadd.f32 %v897, %v917
      %v934 = vadd.f32 %v898, %v918
      %v935 = vadd.f32 %v899, %v919
      %v936 = vadd.f32 %v900, %v920
      %v937 = vadd.f32 %v901, %v921
      %v938 = vadd.f32 %v902, %v922
      %v939 = vadd.f32 %v903, %v923
      %v940 = vlaneseq
      %v941 = vshrl.u32 %v940, 7
      %v942 = vsub.s32 2, %v941
      %v943 = vrot.slane %v307, %v942
      %v944 = vmul.f32 %v436, %v943
      %v945 = vmul.f32 %v437, %v943
      %v946 = vmul.f32 %v439, %v943
      %v947 = vmul.f32 %v440, %v943
      %v948 = vmul.f32 %v442, %v943
      %v949 = vmul.f32 %v443, %v943
      %v950 = vmul.f32 %v445, %v943
      %v951 = vmul.f32 %v446, %v943
      %v952 = vmul.f32 %v448, %v943
      %v953 = vmul.f32 %v449, %v943
      %v954 = vmul.f32 %v451, %v943
      %v955 = vmul.f32 %v452, %v943
      %v956 = vmul.f32 %v454, %v943
      %v957 = vmul.f32 %v455, %v943
      %v958 = vmul.f32 %v457, %v943
      %v959 = vmul.f32 %v458, %v943
      %v960 = vadd.f32 %v924, %v944
      %v961 = vadd.f32 %v925, %v945
      %v962 = vadd.f32 %v926, %v946
      %v963 = vadd.f32 %v927, %v947
      %v964 = vadd.f32 %v928, %v948
      %v965 = vadd.f32 %v929, %v949
      %v966 = vadd.f32 %v930, %v950
      %v967 = vadd.f32 %v931, %v951
      %v968 = vadd.f32 %v932, %v952
      %v969 = vadd.f32 %v933, %v953
      %v970 = vadd.f32 %v934, %v954
      %v971 = vadd.f32 %v935, %v955
      %v972 = vadd.f32 %v936, %v956
      %v973 = vadd.f32 %v937, %v957
      %v974 = vadd.f32 %v938, %v958
      %v975 = vadd.f32 %v939, %v959
      %v976 = vlaneseq
      %v977 = vshrl.u32 %v976, 7
      %v978 = vsub.s32 3, %v977
      %v979 = vrot.slane %v307, %v978
      %v980 = vmul.f32 %v439, %v979
      %v981 = vmul.f32 %v440, %v979
      %v982 = vmul.f32 %v442, %v979
      %v983 = vmul.f32 %v443, %v979
      %v984 = vmul.f32 %v445, %v979
      %v985 = vmul.f32 %v446, %v979
      %v986 = vmul.f32 %v448, %v979
      %v987 = vmul.f32 %v449, %v979
      %v988 = vmul.f32 %v451, %v979
      %v989 = vmul.f32 %v452, %v979
      %v990 = vmul.f32 %v454, %v979
      %v991 = vmul.f32 %v455, %v979
      %v992 = vmul.f32 %v457, %v979
      %v993 = vmul.f32 %v458, %v979
      %v994 = vmul.f32 %v460, %v979
      %v995 = vmul.f32 %v461, %v979
      %v996 = vadd.f32 %v960, %v980
      %v997 = vadd.f32 %v961, %v981
      %v998 = vadd.f32 %v962, %v982
      %v999 = vadd.f32 %v963, %v983
      %v1000 = vadd.f32 %v964, %v984
      %v1001 = vadd.f32 %v965, %v985
      %v1002 = vadd.f32 %v966, %v986
      %v1003 = vadd.f32 %v967, %v987
      %v1004 = vadd.f32 %v968, %v988
      %v1005 = vadd.f32 %v969, %v989
      %v1006 = vadd.f32 %v970, %v990
      %v1007 = vadd.f32 %v971, %v991
      %v1008 = vadd.f32 %v972, %v992
      %v1009 = vadd.f32 %v973, %v993
      %v1010 = vadd.f32 %v974, %v994
      %v1011 = vadd.f32 %v975, %v995
      %v1012 = vlaneseq
      %v1013 = vshrl.u32 %v1012, 7
      %v1014 = vsub.s32 4, %v1013
      %v1015 = vrot.slane %v307, %v1014
      %v1016 = vmul.f32 %v442, %v1015
      %v1017 = vmul.f32 %v443, %v1015
      %v1018 = vmul.f32 %v445, %v1015
      %v1019 = vmul.f32 %v446, %v1015
      %v1020 = vmul.f32 %v448, %v1015
      %v1021 = vmul.f32 %v449, %v1015
      %v1022 = vmul.f32 %v451, %v1015
      %v1023 = vmul.f32 %v452, %v1015
      %v1024 = vmul.f32 %v454, %v1015
      %v1025 = vmul.f32 %v455, %v1015
      %v1026 = vmul.f32 %v457, %v1015
      %v1027 = vmul.f32 %v458, %v1015
      %v1028 = vmul.f32 %v460, %v1015
      %v1029 = vmul.f32 %v461, %v1015
      %v1030 = vmul.f32 %v463, %v1015
      %v1031 = vmul.f32 %v464, %v1015
      %v1032 = vadd.f32 %v996, %v1016
      %v1033 = vadd.f32 %v997, %v1017
      %v1034 = vadd.f32 %v998, %v1018
      %v1035 = vadd.f32 %v999, %v1019
      %v1036 = vadd.f32 %v1000, %v1020
      %v1037 = vadd.f32 %v1001, %v1021
      %v1038 = vadd.f32 %v1002, %v1022
      %v1039 = vadd.f32 %v1003, %v1023
      %v1040 = vadd.f32 %v1004, %v1024
      %v1041 = vadd.f32 %v1005, %v1025
      %v1042 = vadd.f32 %v1006, %v1026
      %v1043 = vadd.f32 %v1007, %v1027
      %v1044 = vadd.f32 %v1008, %v1028
      %v1045 = vadd.f32 %v1009, %v1029
      %v1046 = vadd.f32 %v1010, %v1030
      %v1047 = vadd.f32 %v1011, %v1031
      %v1048 = vlaneseq
      %v1049 = vshrl.u32 %v1048, 7
      %v1050 = vsub.s32 5, %v1049
      %v1051 = vrot.slane %v307, %v1050
      %v1052 = vmul.f32 %v445, %v1051
      %v1053 = vmul.f32 %v446, %v1051
      %v1054 = vmul.f32 %v448, %v1051
      %v1055 = vmul.f32 %v449, %v1051
      %v1056 = vmul.f32 %v451, %v1051
      %v1057 = vmul.f32 %v452, %v1051
      %v1058 = vmul.f32 %v454, %v1051
      %v1059 = vmul.f32 %v455, %v1051
      %v1060 = vmul.f32 %v457, %v1051
      %v1061 = vmul.f32 %v458, %v1051
      %v1062 = vmul.f32 %v460, %v1051
      %v1063 = vmul.f32 %v461, %v1051
      %v1064 = vmul.f32 %v463, %v1051
      %v1065 = vmul.f32 %v464, %v1051
      %v1066 = vmul.f32 %v466, %v1051
      %v1067 = vmul.f32 %v467, %v1051
      %v1068 = vadd.f32 %v1032, %v1052
      %v1069 = vadd.f32 %v1033, %v1053
      %v1070 = vadd.f32 %v1034, %v1054
      %v1071 = vadd.f32 %v1035, %v1055
      %v1072 = vadd.f32 %v1036, %v1056
      %v1073 = vadd.f32 %v1037, %v1057
      %v1074 = vadd.f32 %v1038, %v1058
      %v1075 = vadd.f32 %v1039, %v1059
      %v1076 = vadd.f32 %v1040, %v1060
      %v1077 = vadd.f32 %v1041, %v1061
      %v1078 = vadd.f32 %v1042, %v1062
      %v1079 = vadd.f32 %v1043, %v1063
      %v1080 = vadd.f32 %v1044, %v1064
      %v1081 = vadd.f32 %v1045, %v1065
      %v1082 = vadd.f32 %v1046, %v1066
      %v1083 = vadd.f32 %v1047, %v1067
      %v1084 = vlaneseq
      %v1085 = vshrl.u32 %v1084, 7
      %v1086 = vsub.s32 6, %v1085
      %v1087 = vrot.slane %v307, %v1086
      %v1088 = vmul.f32 %v448, %v1087
      %v1089 = vmul.f32 %v449, %v1087
      %v1090 = vmul.f32 %v451, %v1087
      %v1091 = vmul.f32 %v452, %v1087
      %v1092 = vmul.f32 %v454, %v1087
      %v1093 = vmul.f32 %v455, %v1087
      %v1094 = vmul.f32 %v457, %v1087
      %v1095 = vmul.f32 %v458, %v1087
      %v1096 = vmul.f32 %v460, %v1087
      %v1097 = vmul.f32 %v461, %v1087
      %v1098 = vmul.f32 %v463, %v1087
      %v1099 = vmul.f32 %v464, %v1087
      %v1100 = vmul.f32 %v466, %v1087
      %v1101 = vmul.f32 %v467, %v1087
      %v1102 = vmul.f32 %v469, %v1087
      %v1103 = vmul.f32 %v470, %v1087
      %v1104 = vadd.f32 %v1068, %v1088
      %v1105 = vadd.f32 %v1069, %v1089
      %v1106 = vadd.f32 %v1070, %v1090
      %v1107 = vadd.f32 %v1071, %v1091
      %v1108 = vadd.f32 %v1072, %v1092
      %v1109 = vadd.f32 %v1073, %v1093
      %v1110 = vadd.f32 %v1074, %v1094
      %v1111 = vadd.f32 %v1075, %v1095
      %v1112 = vadd.f32 %v1076, %v1096
      %v1113 = vadd.f32 %v1077, %v1097
      %v1114 = vadd.f32 %v1078, %v1098
      %v1115 = vadd.f32 %v1079, %v1099
      %v1116 = vadd.f32 %v1080, %v1100
      %v1117 = vadd.f32 %v1081, %v1101
      %v1118 = vadd.f32 %v1082, %v1102
      %v1119 = vadd.f32 %v1083, %v1103
      %v1120 = vrot.slane %v436, 1
      %v1121 = vrot.slane %v439, 1
      %v1122 = vrot.slane %v442, 1
      %v1123 = vrot.slane %v445, 1
      %v1124 = vrot.slane %v448, 1
      %v1125 = vrot.slane %v451, 1
      %v1126 = vrot.slane %v454, 1
      %v1127 = vrot.slane %v457, 1
      %v1128 = vrot.slane %v460, 1
      %v1129 = vrot.slane %v463, 1
      %v1130 = vrot.slane %v466, 1
      %v1131 = vrot.slane %v469, 1
      %v1132 = vrot.slane %v437, 1
      %v1133 = vrot.slane %v440, 1
      %v1134 = vrot.slane %v443, 1
      %v1135 = vrot.slane %v446, 1
      %v1136 = vrot.slane %v449, 1
      %v1137 = vrot.slane %v452, 1
      %v1138 = vrot.slane %v455, 1
      %v1139 = vrot.slane %v458, 1
      %v1140 = vrot.slane %v461, 1
      %v1141 = vrot.slane %v464, 1
      %v1142 = vrot.slane %v467, 1
      %v1143 = vrot.slane %v470, 1
      %v1144 = vrot.slane %v438, 1
      %v1145 = vrot.slane %v441, 1
      %v1146 = vrot.slane %v444, 1
      %v1147 = vrot.slane %v447, 1
      %v1148 = vrot.slane %v450, 1
      %v1149 = vrot.slane %v453, 1
      %v1150 = vrot.slane %v456, 1
      %v1151 = vrot.slane %v459, 1
      %v1152 = vrot.slane %v462, 1
      %v1153 = vrot.slane %v465, 1
      %v1154 = vrot.slane %v468, 1
      %v1155 = vrot.slane %v471, 1
      %vm1156 = vcmp.lt.s32.totalorder %v509, 7
      %v1157 = vsel %vm1156, %v1132, %v1144
      %v1158 = vsel %vm1156, %v1133, %v1145
      %v1159 = vsel %vm1156, %v1134, %v1146
      %v1160 = vsel %vm1156, %v1135, %v1147
      %v1161 = vsel %vm1156, %v1136, %v1148
      %v1162 = vsel %vm1156, %v1137, %v1149
      %v1163 = vsel %vm1156, %v1138, %v1150
      %v1164 = vsel %vm1156, %v1139, %v1151
      %v1165 = vsel %vm1156, %v1140, %v1152
      %v1166 = vsel %vm1156, %v1141, %v1153
      %v1167 = vsel %vm1156, %v1142, %v1154
      %v1168 = vsel %vm1156, %v1143, %v1155
      %v1169 = vsel %vm1156, %v1120, %v1132
      %v1170 = vsel %vm1156, %v1121, %v1133
      %v1171 = vsel %vm1156, %v1122, %v1134
      %v1172 = vsel %vm1156, %v1123, %v1135
      %v1173 = vsel %vm1156, %v1124, %v1136
      %v1174 = vsel %vm1156, %v1125, %v1137
      %v1175 = vsel %vm1156, %v1126, %v1138
      %v1176 = vsel %vm1156, %v1127, %v1139
      %v1177 = vsel %vm1156, %v1128, %v1140
      %v1178 = vsel %vm1156, %v1129, %v1141
      %v1179 = vsel %vm1156, %v1130, %v1142
      %v1180 = vsel %vm1156, %v1131, %v1143
      %v1181 = vlaneseq
      %v1182 = vshrl.u32 %v1181, 7
      %v1183 = vsub.s32 7, %v1182
      %v1184 = vrot.slane %v307, %v1183
      %v1185 = vmul.f32 %v1169, %v1184
      %v1186 = vmul.f32 %v1157, %v1184
      %v1187 = vmul.f32 %v1170, %v1184
      %v1188 = vmul.f32 %v1158, %v1184
      %v1189 = vmul.f32 %v1171, %v1184
      %v1190 = vmul.f32 %v1159, %v1184
      %v1191 = vmul.f32 %v1172, %v1184
      %v1192 = vmul.f32 %v1160, %v1184
      %v1193 = vmul.f32 %v1173, %v1184
      %v1194 = vmul.f32 %v1161, %v1184
      %v1195 = vmul.f32 %v1174, %v1184
      %v1196 = vmul.f32 %v1162, %v1184
      %v1197 = vmul.f32 %v1175, %v1184
      %v1198 = vmul.f32 %v1163, %v1184
      %v1199 = vmul.f32 %v1176, %v1184
      %v1200 = vmul.f32 %v1164, %v1184
      %v1201 = vadd.f32 %v1104, %v1185
      %v1202 = vadd.f32 %v1105, %v1186
      %v1203 = vadd.f32 %v1106, %v1187
      %v1204 = vadd.f32 %v1107, %v1188
      %v1205 = vadd.f32 %v1108, %v1189
      %v1206 = vadd.f32 %v1109, %v1190
      %v1207 = vadd.f32 %v1110, %v1191
      %v1208 = vadd.f32 %v1111, %v1192
      %v1209 = vadd.f32 %v1112, %v1193
      %v1210 = vadd.f32 %v1113, %v1194
      %v1211 = vadd.f32 %v1114, %v1195
      %v1212 = vadd.f32 %v1115, %v1196
      %v1213 = vadd.f32 %v1116, %v1197
      %v1214 = vadd.f32 %v1117, %v1198
      %v1215 = vadd.f32 %v1118, %v1199
      %v1216 = vadd.f32 %v1119, %v1200
      %v1217 = vlaneseq
      %v1218 = vshrl.u32 %v1217, 7
      %v1219 = vsub.s32 0, %v1218
      %v1220 = vrot.slane %v308, %v1219
      %v1221 = vmul.f32 %v1170, %v1220
      %v1222 = vmul.f32 %v1158, %v1220
      %v1223 = vmul.f32 %v1171, %v1220
      %v1224 = vmul.f32 %v1159, %v1220
      %v1225 = vmul.f32 %v1172, %v1220
      %v1226 = vmul.f32 %v1160, %v1220
      %v1227 = vmul.f32 %v1173, %v1220
      %v1228 = vmul.f32 %v1161, %v1220
      %v1229 = vmul.f32 %v1174, %v1220
      %v1230 = vmul.f32 %v1162, %v1220
      %v1231 = vmul.f32 %v1175, %v1220
      %v1232 = vmul.f32 %v1163, %v1220
      %v1233 = vmul.f32 %v1176, %v1220
      %v1234 = vmul.f32 %v1164, %v1220
      %v1235 = vmul.f32 %v1177, %v1220
      %v1236 = vmul.f32 %v1165, %v1220
      %v1237 = vadd.f32 %v1201, %v1221
      %v1238 = vadd.f32 %v1202, %v1222
      %v1239 = vadd.f32 %v1203, %v1223
      %v1240 = vadd.f32 %v1204, %v1224
      %v1241 = vadd.f32 %v1205, %v1225
      %v1242 = vadd.f32 %v1206, %v1226
      %v1243 = vadd.f32 %v1207, %v1227
      %v1244 = vadd.f32 %v1208, %v1228
      %v1245 = vadd.f32 %v1209, %v1229
      %v1246 = vadd.f32 %v1210, %v1230
      %v1247 = vadd.f32 %v1211, %v1231
      %v1248 = vadd.f32 %v1212, %v1232
      %v1249 = vadd.f32 %v1213, %v1233
      %v1250 = vadd.f32 %v1214, %v1234
      %v1251 = vadd.f32 %v1215, %v1235
      %v1252 = vadd.f32 %v1216, %v1236
      %v1253 = vlaneseq
      %v1254 = vshrl.u32 %v1253, 7
      %v1255 = vsub.s32 1, %v1254
      %v1256 = vrot.slane %v308, %v1255
      %v1257 = vmul.f32 %v1171, %v1256
      %v1258 = vmul.f32 %v1159, %v1256
      %v1259 = vmul.f32 %v1172, %v1256
      %v1260 = vmul.f32 %v1160, %v1256
      %v1261 = vmul.f32 %v1173, %v1256
      %v1262 = vmul.f32 %v1161, %v1256
      %v1263 = vmul.f32 %v1174, %v1256
      %v1264 = vmul.f32 %v1162, %v1256
      %v1265 = vmul.f32 %v1175, %v1256
      %v1266 = vmul.f32 %v1163, %v1256
      %v1267 = vmul.f32 %v1176, %v1256
      %v1268 = vmul.f32 %v1164, %v1256
      %v1269 = vmul.f32 %v1177, %v1256
      %v1270 = vmul.f32 %v1165, %v1256
      %v1271 = vmul.f32 %v1178, %v1256
      %v1272 = vmul.f32 %v1166, %v1256
      %v1273 = vadd.f32 %v1237, %v1257
      %v1274 = vadd.f32 %v1238, %v1258
      %v1275 = vadd.f32 %v1239, %v1259
      %v1276 = vadd.f32 %v1240, %v1260
      %v1277 = vadd.f32 %v1241, %v1261
      %v1278 = vadd.f32 %v1242, %v1262
      %v1279 = vadd.f32 %v1243, %v1263
      %v1280 = vadd.f32 %v1244, %v1264
      %v1281 = vadd.f32 %v1245, %v1265
      %v1282 = vadd.f32 %v1246, %v1266
      %v1283 = vadd.f32 %v1247, %v1267
      %v1284 = vadd.f32 %v1248, %v1268
      %v1285 = vadd.f32 %v1249, %v1269
      %v1286 = vadd.f32 %v1250, %v1270
      %v1287 = vadd.f32 %v1251, %v1271
      %v1288 = vadd.f32 %v1252, %v1272
      %v1289 = vlaneseq
      %v1290 = vshrl.u32 %v1289, 7
      %v1291 = vsub.s32 2, %v1290
      %v1292 = vrot.slane %v308, %v1291
      %v1293 = vmul.f32 %v1172, %v1292
      %v1294 = vmul.f32 %v1160, %v1292
      %v1295 = vmul.f32 %v1173, %v1292
      %v1296 = vmul.f32 %v1161, %v1292
      %v1297 = vmul.f32 %v1174, %v1292
      %v1298 = vmul.f32 %v1162, %v1292
      %v1299 = vmul.f32 %v1175, %v1292
      %v1300 = vmul.f32 %v1163, %v1292
      %v1301 = vmul.f32 %v1176, %v1292
      %v1302 = vmul.f32 %v1164, %v1292
      %v1303 = vmul.f32 %v1177, %v1292
      %v1304 = vmul.f32 %v1165, %v1292
      %v1305 = vmul.f32 %v1178, %v1292
      %v1306 = vmul.f32 %v1166, %v1292
      %v1307 = vmul.f32 %v1179, %v1292
      %v1308 = vmul.f32 %v1167, %v1292
      %v1309 = vadd.f32 %v1273, %v1293
      %v1310 = vadd.f32 %v1274, %v1294
      %v1311 = vadd.f32 %v1275, %v1295
      %v1312 = vadd.f32 %v1276, %v1296
      %v1313 = vadd.f32 %v1277, %v1297
      %v1314 = vadd.f32 %v1278, %v1298
      %v1315 = vadd.f32 %v1279, %v1299
      %v1316 = vadd.f32 %v1280, %v1300
      %v1317 = vadd.f32 %v1281, %v1301
      %v1318 = vadd.f32 %v1282, %v1302
      %v1319 = vadd.f32 %v1283, %v1303
      %v1320 = vadd.f32 %v1284, %v1304
      %v1321 = vadd.f32 %v1285, %v1305
      %v1322 = vadd.f32 %v1286, %v1306
      %v1323 = vadd.f32 %v1287, %v1307
      %v1324 = vadd.f32 %v1288, %v1308
      %v1325 = vlaneseq
      %v1326 = vshrl.u32 %v1325, 7
      %v1327 = vsub.s32 3, %v1326
      %v1328 = vrot.slane %v308, %v1327
      %v1329 = vmul.f32 %v1173, %v1328
      %v1330 = vmul.f32 %v1161, %v1328
      %v1331 = vmul.f32 %v1174, %v1328
      %v1332 = vmul.f32 %v1162, %v1328
      %v1333 = vmul.f32 %v1175, %v1328
      %v1334 = vmul.f32 %v1163, %v1328
      %v1335 = vmul.f32 %v1176, %v1328
      %v1336 = vmul.f32 %v1164, %v1328
      %v1337 = vmul.f32 %v1177, %v1328
      %v1338 = vmul.f32 %v1165, %v1328
      %v1339 = vmul.f32 %v1178, %v1328
      %v1340 = vmul.f32 %v1166, %v1328
      %v1341 = vmul.f32 %v1179, %v1328
      %v1342 = vmul.f32 %v1167, %v1328
      %v1343 = vmul.f32 %v1180, %v1328
      %v1344 = vmul.f32 %v1168, %v1328
      %v1345 = vadd.f32 %v1309, %v1329
      %v1346 = vadd.f32 %v1310, %v1330
      %v1347 = vadd.f32 %v1311, %v1331
      %v1348 = vadd.f32 %v1312, %v1332
      %v1349 = vadd.f32 %v1313, %v1333
      %v1350 = vadd.f32 %v1314, %v1334
      %v1351 = vadd.f32 %v1315, %v1335
      %v1352 = vadd.f32 %v1316, %v1336
      %v1353 = vadd.f32 %v1317, %v1337
      %v1354 = vadd.f32 %v1318, %v1338
      %v1355 = vadd.f32 %v1319, %v1339
      %v1356 = vadd.f32 %v1320, %v1340
      %v1357 = vadd.f32 %v1321, %v1341
      %v1358 = vadd.f32 %v1322, %v1342
      %v1359 = vadd.f32 %v1323, %v1343
      %v1360 = vadd.f32 %v1324, %v1344
      %v1361 = vrot.slane %v436, 2
      %v1362 = vrot.slane %v439, 2
      %v1363 = vrot.slane %v442, 2
      %v1364 = vrot.slane %v445, 2
      %v1365 = vrot.slane %v448, 2
      %v1366 = vrot.slane %v451, 2
      %v1367 = vrot.slane %v454, 2
      %v1368 = vrot.slane %v457, 2
      %v1369 = vrot.slane %v460, 2
      %v1370 = vrot.slane %v463, 2
      %v1371 = vrot.slane %v466, 2
      %v1372 = vrot.slane %v469, 2
      %v1373 = vrot.slane %v437, 2
      %v1374 = vrot.slane %v440, 2
      %v1375 = vrot.slane %v443, 2
      %v1376 = vrot.slane %v446, 2
      %v1377 = vrot.slane %v449, 2
      %v1378 = vrot.slane %v452, 2
      %v1379 = vrot.slane %v455, 2
      %v1380 = vrot.slane %v458, 2
      %v1381 = vrot.slane %v461, 2
      %v1382 = vrot.slane %v464, 2
      %v1383 = vrot.slane %v467, 2
      %v1384 = vrot.slane %v470, 2
      %v1385 = vrot.slane %v438, 2
      %v1386 = vrot.slane %v441, 2
      %v1387 = vrot.slane %v444, 2
      %v1388 = vrot.slane %v447, 2
      %v1389 = vrot.slane %v450, 2
      %v1390 = vrot.slane %v453, 2
      %v1391 = vrot.slane %v456, 2
      %v1392 = vrot.slane %v459, 2
      %v1393 = vrot.slane %v462, 2
      %v1394 = vrot.slane %v465, 2
      %v1395 = vrot.slane %v468, 2
      %v1396 = vrot.slane %v471, 2
      %vm1397 = vcmp.lt.s32.totalorder %v509, 6
      %v1398 = vsel %vm1397, %v1373, %v1385
      %v1399 = vsel %vm1397, %v1374, %v1386
      %v1400 = vsel %vm1397, %v1375, %v1387
      %v1401 = vsel %vm1397, %v1376, %v1388
      %v1402 = vsel %vm1397, %v1377, %v1389
      %v1403 = vsel %vm1397, %v1378, %v1390
      %v1404 = vsel %vm1397, %v1379, %v1391
      %v1405 = vsel %vm1397, %v1380, %v1392
      %v1406 = vsel %vm1397, %v1381, %v1393
      %v1407 = vsel %vm1397, %v1382, %v1394
      %v1408 = vsel %vm1397, %v1383, %v1395
      %v1409 = vsel %vm1397, %v1384, %v1396
      %v1410 = vsel %vm1397, %v1361, %v1373
      %v1411 = vsel %vm1397, %v1362, %v1374
      %v1412 = vsel %vm1397, %v1363, %v1375
      %v1413 = vsel %vm1397, %v1364, %v1376
      %v1414 = vsel %vm1397, %v1365, %v1377
      %v1415 = vsel %vm1397, %v1366, %v1378
      %v1416 = vsel %vm1397, %v1367, %v1379
      %v1417 = vsel %vm1397, %v1368, %v1380
      %v1418 = vsel %vm1397, %v1369, %v1381
      %v1419 = vsel %vm1397, %v1370, %v1382
      %v1420 = vsel %vm1397, %v1371, %v1383
      %v1421 = vsel %vm1397, %v1372, %v1384
      %v1422 = vlaneseq
      %v1423 = vshrl.u32 %v1422, 7
      %v1424 = vsub.s32 4, %v1423
      %v1425 = vrot.slane %v308, %v1424
      %v1426 = vmul.f32 %v1410, %v1425
      %v1427 = vmul.f32 %v1398, %v1425
      %v1428 = vmul.f32 %v1411, %v1425
      %v1429 = vmul.f32 %v1399, %v1425
      %v1430 = vmul.f32 %v1412, %v1425
      %v1431 = vmul.f32 %v1400, %v1425
      %v1432 = vmul.f32 %v1413, %v1425
      %v1433 = vmul.f32 %v1401, %v1425
      %v1434 = vmul.f32 %v1414, %v1425
      %v1435 = vmul.f32 %v1402, %v1425
      %v1436 = vmul.f32 %v1415, %v1425
      %v1437 = vmul.f32 %v1403, %v1425
      %v1438 = vmul.f32 %v1416, %v1425
      %v1439 = vmul.f32 %v1404, %v1425
      %v1440 = vmul.f32 %v1417, %v1425
      %v1441 = vmul.f32 %v1405, %v1425
      %v1442 = vadd.f32 %v1345, %v1426
      %v1443 = vadd.f32 %v1346, %v1427
      %v1444 = vadd.f32 %v1347, %v1428
      %v1445 = vadd.f32 %v1348, %v1429
      %v1446 = vadd.f32 %v1349, %v1430
      %v1447 = vadd.f32 %v1350, %v1431
      %v1448 = vadd.f32 %v1351, %v1432
      %v1449 = vadd.f32 %v1352, %v1433
      %v1450 = vadd.f32 %v1353, %v1434
      %v1451 = vadd.f32 %v1354, %v1435
      %v1452 = vadd.f32 %v1355, %v1436
      %v1453 = vadd.f32 %v1356, %v1437
      %v1454 = vadd.f32 %v1357, %v1438
      %v1455 = vadd.f32 %v1358, %v1439
      %v1456 = vadd.f32 %v1359, %v1440
      %v1457 = vadd.f32 %v1360, %v1441
      %v1458 = vlaneseq
      %v1459 = vshrl.u32 %v1458, 7
      %v1460 = vsub.s32 5, %v1459
      %v1461 = vrot.slane %v308, %v1460
      %v1462 = vmul.f32 %v1411, %v1461
      %v1463 = vmul.f32 %v1399, %v1461
      %v1464 = vmul.f32 %v1412, %v1461
      %v1465 = vmul.f32 %v1400, %v1461
      %v1466 = vmul.f32 %v1413, %v1461
      %v1467 = vmul.f32 %v1401, %v1461
      %v1468 = vmul.f32 %v1414, %v1461
      %v1469 = vmul.f32 %v1402, %v1461
      %v1470 = vmul.f32 %v1415, %v1461
      %v1471 = vmul.f32 %v1403, %v1461
      %v1472 = vmul.f32 %v1416, %v1461
      %v1473 = vmul.f32 %v1404, %v1461
      %v1474 = vmul.f32 %v1417, %v1461
      %v1475 = vmul.f32 %v1405, %v1461
      %v1476 = vmul.f32 %v1418, %v1461
      %v1477 = vmul.f32 %v1406, %v1461
      %v1478 = vadd.f32 %v1442, %v1462
      %v1479 = vadd.f32 %v1443, %v1463
      %v1480 = vadd.f32 %v1444, %v1464
      %v1481 = vadd.f32 %v1445, %v1465
      %v1482 = vadd.f32 %v1446, %v1466
      %v1483 = vadd.f32 %v1447, %v1467
      %v1484 = vadd.f32 %v1448, %v1468
      %v1485 = vadd.f32 %v1449, %v1469
      %v1486 = vadd.f32 %v1450, %v1470
      %v1487 = vadd.f32 %v1451, %v1471
      %v1488 = vadd.f32 %v1452, %v1472
      %v1489 = vadd.f32 %v1453, %v1473
      %v1490 = vadd.f32 %v1454, %v1474
      %v1491 = vadd.f32 %v1455, %v1475
      %v1492 = vadd.f32 %v1456, %v1476
      %v1493 = vadd.f32 %v1457, %v1477
      %v1494 = vlaneseq
      %v1495 = vshrl.u32 %v1494, 7
      %v1496 = vsub.s32 6, %v1495
      %v1497 = vrot.slane %v308, %v1496
      %v1498 = vmul.f32 %v1412, %v1497
      %v1499 = vmul.f32 %v1400, %v1497
      %v1500 = vmul.f32 %v1413, %v1497
      %v1501 = vmul.f32 %v1401, %v1497
      %v1502 = vmul.f32 %v1414, %v1497
      %v1503 = vmul.f32 %v1402, %v1497
      %v1504 = vmul.f32 %v1415, %v1497
      %v1505 = vmul.f32 %v1403, %v1497
      %v1506 = vmul.f32 %v1416, %v1497
      %v1507 = vmul.f32 %v1404, %v1497
      %v1508 = vmul.f32 %v1417, %v1497
      %v1509 = vmul.f32 %v1405, %v1497
      %v1510 = vmul.f32 %v1418, %v1497
      %v1511 = vmul.f32 %v1406, %v1497
      %v1512 = vmul.f32 %v1419, %v1497
      %v1513 = vmul.f32 %v1407, %v1497
      %v1514 = vadd.f32 %v1478, %v1498
      %v1515 = vadd.f32 %v1479, %v1499
      %v1516 = vadd.f32 %v1480, %v1500
      %v1517 = vadd.f32 %v1481, %v1501
      %v1518 = vadd.f32 %v1482, %v1502
      %v1519 = vadd.f32 %v1483, %v1503
      %v1520 = vadd.f32 %v1484, %v1504
      %v1521 = vadd.f32 %v1485, %v1505
      %v1522 = vadd.f32 %v1486, %v1506
      %v1523 = vadd.f32 %v1487, %v1507
      %v1524 = vadd.f32 %v1488, %v1508
      %v1525 = vadd.f32 %v1489, %v1509
      %v1526 = vadd.f32 %v1490, %v1510
      %v1527 = vadd.f32 %v1491, %v1511
      %v1528 = vadd.f32 %v1492, %v1512
      %v1529 = vadd.f32 %v1493, %v1513
      %v1530 = vlaneseq
      %v1531 = vshrl.u32 %v1530, 7
      %v1532 = vsub.s32 7, %v1531
      %v1533 = vrot.slane %v308, %v1532
      %v1534 = vmul.f32 %v1413, %v1533
      %v1535 = vmul.f32 %v1401, %v1533
      %v1536 = vmul.f32 %v1414, %v1533
      %v1537 = vmul.f32 %v1402, %v1533
      %v1538 = vmul.f32 %v1415, %v1533
      %v1539 = vmul.f32 %v1403, %v1533
      %v1540 = vmul.f32 %v1416, %v1533
      %v1541 = vmul.f32 %v1404, %v1533
      %v1542 = vmul.f32 %v1417, %v1533
      %v1543 = vmul.f32 %v1405, %v1533
      %v1544 = vmul.f32 %v1418, %v1533
      %v1545 = vmul.f32 %v1406, %v1533
      %v1546 = vmul.f32 %v1419, %v1533
      %v1547 = vmul.f32 %v1407, %v1533
      %v1548 = vmul.f32 %v1420, %v1533
      %v1549 = vmul.f32 %v1408, %v1533
      %v1550 = vadd.f32 %v1514, %v1534
      %v1551 = vadd.f32 %v1515, %v1535
      %v1552 = vadd.f32 %v1516, %v1536
      %v1553 = vadd.f32 %v1517, %v1537
      %v1554 = vadd.f32 %v1518, %v1538
      %v1555 = vadd.f32 %v1519, %v1539
      %v1556 = vadd.f32 %v1520, %v1540
      %v1557 = vadd.f32 %v1521, %v1541
      %v1558 = vadd.f32 %v1522, %v1542
      %v1559 = vadd.f32 %v1523, %v1543
      %v1560 = vadd.f32 %v1524, %v1544
      %v1561 = vadd.f32 %v1525, %v1545
      %v1562 = vadd.f32 %v1526, %v1546
      %v1563 = vadd.f32 %v1527, %v1547
      %v1564 = vadd.f32 %v1528, %v1548
      %v1565 = vadd.f32 %v1529, %v1549
      %v1566 = vlaneseq
      %v1567 = vshrl.u32 %v1566, 7
      %v1568 = vsub.s32 0, %v1567
      %v1569 = vrot.slane %v309, %v1568
      %v1570 = vmul.f32 %v1414, %v1569
      %v1571 = vmul.f32 %v1402, %v1569
      %v1572 = vmul.f32 %v1415, %v1569
      %v1573 = vmul.f32 %v1403, %v1569
      %v1574 = vmul.f32 %v1416, %v1569
      %v1575 = vmul.f32 %v1404, %v1569
      %v1576 = vmul.f32 %v1417, %v1569
      %v1577 = vmul.f32 %v1405, %v1569
      %v1578 = vmul.f32 %v1418, %v1569
      %v1579 = vmul.f32 %v1406, %v1569
      %v1580 = vmul.f32 %v1419, %v1569
      %v1581 = vmul.f32 %v1407, %v1569
      %v1582 = vmul.f32 %v1420, %v1569
      %v1583 = vmul.f32 %v1408, %v1569
      %v1584 = vmul.f32 %v1421, %v1569
      %v1585 = vmul.f32 %v1409, %v1569
      %v1586 = vadd.f32 %v1550, %v1570
      %v1587 = vadd.f32 %v1551, %v1571
      %v1588 = vadd.f32 %v1552, %v1572
      %v1589 = vadd.f32 %v1553, %v1573
      %v1590 = vadd.f32 %v1554, %v1574
      %v1591 = vadd.f32 %v1555, %v1575
      %v1592 = vadd.f32 %v1556, %v1576
      %v1593 = vadd.f32 %v1557, %v1577
      %v1594 = vadd.f32 %v1558, %v1578
      %v1595 = vadd.f32 %v1559, %v1579
      %v1596 = vadd.f32 %v1560, %v1580
      %v1597 = vadd.f32 %v1561, %v1581
      %v1598 = vadd.f32 %v1562, %v1582
      %v1599 = vadd.f32 %v1563, %v1583
      %v1600 = vadd.f32 %v1564, %v1584
      %v1601 = vadd.f32 %v1565, %v1585
      %v1603 = vlaneseq
      %v1604 = vshrl.u32 %v1603, 7
      %v1605 = vsub.s32 0, %v1604
      %v1606 = vrot.slane %v310, %v1605
      %v1608 = vadd.f32 %v1586, %v1606
      %v1609 = vadd.f32 %v1587, %v1606
      %v1610 = vadd.f32 %v1588, %v1606
      %v1611 = vadd.f32 %v1589, %v1606
      %v1612 = vadd.f32 %v1590, %v1606
      %v1613 = vadd.f32 %v1591, %v1606
      %v1614 = vadd.f32 %v1592, %v1606
      %v1615 = vadd.f32 %v1593, %v1606
      %v1616 = vadd.f32 %v1594, %v1606
      %v1617 = vadd.f32 %v1595, %v1606
      %v1618 = vadd.f32 %v1596, %v1606
      %v1619 = vadd.f32 %v1597, %v1606
      %v1620 = vadd.f32 %v1598, %v1606
      %v1621 = vadd.f32 %v1599, %v1606
      %v1622 = vadd.f32 %v1600, %v1606
      %v1623 = vadd.f32 %v1601, %v1606
      %v1624 = vmax.f32 %v1608, 0.0
      %v1625 = vmax.f32 %v1609, 0.0
      %v1626 = vmax.f32 %v1610, 0.0
      %v1627 = vmax.f32 %v1611, 0.0
      %v1628 = vmax.f32 %v1612, 0.0
      %v1629 = vmax.f32 %v1613, 0.0
      %v1630 = vmax.f32 %v1614, 0.0
      %v1631 = vmax.f32 %v1615, 0.0
      %v1632 = vmax.f32 %v1616, 0.0
      %v1633 = vmax.f32 %v1617, 0.0
      %v1634 = vmax.f32 %v1618, 0.0
      %v1635 = vmax.f32 %v1619, 0.0
      %v1636 = vmax.f32 %v1620, 0.0
      %v1637 = vmax.f32 %v1621, 0.0
      %v1638 = vmax.f32 %v1622, 0.0
      %v1639 = vmax.f32 %v1623, 0.0
      %1640 = vst [vmem:[#allocation3] sm:$0xff] %v1624
      %1641 = vst [vmem:[#allocation3 + $0x8] sm:$0xff] %v1625
      %1642 = vst [vmem:[#allocation3 + $0x10] sm:$0xff] %v1626
      %1643 = vst [vmem:[#allocation3 + $0x18] sm:$0xff] %v1627
      %1644 = vst [vmem:[#allocation3 + $0x20] sm:$0xff] %v1628
      %1645 = vst [vmem:[#allocation3 + $0x28] sm:$0xff] %v1629
      %1646 = vst [vmem:[#allocation3 + $0x30] sm:$0xff] %v1630
      %1647 = vst [vmem:[#allocation3 + $0x38] sm:$0xff] %v1631
      %1648 = vst [vmem:[#allocation3 + $0x40] sm:$0xff] %v1632
      %1649 = vst [vmem:[#allocation3 + $0x48] sm:$0xff] %v1633
      %1650 = vst [vmem:[#allocation3 + $0x50] sm:$0xff] %v1634
      %1651 = vst [vmem:[#allocation3 + $0x58] sm:$0xff] %v1635
      %1652 = vst [vmem:[#allocation3 + $0x60] sm:$0xff] %v1636
      %1653 = vst [vmem:[#allocation3 + $0x68] sm:$0xff] %v1637
      %1654 = vst [vmem:[#allocation3 + $0x70] sm:$0xff] %v1638
      %1655 = vst [vmem:[#allocation3 + $0x78] sm:$0xff] %v1639
      %s1656 = scalar_lea.vmem [#allocation2], 192
      %v1657 = vld [vmem:[%s1656] sm:$0xff]
      %v1658 = vld [vmem:[%s1656 + $0x8] sm:$0xff]
      %v1659 = vld [vmem:[%s1656 + $0x10] sm:$0xff]
      %v1660 = vld [vmem:[%s1656 + $0x18] sm:$0xff]
      %v1661 = vld [vmem:[%s1656 + $0x20] sm:$0xff]
      %v1662 = vld [vmem:[%s1656 + $0x28] sm:$0xff]
      %v1663 = vld [vmem:[%s1656 + $0x30] sm:$0xff]
      %v1664 = vld [vmem:[%s1656 + $0x38] sm:$0xff]
      %v1665 = vld [vmem:[%s1656 + $0x40] sm:$0xff]
      %v1666 = vld [vmem:[%s1656 + $0x48] sm:$0xff]
      %v1667 = vld [vmem:[%s1656 + $0x50] sm:$0xff]
      %v1668 = vld [vmem:[%s1656 + $0x58] sm:$0xff]
      %v1669 = vld [vmem:[%s1656 + $0x60] sm:$0xff]
      %v1670 = vld [vmem:[%s1656 + $0x68] sm:$0xff]
      %v1671 = vld [vmem:[%s1656 + $0x70] sm:$0xff]
      %v1672 = vld [vmem:[%s1656 + $0x78] sm:$0xff]
      %v1673 = vld [vmem:[%s1656 + $0x80] sm:$0xff]
      %v1674 = vld [vmem:[%s1656 + $0x88] sm:$0xff]
      %v1675 = vld [vmem:[%s1656 + $0x90] sm:$0xff]
      %v1676 = vld [vmem:[%s1656 + $0x98] sm:$0xff]
      %v1677 = vld [vmem:[%s1656 + $0xa0] sm:$0xff]
      %v1678 = vld [vmem:[%s1656 + $0xa8] sm:$0xff]
      %v1679 = vld [vmem:[%s1656 + $0xb0] sm:$0xff]
      %v1680 = vld [vmem:[%s1656 + $0xb8] sm:$0xff]
      %v1681 = vld [vmem:[%s1656 + $0xc0] sm:$0xff]
      %v1682 = vld [vmem:[%s1656 + $0xc8] sm:$0xff]
      %v1683 = vld [vmem:[%s1656 + $0xd0] sm:$0xff]
      %v1684 = vld [vmem:[%s1656 + $0xd8] sm:$0xff]
      %v1685 = vld [vmem:[%s1656 + $0xe0] sm:$0xff]
      %v1686 = vld [vmem:[%s1656 + $0xe8] sm:$0xff]
      %v1687 = vld [vmem:[%s1656 + $0xf0] sm:$0xff]
      %v1688 = vld [vmem:[%s1656 + $0xf8] sm:$0xff]
      %v1689 = vld [vmem:[%s1656 + $0x100] sm:$0xff]
      %v1690 = vld [vmem:[%s1656 + $0x108] sm:$0xff]
      %v1691 = vld [vmem:[%s1656 + $0x110] sm:$0xff]
      %v1692 = vld [vmem:[%s1656 + $0x118] sm:$0xff]
      %v1693 = vrot.slane %v1657, 6
      %v1694 = vrot.slane %v1660, 6
      %v1695 = vrot.slane %v1663, 6
      %v1696 = vrot.slane %v1666, 6
      %v1697 = vrot.slane %v1669, 6
      %v1698 = vrot.slane %v1672, 6
      %v1699 = vrot.slane %v1675, 6
      %v1700 = vrot.slane %v1678, 6
      %v1701 = vrot.slane %v1681, 6
      %v1702 = vrot.slane %v1684, 6
      %v1703 = vrot.slane %v1687, 6
      %v1704 = vrot.slane %v1690, 6
      %v1705 = vrot.slane %v1658, 6
      %v1706 = vrot.slane %v1661, 6
      %v1707 = vrot.slane %v1664, 6
      %v1708 = vrot.slane %v1667, 6
      %v1709 = vrot.slane %v1670, 6
      %v1710 = vrot.slane %v1673, 6
      %v1711 = vrot.slane %v1676, 6
      %v1712 = vrot.slane %v1679, 6
      %v1713 = vrot.slane %v1682, 6
      %v1714 = vrot.slane %v1685, 6
      %v1715 = vrot.slane %v1688, 6
      %v1716 = vrot.slane %v1691, 6
      %v1717 = vrot.slane %v1659, 6
      %v1718 = vrot.slane %v1662, 6
      %v1719 = vrot.slane %v1665, 6
      %v1720 = vrot.slane %v1668, 6
      %v1721 = vrot.slane %v1671, 6
      %v1722 = vrot.slane %v1674, 6
      %v1723 = vrot.slane %v1677, 6
      %v1724 = vrot.slane %v1680, 6
      %v1725 = vrot.slane %v1683, 6
      %v1726 = vrot.slane %v1686, 6
      %v1727 = vrot.slane %v1689, 6
      %v1728 = vrot.slane %v1692, 6
      %v1729 = vsel %vm510, %v1693, %v1705
      %v1730 = vsel %vm510, %v1694, %v1706
      %v1731 = vsel %vm510, %v1695, %v1707
      %v1732 = vsel %vm510, %v1696, %v1708
      %v1733 = vsel %vm510, %v1697, %v1709
      %v1734 = vsel %vm510, %v1698, %v1710
      %v1735 = vsel %vm510, %v1699, %v1711
      %v1736 = vsel %vm510, %v1700, %v1712
      %v1737 = vsel %vm510, %v1701, %v1713
      %v1738 = vsel %vm510, %v1702, %v1714
      %v1739 = vsel %vm510, %v1703, %v1715
      %v1740 = vsel %vm510, %v1704, %v1716
      %v1741 = vsel %vm510, %v1717, %v1693
      %v1742 = vsel %vm510, %v1718, %v1694
      %v1743 = vsel %vm510, %v1719, %v1695
      %v1744 = vsel %vm510, %v1720, %v1696
      %v1745 = vsel %vm510, %v1721, %v1697
      %v1746 = vsel %vm510, %v1722, %v1698
      %v1747 = vsel %vm510, %v1723, %v1699
      %v1748 = vsel %vm510, %v1724, %v1700
      %v1749 = vsel %vm510, %v1725, %v1701
      %v1750 = vsel %vm510, %v1726, %v1702
      %v1751 = vsel %vm510, %v1727, %v1703
      %v1752 = vsel %vm510, %v1728, %v1704
      %v1753 = vmul.f32 %v1741, %v538
      %v1754 = vmul.f32 %v1729, %v538
      %v1755 = vmul.f32 %v1742, %v538
      %v1756 = vmul.f32 %v1730, %v538
      %v1757 = vmul.f32 %v1743, %v538
      %v1758 = vmul.f32 %v1731, %v538
      %v1759 = vmul.f32 %v1744, %v538
      %v1760 = vmul.f32 %v1732, %v538
      %v1761 = vmul.f32 %v1745, %v538
      %v1762 = vmul.f32 %v1733, %v538
      %v1763 = vmul.f32 %v1746, %v538
      %v1764 = vmul.f32 %v1734, %v538
      %v1765 = vmul.f32 %v1747, %v538
      %v1766 = vmul.f32 %v1735, %v538
      %v1767 = vmul.f32 %v1748, %v538
      %v1768 = vmul.f32 %v1736, %v538
      %v1769 = vmul.f32 %v1742, %v558
      %v1770 = vmul.f32 %v1730, %v558
      %v1771 = vmul.f32 %v1743, %v558
      %v1772 = vmul.f32 %v1731, %v558
      %v1773 = vmul.f32 %v1744, %v558
      %v1774 = vmul.f32 %v1732, %v558
      %v1775 = vmul.f32 %v1745, %v558
      %v1776 = vmul.f32 %v1733, %v558
      %v1777 = vmul.f32 %v1746, %v558
      %v1778 = vmul.f32 %v1734, %v558
      %v1779 = vmul.f32 %v1747, %v558
      %v1780 = vmul.f32 %v1735, %v558
      %v1781 = vmul.f32 %v1748, %v558
      %v1782 = vmul.f32 %v1736, %v558
      %v1783 = vmul.f32 %v1749, %v558
      %v1784 = vmul.f32 %v1737, %v558
      %v1785 = vadd.f32 %v1753, %v1769
      %v1786 = vadd.f32 %v1754, %v1770
      %v1787 = vadd.f32 %v1755, %v1771
      %v1788 = vadd.f32 %v1756, %v1772
      %v1789 = vadd.f32 %v1757, %v1773
      %v1790 = vadd.f32 %v1758, %v1774
      %v1791 = vadd.f32 %v1759, %v1775
      %v1792 = vadd.f32 %v1760, %v1776
      %v1793 = vadd.f32 %v1761, %v1777
      %v1794 = vadd.f32 %v1762, %v1778
      %v1795 = vadd.f32 %v1763, %v1779
      %v1796 = vadd.f32 %v1764, %v1780
      %v1797 = vadd.f32 %v1765, %v1781
      %v1798 = vadd.f32 %v1766, %v1782
      %v1799 = vadd.f32 %v1767, %v1783
      %v1800 = vadd.f32 %v1768, %v1784
      %v1801 = vmul.f32 %v1743, %v594
      %v1802 = vmul.f32 %v1731, %v594
      %v1803 = vmul.f32 %v1744, %v594
      %v1804 = vmul.f32 %v1732, %v594
      %v1805 = vmul.f32 %v1745, %v594
      %v1806 = vmul.f32 %v1733, %v594
      %v1807 = vmul.f32 %v1746, %v594
      %v1808 = vmul.f32 %v1734, %v594
      %v1809 = vmul.f32 %v1747, %v594
      %v1810 = vmul.f32 %v1735, %v594
      %v1811 = vmul.f32 %v1748, %v594
      %v1812 = vmul.f32 %v1736, %v594
      %v1813 = vmul.f32 %v1749, %v594
      %v1814 = vmul.f32 %v1737, %v594
      %v1815 = vmul.f32 %v1750, %v594
      %v1816 = vmul.f32 %v1738, %v594
      %v1817 = vadd.f32 %v1785, %v1801
      %v1818 = vadd.f32 %v1786, %v1802
      %v1819 = vadd.f32 %v1787, %v1803
      %v1820 = vadd.f32 %v1788, %v1804
      %v1821 = vadd.f32 %v1789, %v1805
      %v1822 = vadd.f32 %v1790, %v1806
      %v1823 = vadd.f32 %v1791, %v1807
      %v1824 = vadd.f32 %v1792, %v1808
      %v1825 = vadd.f32 %v1793, %v1809
      %v1826 = vadd.f32 %v1794, %v1810
      %v1827 = vadd.f32 %v1795, %v1811
      %v1828 = vadd.f32 %v1796, %v1812
      %v1829 = vadd.f32 %v1797, %v1813
      %v1830 = vadd.f32 %v1798, %v1814
      %v1831 = vadd.f32 %v1799, %v1815
      %v1832 = vadd.f32 %v1800, %v1816
      %v1833 = vmul.f32 %v1744, %v630
      %v1834 = vmul.f32 %v1732, %v630
      %v1835 = vmul.f32 %v1745, %v630
      %v1836 = vmul.f32 %v1733, %v630
      %v1837 = vmul.f32 %v1746, %v630
      %v1838 = vmul.f32 %v1734, %v630
      %v1839 = vmul.f32 %v1747, %v630
      %v1840 = vmul.f32 %v1735, %v630
      %v1841 = vmul.f32 %v1748, %v630
      %v1842 = vmul.f32 %v1736, %v630
      %v1843 = vmul.f32 %v1749, %v630
      %v1844 = vmul.f32 %v1737, %v630
      %v1845 = vmul.f32 %v1750, %v630
      %v1846 = vmul.f32 %v1738, %v630
      %v1847 = vmul.f32 %v1751, %v630
      %v1848 = vmul.f32 %v1739, %v630
      %v1849 = vadd.f32 %v1817, %v1833
      %v1850 = vadd.f32 %v1818, %v1834
      %v1851 = vadd.f32 %v1819, %v1835
      %v1852 = vadd.f32 %v1820, %v1836
      %v1853 = vadd.f32 %v1821, %v1837
      %v1854 = vadd.f32 %v1822, %v1838
      %v1855 = vadd.f32 %v1823, %v1839
      %v1856 = vadd.f32 %v1824, %v1840
      %v1857 = vadd.f32 %v1825, %v1841
      %v1858 = vadd.f32 %v1826, %v1842
      %v1859 = vadd.f32 %v1827, %v1843
      %v1860 = vadd.f32 %v1828, %v1844
      %v1861 = vadd.f32 %v1829, %v1845
      %v1862 = vadd.f32 %v1830, %v1846
      %v1863 = vadd.f32 %v1831, %v1847
      %v1864 = vadd.f32 %v1832, %v1848
      %v1865 = vmul.f32 %v1745, %v666
      %v1866 = vmul.f32 %v1733, %v666
      %v1867 = vmul.f32 %v1746, %v666
      %v1868 = vmul.f32 %v1734, %v666
      %v1869 = vmul.f32 %v1747, %v666
      %v1870 = vmul.f32 %v1735, %v666
      %v1871 = vmul.f32 %v1748, %v666
      %v1872 = vmul.f32 %v1736, %v666
      %v1873 = vmul.f32 %v1749, %v666
      %v1874 = vmul.f32 %v1737, %v666
      %v1875 = vmul.f32 %v1750, %v666
      %v1876 = vmul.f32 %v1738, %v666
      %v1877 = vmul.f32 %v1751, %v666
      %v1878 = vmul.f32 %v1739, %v666
      %v1879 = vmul.f32 %v1752, %v666
      %v1880 = vmul.f32 %v1740, %v666
      %v1881 = vadd.f32 %v1849, %v1865
      %v1882 = vadd.f32 %v1850, %v1866
      %v1883 = vadd.f32 %v1851, %v1867
      %v1884 = vadd.f32 %v1852, %v1868
      %v1885 = vadd.f32 %v1853, %v1869
      %v1886 = vadd.f32 %v1854, %v1870
      %v1887 = vadd.f32 %v1855, %v1871
      %v1888 = vadd.f32 %v1856, %v1872
      %v1889 = vadd.f32 %v1857, %v1873
      %v1890 = vadd.f32 %v1858, %v1874
      %v1891 = vadd.f32 %v1859, %v1875
      %v1892 = vadd.f32 %v1860, %v1876
      %v1893 = vadd.f32 %v1861, %v1877
      %v1894 = vadd.f32 %v1862, %v1878
      %v1895 = vadd.f32 %v1863, %v1879
      %v1896 = vadd.f32 %v1864, %v1880
      %v1897 = vrot.slane %v1657, 7
      %v1898 = vrot.slane %v1660, 7
      %v1899 = vrot.slane %v1663, 7
      %v1900 = vrot.slane %v1666, 7
      %v1901 = vrot.slane %v1669, 7
      %v1902 = vrot.slane %v1672, 7
      %v1903 = vrot.slane %v1675, 7
      %v1904 = vrot.slane %v1678, 7
      %v1905 = vrot.slane %v1681, 7
      %v1906 = vrot.slane %v1684, 7
      %v1907 = vrot.slane %v1687, 7
      %v1908 = vrot.slane %v1690, 7
      %v1909 = vrot.slane %v1658, 7
      %v1910 = vrot.slane %v1661, 7
      %v1911 = vrot.slane %v1664, 7
      %v1912 = vrot.slane %v1667, 7
      %v1913 = vrot.slane %v1670, 7
      %v1914 = vrot.slane %v1673, 7
      %v1915 = vrot.slane %v1676, 7
      %v1916 = vrot.slane %v1679, 7
      %v1917 = vrot.slane %v1682, 7
      %v1918 = vrot.slane %v1685, 7
      %v1919 = vrot.slane %v1688, 7
      %v1920 = vrot.slane %v1691, 7
      %v1921 = vrot.slane %v1659, 7
      %v1922 = vrot.slane %v1662, 7
      %v1923 = vrot.slane %v1665, 7
      %v1924 = vrot.slane %v1668, 7
      %v1925 = vrot.slane %v1671, 7
      %v1926 = vrot.slane %v1674, 7
      %v1927 = vrot.slane %v1677, 7
      %v1928 = vrot.slane %v1680, 7
      %v1929 = vrot.slane %v1683, 7
      %v1930 = vrot.slane %v1686, 7
      %v1931 = vrot.slane %v1689, 7
      %v1932 = vrot.slane %v1692, 7
      %v1933 = vsel %vm735, %v1897, %v1909
      %v1934 = vsel %vm735, %v1898, %v1910
      %v1935 = vsel %vm735, %v1899, %v1911
      %v1936 = vsel %vm735, %v1900, %v1912
      %v1937 = vsel %vm735, %v1901, %v1913
      %v1938 = vsel %vm735, %v1902, %v1914
      %v1939 = vsel %vm735, %v1903, %v1915
      %v1940 = vsel %vm735, %v1904, %v1916
      %v1941 = vsel %vm735, %v1905, %v1917
      %v1942 = vsel %vm735, %v1906, %v1918
      %v1943 = vsel %vm735, %v1907, %v1919
      %v1944 = vsel %vm735, %v1908, %v1920
      %v1945 = vsel %vm735, %v1921, %v1897
      %v1946 = vsel %vm735, %v1922, %v1898
      %v1947 = vsel %vm735, %v1923, %v1899
      %v1948 = vsel %vm735, %v1924, %v1900
      %v1949 = vsel %vm735, %v1925, %v1901
      %v1950 = vsel %vm735, %v1926, %v1902
      %v1951 = vsel %vm735, %v1927, %v1903
      %v1952 = vsel %vm735, %v1928, %v1904
      %v1953 = vsel %vm735, %v1929, %v1905
      %v1954 = vsel %vm735, %v1930, %v1906
      %v1955 = vsel %vm735, %v1931, %v1907
      %v1956 = vsel %vm735, %v1932, %v1908
      %v1957 = vmul.f32 %v1945, %v763
      %v1958 = vmul.f32 %v1933, %v763
      %v1959 = vmul.f32 %v1946, %v763
      %v1960 = vmul.f32 %v1934, %v763
      %v1961 = vmul.f32 %v1947, %v763
      %v1962 = vmul.f32 %v1935, %v763
      %v1963 = vmul.f32 %v1948, %v763
      %v1964 = vmul.f32 %v1936, %v763
      %v1965 = vmul.f32 %v1949, %v763
      %v1966 = vmul.f32 %v1937, %v763
      %v1967 = vmul.f32 %v1950, %v763
      %v1968 = vmul.f32 %v1938, %v763
      %v1969 = vmul.f32 %v1951, %v763
      %v1970 = vmul.f32 %v1939, %v763
      %v1971 = vmul.f32 %v1952, %v763
      %v1972 = vmul.f32 %v1940, %v763
      %v1973 = vadd.f32 %v1881, %v1957
      %v1974 = vadd.f32 %v1882, %v1958
      %v1975 = vadd.f32 %v1883, %v1959
      %v1976 = vadd.f32 %v1884, %v1960
      %v1977 = vadd.f32 %v1885, %v1961
      %v1978 = vadd.f32 %v1886, %v1962
      %v1979 = vadd.f32 %v1887, %v1963
      %v1980 = vadd.f32 %v1888, %v1964
      %v1981 = vadd.f32 %v1889, %v1965
      %v1982 = vadd.f32 %v1890, %v1966
      %v1983 = vadd.f32 %v1891, %v1967
      %v1984 = vadd.f32 %v1892, %v1968
      %v1985 = vadd.f32 %v1893, %v1969
      %v1986 = vadd.f32 %v1894, %v1970
      %v1987 = vadd.f32 %v1895, %v1971
      %v1988 = vadd.f32 %v1896, %v1972
      %v1989 = vmul.f32 %v1946, %v799
      %v1990 = vmul.f32 %v1934, %v799
      %v1991 = vmul.f32 %v1947, %v799
      %v1992 = vmul.f32 %v1935, %v799
      %v1993 = vmul.f32 %v1948, %v799
      %v1994 = vmul.f32 %v1936, %v799
      %v1995 = vmul.f32 %v1949, %v799
      %v1996 = vmul.f32 %v1937, %v799
      %v1997 = vmul.f32 %v1950, %v799
      %v1998 = vmul.f32 %v1938, %v799
      %v1999 = vmul.f32 %v1951, %v799
      %v2000 = vmul.f32 %v1939, %v799
      %v2001 = vmul.f32 %v1952, %v799
      %v2002 = vmul.f32 %v1940, %v799
      %v2003 = vmul.f32 %v1953, %v799
      %v2004 = vmul.f32 %v1941, %v799
      %v2005 = vadd.f32 %v1973, %v1989
      %v2006 = vadd.f32 %v1974, %v1990
      %v2007 = vadd.f32 %v1975, %v1991
      %v2008 = vadd.f32 %v1976, %v1992
      %v2009 = vadd.f32 %v1977, %v1993
      %v2010 = vadd.f32 %v1978, %v1994
      %v2011 = vadd.f32 %v1979, %v1995
      %v2012 = vadd.f32 %v1980, %v1996
      %v2013 = vadd.f32 %v1981, %v1997
      %v2014 = vadd.f32 %v1982, %v1998
      %v2015 = vadd.f32 %v1983, %v1999
      %v2016 = vadd.f32 %v1984, %v2000
      %v2017 = vadd.f32 %v1985, %v2001
      %v2018 = vadd.f32 %v1986, %v2002
      %v2019 = vadd.f32 %v1987, %v2003
      %v2020 = vadd.f32 %v1988, %v2004
      %v2021 = vmul.f32 %v1947, %v835
      %v2022 = vmul.f32 %v1935, %v835
      %v2023 = vmul.f32 %v1948, %v835
      %v2024 = vmul.f32 %v1936, %v835
      %v2025 = vmul.f32 %v1949, %v835
      %v2026 = vmul.f32 %v1937, %v835
      %v2027 = vmul.f32 %v1950, %v835
      %v2028 = vmul.f32 %v1938, %v835
      %v2029 = vmul.f32 %v1951, %v835
      %v2030 = vmul.f32 %v1939, %v835
      %v2031 = vmul.f32 %v1952, %v835
      %v2032 = vmul.f32 %v1940, %v835
      %v2033 = vmul.f32 %v1953, %v835
      %v2034 = vmul.f32 %v1941, %v835
      %v2035 = vmul.f32 %v1954, %v835
      %v2036 = vmul.f32 %v1942, %v835
      %v2037 = vadd.f32 %v2005, %v2021
      %v2038 = vadd.f32 %v2006, %v2022
      %v2039 = vadd.f32 %v2007, %v2023
      %v2040 = vadd.f32 %v2008, %v2024
      %v2041 = vadd.f32 %v2009, %v2025
      %v2042 = vadd.f32 %v2010, %v2026
      %v2043 = vadd.f32 %v2011, %v2027
      %v2044 = vadd.f32 %v2012, %v2028
      %v2045 = vadd.f32 %v2013, %v2029
      %v2046 = vadd.f32 %v2014, %v2030
      %v2047 = vadd.f32 %v2015, %v2031
      %v2048 = vadd.f32 %v2016, %v2032
      %v2049 = vadd.f32 %v2017, %v2033
      %v2050 = vadd.f32 %v2018, %v2034
      %v2051 = vadd.f32 %v2019, %v2035
      %v2052 = vadd.f32 %v2020, %v2036
      %v2053 = vmul.f32 %v1948, %v871
      %v2054 = vmul.f32 %v1936, %v871
      %v2055 = vmul.f32 %v1949, %v871
      %v2056 = vmul.f32 %v1937, %v871
      %v2057 = vmul.f32 %v1950, %v871
      %v2058 = vmul.f32 %v1938, %v871
      %v2059 = vmul.f32 %v1951, %v871
      %v2060 = vmul.f32 %v1939, %v871
      %v2061 = vmul.f32 %v1952, %v871
      %v2062 = vmul.f32 %v1940, %v871
      %v2063 = vmul.f32 %v1953, %v871
      %v2064 = vmul.f32 %v1941, %v871
      %v2065 = vmul.f32 %v1954, %v871
      %v2066 = vmul.f32 %v1942, %v871
      %v2067 = vmul.f32 %v1955, %v871
      %v2068 = vmul.f32 %v1943, %v871
      %v2069 = vadd.f32 %v2037, %v2053
      %v2070 = vadd.f32 %v2038, %v2054
      %v2071 = vadd.f32 %v2039, %v2055
      %v2072 = vadd.f32 %v2040, %v2056
      %v2073 = vadd.f32 %v2041, %v2057
      %v2074 = vadd.f32 %v2042, %v2058
      %v2075 = vadd.f32 %v2043, %v2059
      %v2076 = vadd.f32 %v2044, %v2060
      %v2077 = vadd.f32 %v2045, %v2061
      %v2078 = vadd.f32 %v2046, %v2062
      %v2079 = vadd.f32 %v2047, %v2063
      %v2080 = vadd.f32 %v2048, %v2064
      %v2081 = vadd.f32 %v2049, %v2065
      %v2082 = vadd.f32 %v2050, %v2066
      %v2083 = vadd.f32 %v2051, %v2067
      %v2084 = vadd.f32 %v2052, %v2068
      %v2085 = vmul.f32 %v1949, %v907
      %v2086 = vmul.f32 %v1937, %v907
      %v2087 = vmul.f32 %v1950, %v907
      %v2088 = vmul.f32 %v1938, %v907
      %v2089 = vmul.f32 %v1951, %v907
      %v2090 = vmul.f32 %v1939, %v907
      %v2091 = vmul.f32 %v1952, %v907
      %v2092 = vmul.f32 %v1940, %v907
      %v2093 = vmul.f32 %v1953, %v907
      %v2094 = vmul.f32 %v1941, %v907
      %v2095 = vmul.f32 %v1954, %v907
      %v2096 = vmul.f32 %v1942, %v907
      %v2097 = vmul.f32 %v1955, %v907
      %v2098 = vmul.f32 %v1943, %v907
      %v2099 = vmul.f32 %v1956, %v907
      %v2100 = vmul.f32 %v1944, %v907
      %v2101 = vadd.f32 %v2069, %v2085
      %v2102 = vadd.f32 %v2070, %v2086
      %v2103 = vadd.f32 %v2071, %v2087
      %v2104 = vadd.f32 %v2072, %v2088
      %v2105 = vadd.f32 %v2073, %v2089
      %v2106 = vadd.f32 %v2074, %v2090
      %v2107 = vadd.f32 %v2075, %v2091
      %v2108 = vadd.f32 %v2076, %v2092
      %v2109 = vadd.f32 %v2077, %v2093
      %v2110 = vadd.f32 %v2078, %v2094
      %v2111 = vadd.f32 %v2079, %v2095
      %v2112 = vadd.f32 %v2080, %v2096
      %v2113 = vadd.f32 %v2081, %v2097
      %v2114 = vadd.f32 %v2082, %v2098
      %v2115 = vadd.f32 %v2083, %v2099
      %v2116 = vadd.f32 %v2084, %v2100
      %v2117 = vmul.f32 %v1657, %v943
      %v2118 = vmul.f32 %v1658, %v943
      %v2119 = vmul.f32 %v1660, %v943
      %v2120 = vmul.f32 %v1661, %v943
      %v2121 = vmul.f32 %v1663, %v943
      %v2122 = vmul.f32 %v1664, %v943
      %v2123 = vmul.f32 %v1666, %v943
      %v2124 = vmul.f32 %v1667, %v943
      %v2125 = vmul.f32 %v1669, %v943
      %v2126 = vmul.f32 %v1670, %v943
      %v2127 = vmul.f32 %v1672, %v943
      %v2128 = vmul.f32 %v1673, %v943
      %v2129 = vmul.f32 %v1675, %v943
      %v2130 = vmul.f32 %v1676, %v943
      %v2131 = vmul.f32 %v1678, %v943
      %v2132 = vmul.f32 %v1679, %v943
      %v2133 = vadd.f32 %v2101, %v2117
      %v2134 = vadd.f32 %v2102, %v2118
      %v2135 = vadd.f32 %v2103, %v2119
      %v2136 = vadd.f32 %v2104, %v2120
      %v2137 = vadd.f32 %v2105, %v2121
      %v2138 = vadd.f32 %v2106, %v2122
      %v2139 = vadd.f32 %v2107, %v2123
      %v2140 = vadd.f32 %v2108, %v2124
      %v2141 = vadd.f32 %v2109, %v2125
      %v2142 = vadd.f32 %v2110, %v2126
      %v2143 = vadd.f32 %v2111, %v2127
      %v2144 = vadd.f32 %v2112, %v2128
      %v2145 = vadd.f32 %v2113, %v2129
      %v2146 = vadd.f32 %v2114, %v2130
      %v2147 = vadd.f32 %v2115, %v2131
      %v2148 = vadd.f32 %v2116, %v2132
      %v2149 = vmul.f32 %v1660, %v979
      %v2150 = vmul.f32 %v1661, %v979
      %v2151 = vmul.f32 %v1663, %v979
      %v2152 = vmul.f32 %v1664, %v979
      %v2153 = vmul.f32 %v1666, %v979
      %v2154 = vmul.f32 %v1667, %v979
      %v2155 = vmul.f32 %v1669, %v979
      %v2156 = vmul.f32 %v1670, %v979
      %v2157 = vmul.f32 %v1672, %v979
      %v2158 = vmul.f32 %v1673, %v979
      %v2159 = vmul.f32 %v1675, %v979
      %v2160 = vmul.f32 %v1676, %v979
      %v2161 = vmul.f32 %v1678, %v979
      %v2162 = vmul.f32 %v1679, %v979
      %v2163 = vmul.f32 %v1681, %v979
      %v2164 = vmul.f32 %v1682, %v979
      %v2165 = vadd.f32 %v2133, %v2149
      %v2166 = vadd.f32 %v2134, %v2150
      %v2167 = vadd.f32 %v2135, %v2151
      %v2168 = vadd.f32 %v2136, %v2152
      %v2169 = vadd.f32 %v2137, %v2153
      %v2170 = vadd.f32 %v2138, %v2154
      %v2171 = vadd.f32 %v2139, %v2155
      %v2172 = vadd.f32 %v2140, %v2156
      %v2173 = vadd.f32 %v2141, %v2157
      %v2174 = vadd.f32 %v2142, %v2158
      %v2175 = vadd.f32 %v2143, %v2159
      %v2176 = vadd.f32 %v2144, %v2160
      %v2177 = vadd.f32 %v2145, %v2161
      %v2178 = vadd.f32 %v2146, %v2162
      %v2179 = vadd.f32 %v2147, %v2163
      %v2180 = vadd.f32 %v2148, %v2164
      %v2181 = vmul.f32 %v1663, %v1015
      %v2182 = vmul.f32 %v1664, %v1015
      %v2183 = vmul.f32 %v1666, %v1015
      %v2184 = vmul.f32 %v1667, %v1015
      %v2185 = vmul.f32 %v1669, %v1015
      %v2186 = vmul.f32 %v1670, %v1015
      %v2187 = vmul.f32 %v1672, %v1015
      %v2188 = vmul.f32 %v1673, %v1015
      %v2189 = vmul.f32 %v1675, %v1015
      %v2190 = vmul.f32 %v1676, %v1015
      %v2191 = vmul.f32 %v1678, %v1015
      %v2192 = vmul.f32 %v1679, %v1015
      %v2193 = vmul.f32 %v1681, %v1015
      %v2194 = vmul.f32 %v1682, %v1015
      %v2195 = vmul.f32 %v1684, %v1015
      %v2196 = vmul.f32 %v1685, %v1015
      %v2197 = vadd.f32 %v2165, %v2181
      %v2198 = vadd.f32 %v2166, %v2182
      %v2199 = vadd.f32 %v2167, %v2183
      %v2200 = vadd.f32 %v2168, %v2184
      %v2201 = vadd.f32 %v2169, %v2185
      %v2202 = vadd.f32 %v2170, %v2186
      %v2203 = vadd.f32 %v2171, %v2187
      %v2204 = vadd.f32 %v2172, %v2188
      %v2205 = vadd.f32 %v2173, %v2189
      %v2206 = vadd.f32 %v2174, %v2190
      %v2207 = vadd.f32 %v2175, %v2191
      %v2208 = vadd.f32 %v2176, %v2192
      %v2209 = vadd.f32 %v2177, %v2193
      %v2210 = vadd.f32 %v2178, %v2194
      %v2211 = vadd.f32 %v2179, %v2195
      %v2212 = vadd.f32 %v2180, %v2196
      %v2213 = vmul.f32 %v1666, %v1051
      %v2214 = vmul.f32 %v1667, %v1051
      %v2215 = vmul.f32 %v1669, %v1051
      %v2216 = vmul.f32 %v1670, %v1051
      %v2217 = vmul.f32 %v1672, %v1051
      %v2218 = vmul.f32 %v1673, %v1051
      %v2219 = vmul.f32 %v1675, %v1051
      %v2220 = vmul.f32 %v1676, %v1051
      %v2221 = vmul.f32 %v1678, %v1051
      %v2222 = vmul.f32 %v1679, %v1051
      %v2223 = vmul.f32 %v1681, %v1051
      %v2224 = vmul.f32 %v1682, %v1051
      %v2225 = vmul.f32 %v1684, %v1051
      %v2226 = vmul.f32 %v1685, %v1051
      %v2227 = vmul.f32 %v1687, %v1051
      %v2228 = vmul.f32 %v1688, %v1051
      %v2229 = vadd.f32 %v2197, %v2213
      %v2230 = vadd.f32 %v2198, %v2214
      %v2231 = vadd.f32 %v2199, %v2215
      %v2232 = vadd.f32 %v2200, %v2216
      %v2233 = vadd.f32 %v2201, %v2217
      %v2234 = vadd.f32 %v2202, %v2218
      %v2235 = vadd.f32 %v2203, %v2219
      %v2236 = vadd.f32 %v2204, %v2220
      %v2237 = vadd.f32 %v2205, %v2221
      %v2238 = vadd.f32 %v2206, %v2222
      %v2239 = vadd.f32 %v2207, %v2223
      %v2240 = vadd.f32 %v2208, %v2224
      %v2241 = vadd.f32 %v2209, %v2225
      %v2242 = vadd.f32 %v2210, %v2226
      %v2243 = vadd.f32 %v2211, %v2227
      %v2244 = vadd.f32 %v2212, %v2228
      %v2245 = vmul.f32 %v1669, %v1087
      %v2246 = vmul.f32 %v1670, %v1087
      %v2247 = vmul.f32 %v1672, %v1087
      %v2248 = vmul.f32 %v1673, %v1087
      %v2249 = vmul.f32 %v1675, %v1087
      %v2250 = vmul.f32 %v1676, %v1087
      %v2251 = vmul.f32 %v1678, %v1087
      %v2252 = vmul.f32 %v1679, %v1087
      %v2253 = vmul.f32 %v1681, %v1087
      %v2254 = vmul.f32 %v1682, %v1087
      %v2255 = vmul.f32 %v1684, %v1087
      %v2256 = vmul.f32 %v1685, %v1087
      %v2257 = vmul.f32 %v1687, %v1087
      %v2258 = vmul.f32 %v1688, %v1087
      %v2259 = vmul.f32 %v1690, %v1087
      %v2260 = vmul.f32 %v1691, %v1087
      %v2261 = vadd.f32 %v2229, %v2245
      %v2262 = vadd.f32 %v2230, %v2246
      %v2263 = vadd.f32 %v2231, %v2247
      %v2264 = vadd.f32 %v2232, %v2248
      %v2265 = vadd.f32 %v2233, %v2249
      %v2266 = vadd.f32 %v2234, %v2250
      %v2267 = vadd.f32 %v2235, %v2251
      %v2268 = vadd.f32 %v2236, %v2252
      %v2269 = vadd.f32 %v2237, %v2253
      %v2270 = vadd.f32 %v2238, %v2254
      %v2271 = vadd.f32 %v2239, %v2255
      %v2272 = vadd.f32 %v2240, %v2256
      %v2273 = vadd.f32 %v2241, %v2257
      %v2274 = vadd.f32 %v2242, %v2258
      %v2275 = vadd.f32 %v2243, %v2259
      %v2276 = vadd.f32 %v2244, %v2260
      %v2277 = vrot.slane %v1657, 1
      %v2278 = vrot.slane %v1660, 1
      %v2279 = vrot.slane %v1663, 1
      %v2280 = vrot.slane %v1666, 1
      %v2281 = vrot.slane %v1669, 1
      %v2282 = vrot.slane %v1672, 1
      %v2283 = vrot.slane %v1675, 1
      %v2284 = vrot.slane %v1678, 1
      %v2285 = vrot.slane %v1681, 1
      %v2286 = vrot.slane %v1684, 1
      %v2287 = vrot.slane %v1687, 1
      %v2288 = vrot.slane %v1690, 1
      %v2289 = vrot.slane %v1658, 1
      %v2290 = vrot.slane %v1661, 1
      %v2291 = vrot.slane %v1664, 1
      %v2292 = vrot.slane %v1667, 1
      %v2293 = vrot.slane %v1670, 1
      %v2294 = vrot.slane %v1673, 1
      %v2295 = vrot.slane %v1676, 1
      %v2296 = vrot.slane %v1679, 1
      %v2297 = vrot.slane %v1682, 1
      %v2298 = vrot.slane %v1685, 1
      %v2299 = vrot.slane %v1688, 1
      %v2300 = vrot.slane %v1691, 1
      %v2301 = vrot.slane %v1659, 1
      %v2302 = vrot.slane %v1662, 1
      %v2303 = vrot.slane %v1665, 1
      %v2304 = vrot.slane %v1668, 1
      %v2305 = vrot.slane %v1671, 1
      %v2306 = vrot.slane %v1674, 1
      %v2307 = vrot.slane %v1677, 1
      %v2308 = vrot.slane %v1680, 1
      %v2309 = vrot.slane %v1683, 1
      %v2310 = vrot.slane %v1686, 1
      %v2311 = vrot.slane %v1689, 1
      %v2312 = vrot.slane %v1692, 1
      %v2313 = vsel %vm1156, %v2289, %v2301
      %v2314 = vsel %vm1156, %v2290, %v2302
      %v2315 = vsel %vm1156, %v2291, %v2303
      %v2316 = vsel %vm1156, %v2292, %v2304
      %v2317 = vsel %vm1156, %v2293, %v2305
      %v2318 = vsel %vm1156, %v2294, %v2306
      %v2319 = vsel %vm1156, %v2295, %v2307
      %v2320 = vsel %vm1156, %v2296, %v2308
      %v2321 = vsel %vm1156, %v2297, %v2309
      %v2322 = vsel %vm1156, %v2298, %v2310
      %v2323 = vsel %vm1156, %v2299, %v2311
      %v2324 = vsel %vm1156, %v2300, %v2312
      %v2325 = vsel %vm1156, %v2277, %v2289
      %v2326 = vsel %vm1156, %v2278, %v2290
      %v2327 = vsel %vm1156, %v2279, %v2291
      %v2328 = vsel %vm1156, %v2280, %v2292
      %v2329 = vsel %vm1156, %v2281, %v2293
      %v2330 = vsel %vm1156, %v2282, %v2294
      %v2331 = vsel %vm1156, %v2283, %v2295
      %v2332 = vsel %vm1156, %v2284, %v2296
      %v2333 = vsel %vm1156, %v2285, %v2297
      %v2334 = vsel %vm1156, %v2286, %v2298
      %v2335 = vsel %vm1156, %v2287, %v2299
      %v2336 = vsel %vm1156, %v2288, %v2300
      %v2337 = vmul.f32 %v2325, %v1184
      %v2338 = vmul.f32 %v2313, %v1184
      %v2339 = vmul.f32 %v2326, %v1184
      %v2340 = vmul.f32 %v2314, %v1184
      %v2341 = vmul.f32 %v2327, %v1184
      %v2342 = vmul.f32 %v2315, %v1184
      %v2343 = vmul.f32 %v2328, %v1184
      %v2344 = vmul.f32 %v2316, %v1184
      %v2345 = vmul.f32 %v2329, %v1184
      %v2346 = vmul.f32 %v2317, %v1184
      %v2347 = vmul.f32 %v2330, %v1184
      %v2348 = vmul.f32 %v2318, %v1184
      %v2349 = vmul.f32 %v2331, %v1184
      %v2350 = vmul.f32 %v2319, %v1184
      %v2351 = vmul.f32 %v2332, %v1184
      %v2352 = vmul.f32 %v2320, %v1184
      %v2353 = vadd.f32 %v2261, %v2337
      %v2354 = vadd.f32 %v2262, %v2338
      %v2355 = vadd.f32 %v2263, %v2339
      %v2356 = vadd.f32 %v2264, %v2340
      %v2357 = vadd.f32 %v2265, %v2341
      %v2358 = vadd.f32 %v2266, %v2342
      %v2359 = vadd.f32 %v2267, %v2343
      %v2360 = vadd.f32 %v2268, %v2344
      %v2361 = vadd.f32 %v2269, %v2345
      %v2362 = vadd.f32 %v2270, %v2346
      %v2363 = vadd.f32 %v2271, %v2347
      %v2364 = vadd.f32 %v2272, %v2348
      %v2365 = vadd.f32 %v2273, %v2349
      %v2366 = vadd.f32 %v2274, %v2350
      %v2367 = vadd.f32 %v2275, %v2351
      %v2368 = vadd.f32 %v2276, %v2352
      %v2369 = vmul.f32 %v2326, %v1220
      %v2370 = vmul.f32 %v2314, %v1220
      %v2371 = vmul.f32 %v2327, %v1220
      %v2372 = vmul.f32 %v2315, %v1220
      %v2373 = vmul.f32 %v2328, %v1220
      %v2374 = vmul.f32 %v2316, %v1220
      %v2375 = vmul.f32 %v2329, %v1220
      %v2376 = vmul.f32 %v2317, %v1220
      %v2377 = vmul.f32 %v2330, %v1220
      %v2378 = vmul.f32 %v2318, %v1220
      %v2379 = vmul.f32 %v2331, %v1220
      %v2380 = vmul.f32 %v2319, %v1220
      %v2381 = vmul.f32 %v2332, %v1220
      %v2382 = vmul.f32 %v2320, %v1220
      %v2383 = vmul.f32 %v2333, %v1220
      %v2384 = vmul.f32 %v2321, %v1220
      %v2385 = vadd.f32 %v2353, %v2369
      %v2386 = vadd.f32 %v2354, %v2370
      %v2387 = vadd.f32 %v2355, %v2371
      %v2388 = vadd.f32 %v2356, %v2372
      %v2389 = vadd.f32 %v2357, %v2373
      %v2390 = vadd.f32 %v2358, %v2374
      %v2391 = vadd.f32 %v2359, %v2375
      %v2392 = vadd.f32 %v2360, %v2376
      %v2393 = vadd.f32 %v2361, %v2377
      %v2394 = vadd.f32 %v2362, %v2378
      %v2395 = vadd.f32 %v2363, %v2379
      %v2396 = vadd.f32 %v2364, %v2380
      %v2397 = vadd.f32 %v2365, %v2381
      %v2398 = vadd.f32 %v2366, %v2382
      %v2399 = vadd.f32 %v2367, %v2383
      %v2400 = vadd.f32 %v2368, %v2384
      %v2401 = vmul.f32 %v2327, %v1256
      %v2402 = vmul.f32 %v2315, %v1256
      %v2403 = vmul.f32 %v2328, %v1256
      %v2404 = vmul.f32 %v2316, %v1256
      %v2405 = vmul.f32 %v2329, %v1256
      %v2406 = vmul.f32 %v2317, %v1256
      %v2407 = vmul.f32 %v2330, %v1256
      %v2408 = vmul.f32 %v2318, %v1256
      %v2409 = vmul.f32 %v2331, %v1256
      %v2410 = vmul.f32 %v2319, %v1256
      %v2411 = vmul.f32 %v2332, %v1256
      %v2412 = vmul.f32 %v2320, %v1256
      %v2413 = vmul.f32 %v2333, %v1256
      %v2414 = vmul.f32 %v2321, %v1256
      %v2415 = vmul.f32 %v2334, %v1256
      %v2416 = vmul.f32 %v2322, %v1256
      %v2417 = vadd.f32 %v2385, %v2401
      %v2418 = vadd.f32 %v2386, %v2402
      %v2419 = vadd.f32 %v2387, %v2403
      %v2420 = vadd.f32 %v2388, %v2404
      %v2421 = vadd.f32 %v2389, %v2405
      %v2422 = vadd.f32 %v2390, %v2406
      %v2423 = vadd.f32 %v2391, %v2407
      %v2424 = vadd.f32 %v2392, %v2408
      %v2425 = vadd.f32 %v2393, %v2409
      %v2426 = vadd.f32 %v2394, %v2410
      %v2427 = vadd.f32 %v2395, %v2411
      %v2428 = vadd.f32 %v2396, %v2412
      %v2429 = vadd.f32 %v2397, %v2413
      %v2430 = vadd.f32 %v2398, %v2414
      %v2431 = vadd.f32 %v2399, %v2415
      %v2432 = vadd.f32 %v2400, %v2416
      %v2433 = vmul.f32 %v2328, %v1292
      %v2434 = vmul.f32 %v2316, %v1292
      %v2435 = vmul.f32 %v2329, %v1292
      %v2436 = vmul.f32 %v2317, %v1292
      %v2437 = vmul.f32 %v2330, %v1292
      %v2438 = vmul.f32 %v2318, %v1292
      %v2439 = vmul.f32 %v2331, %v1292
      %v2440 = vmul.f32 %v2319, %v1292
      %v2441 = vmul.f32 %v2332, %v1292
      %v2442 = vmul.f32 %v2320, %v1292
      %v2443 = vmul.f32 %v2333, %v1292
      %v2444 = vmul.f32 %v2321, %v1292
      %v2445 = vmul.f32 %v2334, %v1292
      %v2446 = vmul.f32 %v2322, %v1292
      %v2447 = vmul.f32 %v2335, %v1292
      %v2448 = vmul.f32 %v2323, %v1292
      %v2449 = vadd.f32 %v2417, %v2433
      %v2450 = vadd.f32 %v2418, %v2434
      %v2451 = vadd.f32 %v2419, %v2435
      %v2452 = vadd.f32 %v2420, %v2436
      %v2453 = vadd.f32 %v2421, %v2437
      %v2454 = vadd.f32 %v2422, %v2438
      %v2455 = vadd.f32 %v2423, %v2439
      %v2456 = vadd.f32 %v2424, %v2440
      %v2457 = vadd.f32 %v2425, %v2441
      %v2458 = vadd.f32 %v2426, %v2442
      %v2459 = vadd.f32 %v2427, %v2443
      %v2460 = vadd.f32 %v2428, %v2444
      %v2461 = vadd.f32 %v2429, %v2445
      %v2462 = vadd.f32 %v2430, %v2446
      %v2463 = vadd.f32 %v2431, %v2447
      %v2464 = vadd.f32 %v2432, %v2448
      %v2465 = vmul.f32 %v2329, %v1328
      %v2466 = vmul.f32 %v2317, %v1328
      %v2467 = vmul.f32 %v2330, %v1328
      %v2468 = vmul.f32 %v2318, %v1328
      %v2469 = vmul.f32 %v2331, %v1328
      %v2470 = vmul.f32 %v2319, %v1328
      %v2471 = vmul.f32 %v2332, %v1328
      %v2472 = vmul.f32 %v2320, %v1328
      %v2473 = vmul.f32 %v2333, %v1328
      %v2474 = vmul.f32 %v2321, %v1328
      %v2475 = vmul.f32 %v2334, %v1328
      %v2476 = vmul.f32 %v2322, %v1328
      %v2477 = vmul.f32 %v2335, %v1328
      %v2478 = vmul.f32 %v2323, %v1328
      %v2479 = vmul.f32 %v2336, %v1328
      %v2480 = vmul.f32 %v2324, %v1328
      %v2481 = vadd.f32 %v2449, %v2465
      %v2482 = vadd.f32 %v2450, %v2466
      %v2483 = vadd.f32 %v2451, %v2467
      %v2484 = vadd.f32 %v2452, %v2468
      %v2485 = vadd.f32 %v2453, %v2469
      %v2486 = vadd.f32 %v2454, %v2470
      %v2487 = vadd.f32 %v2455, %v2471
      %v2488 = vadd.f32 %v2456, %v2472
      %v2489 = vadd.f32 %v2457, %v2473
      %v2490 = vadd.f32 %v2458, %v2474
      %v2491 = vadd.f32 %v2459, %v2475
      %v2492 = vadd.f32 %v2460, %v2476
      %v2493 = vadd.f32 %v2461, %v2477
      %v2494 = vadd.f32 %v2462, %v2478
      %v2495 = vadd.f32 %v2463, %v2479
      %v2496 = vadd.f32 %v2464, %v2480
      %v2497 = vrot.slane %v1657, 2
      %v2498 = vrot.slane %v1660, 2
      %v2499 = vrot.slane %v1663, 2
      %v2500 = vrot.slane %v1666, 2
      %v2501 = vrot.slane %v1669, 2
      %v2502 = vrot.slane %v1672, 2
      %v2503 = vrot.slane %v1675, 2
      %v2504 = vrot.slane %v1678, 2
      %v2505 = vrot.slane %v1681, 2
      %v2506 = vrot.slane %v1684, 2
      %v2507 = vrot.slane %v1687, 2
      %v2508 = vrot.slane %v1690, 2
      %v2509 = vrot.slane %v1658, 2
      %v2510 = vrot.slane %v1661, 2
      %v2511 = vrot.slane %v1664, 2
      %v2512 = vrot.slane %v1667, 2
      %v2513 = vrot.slane %v1670, 2
      %v2514 = vrot.slane %v1673, 2
      %v2515 = vrot.slane %v1676, 2
      %v2516 = vrot.slane %v1679, 2
      %v2517 = vrot.slane %v1682, 2
      %v2518 = vrot.slane %v1685, 2
      %v2519 = vrot.slane %v1688, 2
      %v2520 = vrot.slane %v1691, 2
      %v2521 = vrot.slane %v1659, 2
      %v2522 = vrot.slane %v1662, 2
      %v2523 = vrot.slane %v1665, 2
      %v2524 = vrot.slane %v1668, 2
      %v2525 = vrot.slane %v1671, 2
      %v2526 = vrot.slane %v1674, 2
      %v2527 = vrot.slane %v1677, 2
      %v2528 = vrot.slane %v1680, 2
      %v2529 = vrot.slane %v1683, 2
      %v2530 = vrot.slane %v1686, 2
      %v2531 = vrot.slane %v1689, 2
      %v2532 = vrot.slane %v1692, 2
      %v2533 = vsel %vm1397, %v2509, %v2521
      %v2534 = vsel %vm1397, %v2510, %v2522
      %v2535 = vsel %vm1397, %v2511, %v2523
      %v2536 = vsel %vm1397, %v2512, %v2524
      %v2537 = vsel %vm1397, %v2513, %v2525
      %v2538 = vsel %vm1397, %v2514, %v2526
      %v2539 = vsel %vm1397, %v2515, %v2527
      %v2540 = vsel %vm1397, %v2516, %v2528
      %v2541 = vsel %vm1397, %v2517, %v2529
      %v2542 = vsel %vm1397, %v2518, %v2530
      %v2543 = vsel %vm1397, %v2519, %v2531
      %v2544 = vsel %vm1397, %v2520, %v2532
      %v2545 = vsel %vm1397, %v2497, %v2509
      %v2546 = vsel %vm1397, %v2498, %v2510
      %v2547 = vsel %vm1397, %v2499, %v2511
      %v2548 = vsel %vm1397, %v2500, %v2512
      %v2549 = vsel %vm1397, %v2501, %v2513
      %v2550 = vsel %vm1397, %v2502, %v2514
      %v2551 = vsel %vm1397, %v2503, %v2515
      %v2552 = vsel %vm1397, %v2504, %v2516
      %v2553 = vsel %vm1397, %v2505, %v2517
      %v2554 = vsel %vm1397, %v2506, %v2518
      %v2555 = vsel %vm1397, %v2507, %v2519
      %v2556 = vsel %vm1397, %v2508, %v2520
      %v2557 = vmul.f32 %v2545, %v1425
      %v2558 = vmul.f32 %v2533, %v1425
      %v2559 = vmul.f32 %v2546, %v1425
      %v2560 = vmul.f32 %v2534, %v1425
      %v2561 = vmul.f32 %v2547, %v1425
      %v2562 = vmul.f32 %v2535, %v1425
      %v2563 = vmul.f32 %v2548, %v1425
      %v2564 = vmul.f32 %v2536, %v1425
      %v2565 = vmul.f32 %v2549, %v1425
      %v2566 = vmul.f32 %v2537, %v1425
      %v2567 = vmul.f32 %v2550, %v1425
      %v2568 = vmul.f32 %v2538, %v1425
      %v2569 = vmul.f32 %v2551, %v1425
      %v2570 = vmul.f32 %v2539, %v1425
      %v2571 = vmul.f32 %v2552, %v1425
      %v2572 = vmul.f32 %v2540, %v1425
      %v2573 = vadd.f32 %v2481, %v2557
      %v2574 = vadd.f32 %v2482, %v2558
      %v2575 = vadd.f32 %v2483, %v2559
      %v2576 = vadd.f32 %v2484, %v2560
      %v2577 = vadd.f32 %v2485, %v2561
      %v2578 = vadd.f32 %v2486, %v2562
      %v2579 = vadd.f32 %v2487, %v2563
      %v2580 = vadd.f32 %v2488, %v2564
      %v2581 = vadd.f32 %v2489, %v2565
      %v2582 = vadd.f32 %v2490, %v2566
      %v2583 = vadd.f32 %v2491, %v2567
      %v2584 = vadd.f32 %v2492, %v2568
      %v2585 = vadd.f32 %v2493, %v2569
      %v2586 = vadd.f32 %v2494, %v2570
      %v2587 = vadd.f32 %v2495, %v2571
      %v2588 = vadd.f32 %v2496, %v2572
      %v2589 = vmul.f32 %v2546, %v1461
      %v2590 = vmul.f32 %v2534, %v1461
      %v2591 = vmul.f32 %v2547, %v1461
      %v2592 = vmul.f32 %v2535, %v1461
      %v2593 = vmul.f32 %v2548, %v1461
      %v2594 = vmul.f32 %v2536, %v1461
      %v2595 = vmul.f32 %v2549, %v1461
      %v2596 = vmul.f32 %v2537, %v1461
      %v2597 = vmul.f32 %v2550, %v1461
      %v2598 = vmul.f32 %v2538, %v1461
      %v2599 = vmul.f32 %v2551, %v1461
      %v2600 = vmul.f32 %v2539, %v1461
      %v2601 = vmul.f32 %v2552, %v1461
      %v2602 = vmul.f32 %v2540, %v1461
      %v2603 = vmul.f32 %v2553, %v1461
      %v2604 = vmul.f32 %v2541, %v1461
      %v2605 = vadd.f32 %v2573, %v2589
      %v2606 = vadd.f32 %v2574, %v2590
      %v2607 = vadd.f32 %v2575, %v2591
      %v2608 = vadd.f32 %v2576, %v2592
      %v2609 = vadd.f32 %v2577, %v2593
      %v2610 = vadd.f32 %v2578, %v2594
      %v2611 = vadd.f32 %v2579, %v2595
      %v2612 = vadd.f32 %v2580, %v2596
      %v2613 = vadd.f32 %v2581, %v2597
      %v2614 = vadd.f32 %v2582, %v2598
      %v2615 = vadd.f32 %v2583, %v2599
      %v2616 = vadd.f32 %v2584, %v2600
      %v2617 = vadd.f32 %v2585, %v2601
      %v2618 = vadd.f32 %v2586, %v2602
      %v2619 = vadd.f32 %v2587, %v2603
      %v2620 = vadd.f32 %v2588, %v2604
      %v2621 = vmul.f32 %v2547, %v1497
      %v2622 = vmul.f32 %v2535, %v1497
      %v2623 = vmul.f32 %v2548, %v1497
      %v2624 = vmul.f32 %v2536, %v1497
      %v2625 = vmul.f32 %v2549, %v1497
      %v2626 = vmul.f32 %v2537, %v1497
      %v2627 = vmul.f32 %v2550, %v1497
      %v2628 = vmul.f32 %v2538, %v1497
      %v2629 = vmul.f32 %v2551, %v1497
      %v2630 = vmul.f32 %v2539, %v1497
      %v2631 = vmul.f32 %v2552, %v1497
      %v2632 = vmul.f32 %v2540, %v1497
      %v2633 = vmul.f32 %v2553, %v1497
      %v2634 = vmul.f32 %v2541, %v1497
      %v2635 = vmul.f32 %v2554, %v1497
      %v2636 = vmul.f32 %v2542, %v1497
      %v2637 = vadd.f32 %v2605, %v2621
      %v2638 = vadd.f32 %v2606, %v2622
      %v2639 = vadd.f32 %v2607, %v2623
      %v2640 = vadd.f32 %v2608, %v2624
      %v2641 = vadd.f32 %v2609, %v2625
      %v2642 = vadd.f32 %v2610, %v2626
      %v2643 = vadd.f32 %v2611, %v2627
      %v2644 = vadd.f32 %v2612, %v2628
      %v2645 = vadd.f32 %v2613, %v2629
      %v2646 = vadd.f32 %v2614, %v2630
      %v2647 = vadd.f32 %v2615, %v2631
      %v2648 = vadd.f32 %v2616, %v2632
      %v2649 = vadd.f32 %v2617, %v2633
      %v2650 = vadd.f32 %v2618, %v2634
      %v2651 = vadd.f32 %v2619, %v2635
      %v2652 = vadd.f32 %v2620, %v2636
      %v2653 = vmul.f32 %v2548, %v1533
      %v2654 = vmul.f32 %v2536, %v1533
      %v2655 = vmul.f32 %v2549, %v1533
      %v2656 = vmul.f32 %v2537, %v1533
      %v2657 = vmul.f32 %v2550, %v1533
      %v2658 = vmul.f32 %v2538, %v1533
      %v2659 = vmul.f32 %v2551, %v1533
      %v2660 = vmul.f32 %v2539, %v1533
      %v2661 = vmul.f32 %v2552, %v1533
      %v2662 = vmul.f32 %v2540, %v1533
      %v2663 = vmul.f32 %v2553, %v1533
      %v2664 = vmul.f32 %v2541, %v1533
      %v2665 = vmul.f32 %v2554, %v1533
      %v2666 = vmul.f32 %v2542, %v1533
      %v2667 = vmul.f32 %v2555, %v1533
      %v2668 = vmul.f32 %v2543, %v1533
      %v2669 = vadd.f32 %v2637, %v2653
      %v2670 = vadd.f32 %v2638, %v2654
      %v2671 = vadd.f32 %v2639, %v2655
      %v2672 = vadd.f32 %v2640, %v2656
      %v2673 = vadd.f32 %v2641, %v2657
      %v2674 = vadd.f32 %v2642, %v2658
      %v2675 = vadd.f32 %v2643, %v2659
      %v2676 = vadd.f32 %v2644, %v2660
      %v2677 = vadd.f32 %v2645, %v2661
      %v2678 = vadd.f32 %v2646, %v2662
      %v2679 = vadd.f32 %v2647, %v2663
      %v2680 = vadd.f32 %v2648, %v2664
      %v2681 = vadd.f32 %v2649, %v2665
      %v2682 = vadd.f32 %v2650, %v2666
      %v2683 = vadd.f32 %v2651, %v2667
      %v2684 = vadd.f32 %v2652, %v2668
      %v2685 = vmul.f32 %v2549, %v1569
      %v2686 = vmul.f32 %v2537, %v1569
      %v2687 = vmul.f32 %v2550, %v1569
      %v2688 = vmul.f32 %v2538, %v1569
      %v2689 = vmul.f32 %v2551, %v1569
      %v2690 = vmul.f32 %v2539, %v1569
      %v2691 = vmul.f32 %v2552, %v1569
      %v2692 = vmul.f32 %v2540, %v1569
      %v2693 = vmul.f32 %v2553, %v1569
      %v2694 = vmul.f32 %v2541, %v1569
      %v2695 = vmul.f32 %v2554, %v1569
      %v2696 = vmul.f32 %v2542, %v1569
      %v2697 = vmul.f32 %v2555, %v1569
      %v2698 = vmul.f32 %v2543, %v1569
      %v2699 = vmul.f32 %v2556, %v1569
      %v2700 = vmul.f32 %v2544, %v1569
      %v2701 = vadd.f32 %v2669, %v2685
      %v2702 = vadd.f32 %v2670, %v2686
      %v2703 = vadd.f32 %v2671, %v2687
      %v2704 = vadd.f32 %v2672, %v2688
      %v2705 = vadd.f32 %v2673, %v2689
      %v2706 = vadd.f32 %v2674, %v2690
      %v2707 = vadd.f32 %v2675, %v2691
      %v2708 = vadd.f32 %v2676, %v2692
      %v2709 = vadd.f32 %v2677, %v2693
      %v2710 = vadd.f32 %v2678, %v2694
      %v2711 = vadd.f32 %v2679, %v2695
      %v2712 = vadd.f32 %v2680, %v2696
      %v2713 = vadd.f32 %v2681, %v2697
      %v2714 = vadd.f32 %v2682, %v2698
      %v2715 = vadd.f32 %v2683, %v2699
      %v2716 = vadd.f32 %v2684, %v2700
      %v2717 = vadd.f32 %v2701, %v1606
      %v2718 = vadd.f32 %v2702, %v1606
      %v2719 = vadd.f32 %v2703, %v1606
      %v2720 = vadd.f32 %v2704, %v1606
      %v2721 = vadd.f32 %v2705, %v1606
      %v2722 = vadd.f32 %v2706, %v1606
      %v2723 = vadd.f32 %v2707, %v1606
      %v2724 = vadd.f32 %v2708, %v1606
      %v2725 = vadd.f32 %v2709, %v1606
      %v2726 = vadd.f32 %v2710, %v1606
      %v2727 = vadd.f32 %v2711, %v1606
      %v2728 = vadd.f32 %v2712, %v1606
      %v2729 = vadd.f32 %v2713, %v1606
      %v2730 = vadd.f32 %v2714, %v1606
      %v2731 = vadd.f32 %v2715, %v1606
      %v2732 = vadd.f32 %v2716, %v1606
      %v2733 = vmax.f32 %v2717, 0.0
      %v2734 = vmax.f32 %v2718, 0.0
      %v2735 = vmax.f32 %v2719, 0.0
      %v2736 = vmax.f32 %v2720, 0.0
      %v2737 = vmax.f32 %v2721, 0.0
      %v2738 = vmax.f32 %v2722, 0.0
      %v2739 = vmax.f32 %v2723, 0.0
      %v2740 = vmax.f32 %v2724, 0.0
      %v2741 = vmax.f32 %v2725, 0.0
      %v2742 = vmax.f32 %v2726, 0.0
      %v2743 = vmax.f32 %v2727, 0.0
      %v2744 = vmax.f32 %v2728, 0.0
      %v2745 = vmax.f32 %v2729, 0.0
      %v2746 = vmax.f32 %v2730, 0.0
      %v2747 = vmax.f32 %v2731, 0.0
      %v2748 = vmax.f32 %v2732, 0.0
      %2749 = vst [vmem:[#allocation3 + $0x80] sm:$0xff] %v2733
      %2750 = vst [vmem:[#allocation3 + $0x88] sm:$0xff] %v2734
      %2751 = vst [vmem:[#allocation3 + $0x90] sm:$0xff] %v2735
      %2752 = vst [vmem:[#allocation3 + $0x98] sm:$0xff] %v2736
      %2753 = vst [vmem:[#allocation3 + $0xa0] sm:$0xff] %v2737
      %2754 = vst [vmem:[#allocation3 + $0xa8] sm:$0xff] %v2738
      %2755 = vst [vmem:[#allocation3 + $0xb0] sm:$0xff] %v2739
      %2756 = vst [vmem:[#allocation3 + $0xb8] sm:$0xff] %v2740
      %2757 = vst [vmem:[#allocation3 + $0xc0] sm:$0xff] %v2741
      %2758 = vst [vmem:[#allocation3 + $0xc8] sm:$0xff] %v2742
      %2759 = vst [vmem:[#allocation3 + $0xd0] sm:$0xff] %v2743
      %2760 = vst [vmem:[#allocation3 + $0xd8] sm:$0xff] %v2744
      %2761 = vst [vmem:[#allocation3 + $0xe0] sm:$0xff] %v2745
      %2762 = vst [vmem:[#allocation3 + $0xe8] sm:$0xff] %v2746
      %2763 = vst [vmem:[#allocation3 + $0xf0] sm:$0xff] %v2747
      %2764 = vst [vmem:[#allocation3 + $0xf8] sm:$0xff] %v2748
      %v2765 = vld [vmem:[#allocation3] sm:$0xff]
      %v2766 = vld [vmem:[#allocation3 + $0x8] sm:$0xff]
      %v2767 = vld [vmem:[#allocation3 + $0x10] sm:$0xff]
      %v2768 = vld [vmem:[#allocation3 + $0x18] sm:$0xff]
      %v2769 = vld [vmem:[#allocation3 + $0x20] sm:$0xff]
      %v2770 = vld [vmem:[#allocation3 + $0x28] sm:$0xff]
      %v2771 = vld [vmem:[#allocation3 + $0x30] sm:$0xff]
      %v2772 = vld [vmem:[#allocation3 + $0x38] sm:$0xff]
      %v2773 = vld [vmem:[#allocation3 + $0x40] sm:$0xff]
      %v2774 = vld [vmem:[#allocation3 + $0x48] sm:$0xff]
      %v2775 = vld [vmem:[#allocation3 + $0x50] sm:$0xff]
      %v2776 = vld [vmem:[#allocation3 + $0x58] sm:$0xff]
      %v2777 = vld [vmem:[#allocation3 + $0x60] sm:$0xff]
      %v2778 = vld [vmem:[#allocation3 + $0x68] sm:$0xff]
      %v2779 = vld [vmem:[#allocation3 + $0x70] sm:$0xff]
      %v2780 = vld [vmem:[#allocation3 + $0x78] sm:$0xff]
      %v2781 = vld [vmem:[#allocation3 + $0x80] sm:$0xff]
      %v2782 = vld [vmem:[#allocation3 + $0x88] sm:$0xff]
      %v2783 = vld [vmem:[#allocation3 + $0x90] sm:$0xff]
      %v2784 = vld [vmem:[#allocation3 + $0x98] sm:$0xff]
      %v2785 = vld [vmem:[#allocation3 + $0xa0] sm:$0xff]
      %v2786 = vld [vmem:[#allocation3 + $0xa8] sm:$0xff]
      %v2787 = vld [vmem:[#allocation3 + $0xb0] sm:$0xff]
      %v2788 = vld [vmem:[#allocation3 + $0xb8] sm:$0xff]
      %v2789 = vld [vmem:[#allocation3 + $0xc0] sm:$0xff]
      %v2790 = vld [vmem:[#allocation3 + $0xc8] sm:$0xff]
      %v2791 = vld [vmem:[#allocation3 + $0xd0] sm:$0xff]
      %v2792 = vld [vmem:[#allocation3 + $0xd8] sm:$0xff]
      %v2793 = vld [vmem:[#allocation3 + $0xe0] sm:$0xff]
      %v2794 = vld [vmem:[#allocation3 + $0xe8] sm:$0xff]
      %v2795 = vld [vmem:[#allocation3 + $0xf0] sm:$0xff]
      %v2796 = vld [vmem:[#allocation3 + $0xf8] sm:$0xff]
      %v2797 = vld [vmem:[%s3] sm:$0xff]
      %v2798 = vld [vmem:[%s3 + $0x8] sm:$0xff]
      %v2799 = vld [vmem:[%s3 + $0x10] sm:$0xff]
      %v2800 = vld [vmem:[%s3 + $0x18] sm:$0xff]
      %v2801 = vld [vmem:[%s3 + $0x20] sm:$0xff]
      %v2802 = vld [vmem:[%s3 + $0x28] sm:$0xff]
      %v2803 = vld [vmem:[%s3 + $0x30] sm:$0xff]
      %v2804 = vld [vmem:[%s3 + $0x38] sm:$0xff]
      %v2805 = vld [vmem:[%s3 + $0x40] sm:$0xff]
      %v2806 = vld [vmem:[%s3 + $0x48] sm:$0xff]
      %v2807 = vld [vmem:[%s3 + $0x50] sm:$0xff]
      %v2808 = vld [vmem:[%s3 + $0x58] sm:$0xff]
      %v2809 = vld [vmem:[%s3 + $0x60] sm:$0xff]
      %v2810 = vld [vmem:[%s3 + $0x68] sm:$0xff]
      %v2811 = vld [vmem:[%s3 + $0x70] sm:$0xff]
      %v2812 = vld [vmem:[%s3 + $0x78] sm:$0xff]
      %v2813 = vld [vmem:[%s4] sm:$0x1]
      %v2815 = vlaneseq
      %v2816 = vshrl.u32 %v2815, 7
      %v2817 = vsub.s32 0, %v2816
      %v2818 = vrot.slane %v2813, %v2817
      %2820 = vmatprep.subr.mxu0 0.0
      %2821 = vmatpush1.msra.mxu0 %v2797
      %2822 = vmatprep.subr.mxu0 0.0
      %2823 = vmatpush1.msra.mxu0 %v2798
      %2824 = vmatprep.subr.mxu0 0.0
      %2825 = vmatpush1.msra.mxu0 %v2799
      %2826 = vmatprep.subr.mxu0 0.0
      %2827 = vmatpush1.msra.mxu0 %v2800
      %2828 = vmatprep.subr.mxu0 0.0
      %2829 = vmatpush1.msra.mxu0 %v2801
      %2830 = vmatprep.subr.mxu0 0.0
      %2831 = vmatpush1.msra.mxu0 %v2802
      %2832 = vmatprep.subr.mxu0 0.0
      %2833 = vmatpush1.msra.mxu0 %v2803
      %2834 = vmatprep.subr.mxu0 0.0
      %2835 = vmatpush1.msra.mxu0 %v2804
      %2836 = vmatprep.subr.mxu0 0.0
      %2837 = vmatpush1.msra.mxu0 %v2805
      %2838 = vmatprep.subr.mxu0 0.0
      %2839 = vmatpush1.msra.mxu0 %v2806
      %2840 = vmatprep.subr.mxu0 0.0
      %2841 = vmatpush1.msra.mxu0 %v2807
      %2842 = vmatprep.subr.mxu0 0.0
      %2843 = vmatpush1.msra.mxu0 %v2808
      %2844 = vmatprep.subr.mxu0 0.0
      %2845 = vmatpush1.msra.mxu0 %v2809
      %2846 = vmatprep.subr.mxu0 0.0
      %2847 = vmatpush1.msra.mxu0 %v2810
      %2848 = vmatprep.subr.mxu0 0.0
      %2849 = vmatpush1.msra.mxu0 %v2811
      %2850 = vmatprep.subr.mxu0 0.0
      %2851 = vmatpush1.msra.mxu0 %v2812
      %2852 = vmatprep.subr.mxu0 0.0
      %2853 = vmatpush1.msra.mxu0 0.0
      %2854 = vmatprep.subr.mxu0 0.0
      %2855 = vmatpush1.msra.mxu0 0.0
      %2856 = vmatprep.subr.mxu0 0.0
      %2857 = vmatpush1.msra.mxu0 0.0
      %2858 = vmatprep.subr.mxu0 0.0
      %2859 = vmatpush1.msra.mxu0 0.0
      %2860 = vmatprep.subr.mxu0 0.0
      %2861 = vmatpush1.msra.mxu0 0.0
      %2862 = vmatprep.subr.mxu0 0.0
      %2863 = vmatpush1.msra.mxu0 0.0
      %2864 = vmatprep.subr.mxu0 0.0
      %2865 = vmatpush1.msra.mxu0 0.0
      %2866 = vmatprep.subr.mxu0 0.0
      %2867 = vmatpush1.msra.mxu0 0.0
      %2868 = vmatprep.subr.mxu0 0.0
      %2869 = vmatpush1.msra.mxu0 0.0
      %2870 = vmatprep.subr.mxu0 0.0
      %2871 = vmatpush1.msra.mxu0 0.0
      %2872 = vmatprep.subr.mxu0 0.0
      %2873 = vmatpush1.msra.mxu0 0.0
      %2874 = vmatprep.subr.mxu0 0.0
      %2875 = vmatpush1.msra.mxu0 0.0
      %2876 = vmatprep.subr.mxu0 0.0
      %2877 = vmatpush1.msra.mxu0 0.0
      %2878 = vmatprep.subr.mxu0 0.0
      %2879 = vmatpush1.msra.mxu0 0.0
      %2880 = vmatprep.subr.mxu0 0.0
      %2881 = vmatpush1.msra.mxu0 0.0
      %2882 = vmatprep.subr.mxu0 0.0
      %2883 = vmatpush1.msra.mxu0 0.0
      %2884 = vmatprep.mubr.f32.mxu0 0.0
      %2885 = vmatmul.mubr.f32.gmra.mrb[0].mxu0 %v2765
      %v2886 = vpop.f32.mrb[0].mxu0
      %v2887 = vadd.f32 %v2818, %v2886
      %v2888 = vpop.f32.mrb[0].mxu0
      %2889 = vmatprep.mubr.f32.mxu0 0.0
      %2890 = vmatmul.mubr.f32.gmra.mrb[0].mxu0 %v2766
      %v2891 = vpop.f32.mrb[0].mxu0
      %v2892 = vadd.f32 %v2818, %v2891
      %v2893 = vpop.f32.mrb[0].mxu0
      %2894 = vmatprep.mubr.f32.mxu0 0.0
      %2895 = vmatmul.mubr.f32.gmra.mrb[0].mxu0 %v2767
      %v2896 = vpop.f32.mrb[0].mxu0
      %v2897 = vadd.f32 %v2818, %v2896
      %v2898 = vpop.f32.mrb[0].mxu0
      %2899 = vmatprep.mubr.f32.mxu0 0.0
      %2900 = vmatmul.mubr.f32.gmra.mrb[0].mxu0 %v2768
      %v2901 = vpop.f32.mrb[0].mxu0
      %v2902 = vadd.f32 %v2818, %v2901
      %v2903 = vpop.f32.mrb[0].mxu0
      %2904 = vmatprep.mubr.f32.mxu0 0.0
      %2905 = vmatmul.mubr.f32.gmra.mrb[0].mxu0 %v2769
      %v2906 = vpop.f32.mrb[0].mxu0
      %v2907 = vadd.f32 %v2818, %v2906
      %v2908 = vpop.f32.mrb[0].mxu0
      %2909 = vmatprep.mubr.f32.mxu0 0.0
      %2910 = vmatmul.mubr.f32.gmra.mrb[0].mxu0 %v2770
      %v2911 = vpop.f32.mrb[0].mxu0
      %v2912 = vadd.f32 %v2818, %v2911
      %v2913 = vpop.f32.mrb[0].mxu0
      %2914 = vmatprep.mubr.f32.mxu0 0.0
      %2915 = vmatmul.mubr.f32.gmra.mrb[0].mxu0 %v2771
      %v2916 = vpop.f32.mrb[0].mxu0
      %v2917 = vadd.f32 %v2818, %v2916
      %v2918 = vpop.f32.mrb[0].mxu0
      %2919 = vmatprep.mubr.f32.mxu0 0.0
      %2920 = vmatmul.mubr.f32.gmra.mrb[0].mxu0 %v2772
      %v2921 = vpop.f32.mrb[0].mxu0
      %v2922 = vadd.f32 %v2818, %v2921
      %v2923 = vpop.f32.mrb[0].mxu0
      %2924 = vmatprep.mubr.f32.mxu0 0.0
      %2925 = vmatmul.mubr.f32.gmra.mrb[0].mxu0 %v2773
      %v2926 = vpop.f32.mrb[0].mxu0
      %v2927 = vadd.f32 %v2818, %v2926
      %v2928 = vpop.f32.mrb[0].mxu0
      %2929 = vmatprep.mubr.f32.mxu0 0.0
      %2930 = vmatmul.mubr.f32.gmra.mrb[0].mxu0 %v2774
      %v2931 = vpop.f32.mrb[0].mxu0
      %v2932 = vadd.f32 %v2818, %v2931
      %v2933 = vpop.f32.mrb[0].mxu0
      %2934 = vmatprep.mubr.f32.mxu0 0.0
      %2935 = vmatmul.mubr.f32.gmra.mrb[0].mxu0 %v2775
      %v2936 = vpop.f32.mrb[0].mxu0
      %v2937 = vadd.f32 %v2818, %v2936
      %v2938 = vpop.f32.mrb[0].mxu0
      %2939 = vmatprep.mubr.f32.mxu0 0.0
      %2940 = vmatmul.mubr.f32.gmra.mrb[0].mxu0 %v2776
      %v2941 = vpop.f32.mrb[0].mxu0
      %v2942 = vadd.f32 %v2818, %v2941
      %v2943 = vpop.f32.mrb[0].mxu0
      %2944 = vmatprep.mubr.f32.mxu0 0.0
      %2945 = vmatmul.mubr.f32.gmra.mrb[0].mxu0 %v2777
      %v2946 = vpop.f32.mrb[0].mxu0
      %v2947 = vadd.f32 %v2818, %v2946
      %v2948 = vpop.f32.mrb[0].mxu0
      %2949 = vmatprep.mubr.f32.mxu0 0.0
      %2950 = vmatmul.mubr.f32.gmra.mrb[0].mxu0 %v2778
      %v2951 = vpop.f32.mrb[0].mxu0
      %v2952 = vadd.f32 %v2818, %v2951
      %v2953 = vpop.f32.mrb[0].mxu0
      %2954 = vmatprep.mubr.f32.mxu0 0.0
      %2955 = vmatmul.mubr.f32.gmra.mrb[0].mxu0 %v2779
      %v2956 = vpop.f32.mrb[0].mxu0
      %v2957 = vadd.f32 %v2818, %v2956
      %v2958 = vpop.f32.mrb[0].mxu0
      %2959 = vmatprep.mubr.f32.mxu0 0.0
      %2960 = vmatmul.mubr.f32.gmra.mrb[0].mxu0 %v2780
      %v2961 = vpop.f32.mrb[0].mxu0
      %v2962 = vadd.f32 %v2818, %v2961
      %v2963 = vpop.f32.mrb[0].mxu0
      %2964 = vmatprep.mubr.f32.mxu0 0.0
      %2965 = vmatmul.mubr.f32.gmra.mrb[0].mxu0 %v2781
      %v2966 = vpop.f32.mrb[0].mxu0
      %v2967 = vadd.f32 %v2818, %v2966
      %v2968 = vpop.f32.mrb[0].mxu0
      %2969 = vmatprep.mubr.f32.mxu0 0.0
      %2970 = vmatmul.mubr.f32.gmra.mrb[0].mxu0 %v2782
      %v2971 = vpop.f32.mrb[0].mxu0
      %v2972 = vadd.f32 %v2818, %v2971
      %v2973 = vpop.f32.mrb[0].mxu0
      %2974 = vmatprep.mubr.f32.mxu0 0.0
      %2975 = vmatmul.mubr.f32.gmra.mrb[0].mxu0 %v2783
      %v2976 = vpop.f32.mrb[0].mxu0
      %v2977 = vadd.f32 %v2818, %v2976
      %v2978 = vpop.f32.mrb[0].mxu0
      %2979 = vmatprep.mubr.f32.mxu0 0.0
      %2980 = vmatmul.mubr.f32.gmra.mrb[0].mxu0 %v2784
      %v2981 = vpop.f32.mrb[0].mxu0
      %v2982 = vadd.f32 %v2818, %v2981
      %v2983 = vpop.f32.mrb[0].mxu0
      %2984 = vmatprep.mubr.f32.mxu0 0.0
      %2985 = vmatmul.mubr.f32.gmra.mrb[0].mxu0 %v2785
      %v2986 = vpop.f32.mrb[0].mxu0
      %v2987 = vadd.f32 %v2818, %v2986
      %v2988 = vpop.f32.mrb[0].mxu0
      %2989 = vmatprep.mubr.f32.mxu0 0.0
      %2990 = vmatmul.mubr.f32.gmra.mrb[0].mxu0 %v2786
      %v2991 = vpop.f32.mrb[0].mxu0
      %v2992 = vadd.f32 %v2818, %v2991
      %v2993 = vpop.f32.mrb[0].mxu0
      %2994 = vmatprep.mubr.f32.mxu0 0.0
      %2995 = vmatmul.mubr.f32.gmra.mrb[0].mxu0 %v2787
      %v2996 = vpop.f32.mrb[0].mxu0
      %v2997 = vadd.f32 %v2818, %v2996
      %v2998 = vpop.f32.mrb[0].mxu0
      %2999 = vmatprep.mubr.f32.mxu0 0.0
      %3000 = vmatmul.mubr.f32.gmra.mrb[0].mxu0 %v2788
      %v3001 = vpop.f32.mrb[0].mxu0
      %v3002 = vadd.f32 %v2818, %v3001
      %v3003 = vpop.f32.mrb[0].mxu0
      %3004 = vmatprep.mubr.f32.mxu0 0.0
      %3005 = vmatmul.mubr.f32.gmra.mrb[0].mxu0 %v2789
      %v3006 = vpop.f32.mrb[0].mxu0
      %v3007 = vadd.f32 %v2818, %v3006
      %v3008 = vpop.f32.mrb[0].mxu0
      %3009 = vmatprep.mubr.f32.mxu0 0.0
      %3010 = vmatmul.mubr.f32.gmra.mrb[0].mxu0 %v2790
      %v3011 = vpop.f32.mrb[0].mxu0
      %v3012 = vadd.f32 %v2818, %v3011
      %v3013 = vpop.f32.mrb[0].mxu0
      %3014 = vmatprep.mubr.f32.mxu0 0.0
      %3015 = vmatmul.mubr.f32.gmra.mrb[0].mxu0 %v2791
      %v3016 = vpop.f32.mrb[0].mxu0
      %v3017 = vadd.f32 %v2818, %v3016
      %v3018 = vpop.f32.mrb[0].mxu0
      %3019 = vmatprep.mubr.f32.mxu0 0.0
      %3020 = vmatmul.mubr.f32.gmra.mrb[0].mxu0 %v2792
      %v3021 = vpop.f32.mrb[0].mxu0
      %v3022 = vadd.f32 %v2818, %v3021
      %v3023 = vpop.f32.mrb[0].mxu0
      %3024 = vmatprep.mubr.f32.mxu0 0.0
      %3025 = vmatmul.mubr.f32.gmra.mrb[0].mxu0 %v2793
      %v3026 = vpop.f32.mrb[0].mxu0
      %v3027 = vadd.f32 %v2818, %v3026
      %v3028 = vpop.f32.mrb[0].mxu0
      %3029 = vmatprep.mubr.f32.mxu0 0.0
      %3030 = vmatmul.mubr.f32.gmra.mrb[0].mxu0 %v2794
      %v3031 = vpop.f32.mrb[0].mxu0
      %v3032 = vadd.f32 %v2818, %v3031
      %v3033 = vpop.f32.mrb[0].mxu0
      %3034 = vmatprep.mubr.f32.mxu0 0.0
      %3035 = vmatmul.mubr.f32.gmra.mrb[0].mxu0 %v2795
      %v3036 = vpop.f32.mrb[0].mxu0
      %v3037 = vadd.f32 %v2818, %v3036
      %v3038 = vpop.f32.mrb[0].mxu0
      %3039 = vmatprep.mubr.f32.mxu0 0.0
      %3040 = vmatmul.mubr.f32.gmra.mrb[0].mxu0 %v2796
      %v3041 = vpop.f32.mrb[0].mxu0
      %v3042 = vadd.f32 %v2818, %v3041
      %v3043 = vpop.f32.mrb[0].mxu0
      %3044 = vdwg.mxu0
      %v3045 = vmax.f32 %v2887, 0.0
      %v3046 = vmax.f32 %v2892, 0.0
      %v3047 = vmax.f32 %v2897, 0.0
      %v3048 = vmax.f32 %v2902, 0.0
      %v3049 = vmax.f32 %v2907, 0.0
      %v3050 = vmax.f32 %v2912, 0.0
      %v3051 = vmax.f32 %v2917, 0.0
      %v3052 = vmax.f32 %v2922, 0.0
      %v3053 = vmax.f32 %v2927, 0.0
      %v3054 = vmax.f32 %v2932, 0.0
      %v3055 = vmax.f32 %v2937, 0.0
      %v3056 = vmax.f32 %v2942, 0.0
      %v3057 = vmax.f32 %v2947, 0.0
      %v3058 = vmax.f32 %v2952, 0.0
      %v3059 = vmax.f32 %v2957, 0.0
      %v3060 = vmax.f32 %v2962, 0.0
      %v3061 = vmax.f32 %v2967, 0.0
      %v3062 = vmax.f32 %v2972, 0.0
      %v3063 = vmax.f32 %v2977, 0.0
      %v3064 = vmax.f32 %v2982, 0.0
      %v3065 = vmax.f32 %v2987, 0.0
      %v3066 = vmax.f32 %v2992, 0.0
      %v3067 = vmax.f32 %v2997, 0.0
      %v3068 = vmax.f32 %v3002, 0.0
      %v3069 = vmax.f32 %v3007, 0.0
      %v3070 = vmax.f32 %v3012, 0.0
      %v3071 = vmax.f32 %v3017, 0.0
      %v3072 = vmax.f32 %v3022, 0.0
      %v3073 = vmax.f32 %v3027, 0.0
      %v3074 = vmax.f32 %v3032, 0.0
      %v3075 = vmax.f32 %v3037, 0.0
      %v3076 = vmax.f32 %v3042, 0.0
      %v3077 = vld [vmem:[%s5] sm:$0xff]
      %v3078 = vld [vmem:[%s5 + $0x8] sm:$0xff]
      %v3079 = vld [vmem:[%s5 + $0x10] sm:$0xff]
      %v3080 = vld [vmem:[%s5 + $0x18] sm:$0xff]
      %vm3081 = vcmask 261120
      %v3083 = vsel %vm3081, %v3045, 0
      %v3086 = vsel %vm3081, %v3046, 0
      %v3089 = vsel %vm3081, %v3047, 0
      %v3092 = vsel %vm3081, %v3048, 0
      %v3095 = vsel %vm3081, %v3049, 0
      %v3098 = vsel %vm3081, %v3050, 0
      %v3101 = vsel %vm3081, %v3051, 0
      %v3104 = vsel %vm3081, %v3052, 0
      %v3107 = vsel %vm3081, %v3053, 0
      %v3110 = vsel %vm3081, %v3054, 0
      %v3113 = vsel %vm3081, %v3055, 0
      %v3116 = vsel %vm3081, %v3056, 0
      %v3119 = vsel %vm3081, %v3057, 0
      %v3122 = vsel %vm3081, %v3058, 0
      %v3125 = vsel %vm3081, %v3059, 0
      %v3128 = vsel %vm3081, %v3060, 0
      %v3131 = vsel %vm3081, %v3061, 0
      %v3134 = vsel %vm3081, %v3062, 0
      %v3137 = vsel %vm3081, %v3063, 0
      %v3140 = vsel %vm3081, %v3064, 0
      %v3143 = vsel %vm3081, %v3065, 0
      %v3146 = vsel %vm3081, %v3066, 0
      %v3149 = vsel %vm3081, %v3067, 0
      %v3152 = vsel %vm3081, %v3068, 0
      %v3155 = vsel %vm3081, %v3069, 0
      %v3158 = vsel %vm3081, %v3070, 0
      %v3161 = vsel %vm3081, %v3071, 0
      %v3164 = vsel %vm3081, %v3072, 0
      %v3167 = vsel %vm3081, %v3073, 0
      %v3170 = vsel %vm3081, %v3074, 0
      %v3173 = vsel %vm3081, %v3075, 0
      %v3176 = vsel %vm3081, %v3076, 0
      %3178 = vmatprep.subr.mxu0 0.0
      %3179 = vmatpush1.msra.mxu0 %v3077
      %3180 = vmatprep.subr.mxu0 0.0
      %3181 = vmatpush1.msra.mxu0 %v3078
      %3182 = vmatprep.subr.mxu0 0.0
      %3183 = vmatpush1.msra.mxu0 %v3079
      %3184 = vmatprep.subr.mxu0 0.0
      %3185 = vmatpush1.msra.mxu0 %v3080
      %3186 = vmatprep.subr.mxu0 0.0
      %3187 = vmatpush1.msra.mxu0 0.0
      %3188 = vmatprep.subr.mxu0 0.0
      %3189 = vmatpush1.msra.mxu0 0.0
      %3190 = vmatprep.subr.mxu0 0.0
      %3191 = vmatpush1.msra.mxu0 0.0
      %3192 = vmatprep.subr.mxu0 0.0
      %3193 = vmatpush1.msra.mxu0 0.0
      %3194 = vmatprep.subr.mxu0 0.0
      %3195 = vmatpush1.msra.mxu0 0.0
      %3196 = vmatprep.subr.mxu0 0.0
      %3197 = vmatpush1.msra.mxu0 0.0
      %3198 = vmatprep.subr.mxu0 0.0
      %3199 = vmatpush1.msra.mxu0 0.0
      %3200 = vmatprep.subr.mxu0 0.0
      %3201 = vmatpush1.msra.mxu0 0.0
      %3202 = vmatprep.subr.mxu0 0.0
      %3203 = vmatpush1.msra.mxu0 0.0
      %3204 = vmatprep.subr.mxu0 0.0
      %3205 = vmatpush1.msra.mxu0 0.0
      %3206 = vmatprep.subr.mxu0 0.0
      %3207 = vmatpush1.msra.mxu0 0.0
      %3208 = vmatprep.subr.mxu0 0.0
      %3209 = vmatpush1.msra.mxu0 0.0
      %3210 = vmatprep.subr.mxu0 0.0
      %3211 = vmatpush1.msra.mxu0 0.0
      %3212 = vmatprep.subr.mxu0 0.0
      %3213 = vmatpush1.msra.mxu0 0.0
      %3214 = vmatprep.subr.mxu0 0.0
      %3215 = vmatpush1.msra.mxu0 0.0
      %3216 = vmatprep.subr.mxu0 0.0
      %3217 = vmatpush1.msra.mxu0 0.0
      %3218 = vmatprep.subr.mxu0 0.0
      %3219 = vmatpush1.msra.mxu0 0.0
      %3220 = vmatprep.subr.mxu0 0.0
      %3221 = vmatpush1.msra.mxu0 0.0
      %3222 = vmatprep.subr.mxu0 0.0
      %3223 = vmatpush1.msra.mxu0 0.0
      %3224 = vmatprep.subr.mxu0 0.0
      %3225 = vmatpush1.msra.mxu0 0.0
      %3226 = vmatprep.subr.mxu0 0.0
      %3227 = vmatpush1.msra.mxu0 0.0
      %3228 = vmatprep.subr.mxu0 0.0
      %3229 = vmatpush1.msra.mxu0 0.0
      %3230 = vmatprep.subr.mxu0 0.0
      %3231 = vmatpush1.msra.mxu0 0.0
      %3232 = vmatprep.subr.mxu0 0.0
      %3233 = vmatpush1.msra.mxu0 0.0
      %3234 = vmatprep.subr.mxu0 0.0
      %3235 = vmatpush1.msra.mxu0 0.0
      %3236 = vmatprep.subr.mxu0 0.0
      %3237 = vmatpush1.msra.mxu0 0.0
      %3238 = vmatprep.subr.mxu0 0.0
      %3239 = vmatpush1.msra.mxu0 0.0
      %3240 = vmatprep.subr.mxu0 0.0
      %3241 = vmatpush1.msra.mxu0 0.0
      %3242 = vmatprep.mubr.f32.mxu0 0.0
      %3243 = vmatmul.mubr.f32.gmra.mrb[0].mxu0 %v3083
      %v3244 = vpop.f32.mrb[0].mxu0
      %v3245 = vadd.f32 0.0, %v3244
      %v3246 = vpop.f32.mrb[0].mxu0
      %3247 = vmatprep.mubr.f32.mxu0 0.0
      %3248 = vmatmul.mubr.f32.gmra.mrb[0].mxu0 %v3086
      %v3249 = vpop.f32.mrb[0].mxu0
      %v3250 = vadd.f32 0.0, %v3249
      %v3251 = vpop.f32.mrb[0].mxu0
      %3252 = vmatprep.mubr.f32.mxu0 0.0
      %3253 = vmatmul.mubr.f32.gmra.mrb[0].mxu0 %v3089
      %v3254 = vpop.f32.mrb[0].mxu0
      %v3255 = vadd.f32 0.0, %v3254
      %v3256 = vpop.f32.mrb[0].mxu0
      %3257 = vmatprep.mubr.f32.mxu0 0.0
      %3258 = vmatmul.mubr.f32.gmra.mrb[0].mxu0 %v3092
      %v3259 = vpop.f32.mrb[0].mxu0
      %v3260 = vadd.f32 0.0, %v3259
      %v3261 = vpop.f32.mrb[0].mxu0
      %3262 = vmatprep.mubr.f32.mxu0 0.0
      %3263 = vmatmul.mubr.f32.gmra.mrb[0].mxu0 %v3095
      %v3264 = vpop.f32.mrb[0].mxu0
      %v3265 = vadd.f32 0.0, %v3264
      %v3266 = vpop.f32.mrb[0].mxu0
      %3267 = vmatprep.mubr.f32.mxu0 0.0
      %3268 = vmatmul.mubr.f32.gmra.mrb[0].mxu0 %v3098
      %v3269 = vpop.f32.mrb[0].mxu0
      %v3270 = vadd.f32 0.0, %v3269
      %v3271 = vpop.f32.mrb[0].mxu0
      %3272 = vmatprep.mubr.f32.mxu0 0.0
      %3273 = vmatmul.mubr.f32.gmra.mrb[0].mxu0 %v3101
      %v3274 = vpop.f32.mrb[0].mxu0
      %v3275 = vadd.f32 0.0, %v3274
      %v3276 = vpop.f32.mrb[0].mxu0
      %3277 = vmatprep.mubr.f32.mxu0 0.0
      %3278 = vmatmul.mubr.f32.gmra.mrb[0].mxu0 %v3104
      %v3279 = vpop.f32.mrb[0].mxu0
      %v3280 = vadd.f32 0.0, %v3279
      %v3281 = vpop.f32.mrb[0].mxu0
      %3282 = vmatprep.mubr.f32.mxu0 0.0
      %3283 = vmatmul.mubr.f32.gmra.mrb[0].mxu0 %v3107
      %v3284 = vpop.f32.mrb[0].mxu0
      %v3285 = vadd.f32 0.0, %v3284
      %v3286 = vpop.f32.mrb[0].mxu0
      %3287 = vmatprep.mubr.f32.mxu0 0.0
      %3288 = vmatmul.mubr.f32.gmra.mrb[0].mxu0 %v3110
      %v3289 = vpop.f32.mrb[0].mxu0
      %v3290 = vadd.f32 0.0, %v3289
      %v3291 = vpop.f32.mrb[0].mxu0
      %3292 = vmatprep.mubr.f32.mxu0 0.0
      %3293 = vmatmul.mubr.f32.gmra.mrb[0].mxu0 %v3113
      %v3294 = vpop.f32.mrb[0].mxu0
      %v3295 = vadd.f32 0.0, %v3294
      %v3296 = vpop.f32.mrb[0].mxu0
      %3297 = vmatprep.mubr.f32.mxu0 0.0
      %3298 = vmatmul.mubr.f32.gmra.mrb[0].mxu0 %v3116
      %v3299 = vpop.f32.mrb[0].mxu0
      %v3300 = vadd.f32 0.0, %v3299
      %v3301 = vpop.f32.mrb[0].mxu0
      %3302 = vmatprep.mubr.f32.mxu0 0.0
      %3303 = vmatmul.mubr.f32.gmra.mrb[0].mxu0 %v3119
      %v3304 = vpop.f32.mrb[0].mxu0
      %v3305 = vadd.f32 0.0, %v3304
      %v3306 = vpop.f32.mrb[0].mxu0
      %3307 = vmatprep.mubr.f32.mxu0 0.0
      %3308 = vmatmul.mubr.f32.gmra.mrb[0].mxu0 %v3122
      %v3309 = vpop.f32.mrb[0].mxu0
      %v3310 = vadd.f32 0.0, %v3309
      %v3311 = vpop.f32.mrb[0].mxu0
      %3312 = vmatprep.mubr.f32.mxu0 0.0
      %3313 = vmatmul.mubr.f32.gmra.mrb[0].mxu0 %v3125
      %v3314 = vpop.f32.mrb[0].mxu0
      %v3315 = vadd.f32 0.0, %v3314
      %v3316 = vpop.f32.mrb[0].mxu0
      %3317 = vmatprep.mubr.f32.mxu0 0.0
      %3318 = vmatmul.mubr.f32.gmra.mrb[0].mxu0 %v3128
      %v3319 = vpop.f32.mrb[0].mxu0
      %v3320 = vadd.f32 0.0, %v3319
      %v3321 = vpop.f32.mrb[0].mxu0
      %3322 = vmatprep.mubr.f32.mxu0 0.0
      %3323 = vmatmul.mubr.f32.gmra.mrb[0].mxu0 %v3131
      %v3324 = vpop.f32.mrb[0].mxu0
      %v3325 = vadd.f32 0.0, %v3324
      %v3326 = vpop.f32.mrb[0].mxu0
      %3327 = vmatprep.mubr.f32.mxu0 0.0
      %3328 = vmatmul.mubr.f32.gmra.mrb[0].mxu0 %v3134
      %v3329 = vpop.f32.mrb[0].mxu0
      %v3330 = vadd.f32 0.0, %v3329
      %v3331 = vpop.f32.mrb[0].mxu0
      %3332 = vmatprep.mubr.f32.mxu0 0.0
      %3333 = vmatmul.mubr.f32.gmra.mrb[0].mxu0 %v3137
      %v3334 = vpop.f32.mrb[0].mxu0
      %v3335 = vadd.f32 0.0, %v3334
      %v3336 = vpop.f32.mrb[0].mxu0
      %3337 = vmatprep.mubr.f32.mxu0 0.0
      %3338 = vmatmul.mubr.f32.gmra.mrb[0].mxu0 %v3140
      %v3339 = vpop.f32.mrb[0].mxu0
      %v3340 = vadd.f32 0.0, %v3339
      %v3341 = vpop.f32.mrb[0].mxu0
      %3342 = vmatprep.mubr.f32.mxu0 0.0
      %3343 = vmatmul.mubr.f32.gmra.mrb[0].mxu0 %v3143
      %v3344 = vpop.f32.mrb[0].mxu0
      %v3345 = vadd.f32 0.0, %v3344
      %v3346 = vpop.f32.mrb[0].mxu0
      %3347 = vmatprep.mubr.f32.mxu0 0.0
      %3348 = vmatmul.mubr.f32.gmra.mrb[0].mxu0 %v3146
      %v3349 = vpop.f32.mrb[0].mxu0
      %v3350 = vadd.f32 0.0, %v3349
      %v3351 = vpop.f32.mrb[0].mxu0
      %3352 = vmatprep.mubr.f32.mxu0 0.0
      %3353 = vmatmul.mubr.f32.gmra.mrb[0].mxu0 %v3149
      %v3354 = vpop.f32.mrb[0].mxu0
      %v3355 = vadd.f32 0.0, %v3354
      %v3356 = vpop.f32.mrb[0].mxu0
      %3357 = vmatprep.mubr.f32.mxu0 0.0
      %3358 = vmatmul.mubr.f32.gmra.mrb[0].mxu0 %v3152
      %v3359 = vpop.f32.mrb[0].mxu0
      %v3360 = vadd.f32 0.0, %v3359
      %v3361 = vpop.f32.mrb[0].mxu0
      %3362 = vmatprep.mubr.f32.mxu0 0.0
      %3363 = vmatmul.mubr.f32.gmra.mrb[0].mxu0 %v3155
      %v3364 = vpop.f32.mrb[0].mxu0
      %v3365 = vadd.f32 0.0, %v3364
      %v3366 = vpop.f32.mrb[0].mxu0
      %3367 = vmatprep.mubr.f32.mxu0 0.0
      %3368 = vmatmul.mubr.f32.gmra.mrb[0].mxu0 %v3158
      %v3369 = vpop.f32.mrb[0].mxu0
      %v3370 = vadd.f32 0.0, %v3369
      %v3371 = vpop.f32.mrb[0].mxu0
      %3372 = vmatprep.mubr.f32.mxu0 0.0
      %3373 = vmatmul.mubr.f32.gmra.mrb[0].mxu0 %v3161
      %v3374 = vpop.f32.mrb[0].mxu0
      %v3375 = vadd.f32 0.0, %v3374
      %v3376 = vpop.f32.mrb[0].mxu0
      %3377 = vmatprep.mubr.f32.mxu0 0.0
      %3378 = vmatmul.mubr.f32.gmra.mrb[0].mxu0 %v3164
      %v3379 = vpop.f32.mrb[0].mxu0
      %v3380 = vadd.f32 0.0, %v3379
      %v3381 = vpop.f32.mrb[0].mxu0
      %3382 = vmatprep.mubr.f32.mxu0 0.0
      %3383 = vmatmul.mubr.f32.gmra.mrb[0].mxu0 %v3167
      %v3384 = vpop.f32.mrb[0].mxu0
      %v3385 = vadd.f32 0.0, %v3384
      %v3386 = vpop.f32.mrb[0].mxu0
      %3387 = vmatprep.mubr.f32.mxu0 0.0
      %3388 = vmatmul.mubr.f32.gmra.mrb[0].mxu0 %v3170
      %v3389 = vpop.f32.mrb[0].mxu0
      %v3390 = vadd.f32 0.0, %v3389
      %v3391 = vpop.f32.mrb[0].mxu0
      %3392 = vmatprep.mubr.f32.mxu0 0.0
      %3393 = vmatmul.mubr.f32.gmra.mrb[0].mxu0 %v3173
      %v3394 = vpop.f32.mrb[0].mxu0
      %v3395 = vadd.f32 0.0, %v3394
      %v3396 = vpop.f32.mrb[0].mxu0
      %3397 = vmatprep.mubr.f32.mxu0 0.0
      %3398 = vmatmul.mubr.f32.gmra.mrb[0].mxu0 %v3176
      %v3399 = vpop.f32.mrb[0].mxu0
      %v3400 = vadd.f32 0.0, %v3399
      %v3401 = vpop.f32.mrb[0].mxu0
      %3402 = vdwg.mxu0
      %v3403 = vld [vmem:[%s7] sm:$0x1]
      %3405 = vset.pattern.permute.xlu0 0
      %3406 = vperm.xlu0 %3405, %v3245
      %v3407 = vpop.permute.xlu0 %3406
      %3410 = vset.pattern.permute.xlu0 0
      %3411 = vperm.xlu0 %3410, %v3250
      %v3412 = vpop.permute.xlu0 %3411
      %v3414 = vlaneseq
      %v3415 = vshrl.u32 %v3414, 7
      %v3416 = vsub.s32 0, %v3415
      %v3417 = vrot.slane %v3403, %v3416
      %v3418 = vmul.f32 %v3407, %v3417
      %v3419 = vmul.f32 %v3412, %v3417
      %v3420 = vld [vmem:[%s7 + $0x1] sm:$0x1]
      %3422 = vset.pattern.permute.xlu0 0
      %3423 = vperm.xlu0 %3422, %v3255
      %v3424 = vpop.permute.xlu0 %3423
      %3427 = vset.pattern.permute.xlu0 0
      %3428 = vperm.xlu0 %3427, %v3260
      %v3429 = vpop.permute.xlu0 %3428
      %v3431 = vlaneseq
      %v3432 = vshrl.u32 %v3431, 7
      %v3433 = vsub.s32 0, %v3432
      %v3434 = vrot.slane %v3420, %v3433
      %v3435 = vmul.f32 %v3424, %v3434
      %v3436 = vmul.f32 %v3429, %v3434
      %v3437 = vadd.f32 %v3418, %v3435
      %v3438 = vadd.f32 %v3419, %v3436
      %v3439 = vld [vmem:[%s7 + $0x2] sm:$0x1]
      %3441 = vset.pattern.permute.xlu0 0
      %3442 = vperm.xlu0 %3441, %v3265
      %v3443 = vpop.permute.xlu0 %3442
      %3446 = vset.pattern.permute.xlu0 0
      %3447 = vperm.xlu0 %3446, %v3270
      %v3448 = vpop.permute.xlu0 %3447
      %v3450 = vlaneseq
      %v3451 = vshrl.u32 %v3450, 7
      %v3452 = vsub.s32 0, %v3451
      %v3453 = vrot.slane %v3439, %v3452
      %v3454 = vmul.f32 %v3443, %v3453
      %v3455 = vmul.f32 %v3448, %v3453
      %v3456 = vadd.f32 %v3437, %v3454
      %v3457 = vadd.f32 %v3438, %v3455
      %v3458 = vld [vmem:[%s7 + $0x3] sm:$0x1]
      %3460 = vset.pattern.permute.xlu0 0
      %3461 = vperm.xlu0 %3460, %v3275
      %v3462 = vpop.permute.xlu0 %3461
      %3465 = vset.pattern.permute.xlu0 0
      %3466 = vperm.xlu0 %3465, %v3280
      %v3467 = vpop.permute.xlu0 %3466
      %v3469 = vlaneseq
      %v3470 = vshrl.u32 %v3469, 7
      %v3471 = vsub.s32 0, %v3470
      %v3472 = vrot.slane %v3458, %v3471
      %v3473 = vmul.f32 %v3462, %v3472
      %v3474 = vmul.f32 %v3467, %v3472
      %v3475 = vadd.f32 %v3456, %v3473
      %v3476 = vadd.f32 %v3457, %v3474
      %v3477 = vld [vmem:[%s7 + $0x4] sm:$0x1]
      %3479 = vset.pattern.permute.xlu0 0
      %3480 = vperm.xlu0 %3479, %v3285
      %v3481 = vpop.permute.xlu0 %3480
      %3484 = vset.pattern.permute.xlu0 0
      %3485 = vperm.xlu0 %3484, %v3290
      %v3486 = vpop.permute.xlu0 %3485
      %v3488 = vlaneseq
      %v3489 = vshrl.u32 %v3488, 7
      %v3490 = vsub.s32 0, %v3489
      %v3491 = vrot.slane %v3477, %v3490
      %v3492 = vmul.f32 %v3481, %v3491
      %v3493 = vmul.f32 %v3486, %v3491
      %v3494 = vadd.f32 %v3475, %v3492
      %v3495 = vadd.f32 %v3476, %v3493
      %v3496 = vld [vmem:[%s7 + $0x5] sm:$0x1]
      %3498 = vset.pattern.permute.xlu0 0
      %3499 = vperm.xlu0 %3498, %v3295
      %v3500 = vpop.permute.xlu0 %3499
      %3503 = vset.pattern.permute.xlu0 0
      %3504 = vperm.xlu0 %3503, %v3300
      %v3505 = vpop.permute.xlu0 %3504
      %v3507 = vlaneseq
      %v3508 = vshrl.u32 %v3507, 7
      %v3509 = vsub.s32 0, %v3508
      %v3510 = vrot.slane %v3496, %v3509
      %v3511 = vmul.f32 %v3500, %v3510
      %v3512 = vmul.f32 %v3505, %v3510
      %v3513 = vadd.f32 %v3494, %v3511
      %v3514 = vadd.f32 %v3495, %v3512
      %v3515 = vld [vmem:[%s7 + $0x6] sm:$0x1]
      %3517 = vset.pattern.permute.xlu0 0
      %3518 = vperm.xlu0 %3517, %v3305
      %v3519 = vpop.permute.xlu0 %3518
      %3522 = vset.pattern.permute.xlu0 0
      %3523 = vperm.xlu0 %3522, %v3310
      %v3524 = vpop.permute.xlu0 %3523
      %v3526 = vlaneseq
      %v3527 = vshrl.u32 %v3526, 7
      %v3528 = vsub.s32 0, %v3527
      %v3529 = vrot.slane %v3515, %v3528
      %v3530 = vmul.f32 %v3519, %v3529
      %v3531 = vmul.f32 %v3524, %v3529
      %v3532 = vadd.f32 %v3513, %v3530
      %v3533 = vadd.f32 %v3514, %v3531
      %v3534 = vld [vmem:[%s7 + $0x7] sm:$0x1]
      %3536 = vset.pattern.permute.xlu0 0
      %3537 = vperm.xlu0 %3536, %v3315
      %v3538 = vpop.permute.xlu0 %3537
      %3541 = vset.pattern.permute.xlu0 0
      %3542 = vperm.xlu0 %3541, %v3320
      %v3543 = vpop.permute.xlu0 %3542
      %v3545 = vlaneseq
      %v3546 = vshrl.u32 %v3545, 7
      %v3547 = vsub.s32 0, %v3546
      %v3548 = vrot.slane %v3534, %v3547
      %v3549 = vmul.f32 %v3538, %v3548
      %v3550 = vmul.f32 %v3543, %v3548
      %v3551 = vadd.f32 %v3532, %v3549
      %v3552 = vadd.f32 %v3533, %v3550
      %v3553 = vld [vmem:[%s7 + $0x8] sm:$0x1]
      %3555 = vset.pattern.permute.xlu0 0
      %3556 = vperm.xlu0 %3555, %v3325
      %v3557 = vpop.permute.xlu0 %3556
      %3560 = vset.pattern.permute.xlu0 0
      %3561 = vperm.xlu0 %3560, %v3330
      %v3562 = vpop.permute.xlu0 %3561
      %v3564 = vlaneseq
      %v3565 = vshrl.u32 %v3564, 7
      %v3566 = vsub.s32 0, %v3565
      %v3567 = vrot.slane %v3553, %v3566
      %v3568 = vmul.f32 %v3557, %v3567
      %v3569 = vmul.f32 %v3562, %v3567
      %v3570 = vadd.f32 %v3551, %v3568
      %v3571 = vadd.f32 %v3552, %v3569
      %v3572 = vld [vmem:[%s7 + $0x9] sm:$0x1]
      %3574 = vset.pattern.permute.xlu0 0
      %3575 = vperm.xlu0 %3574, %v3335
      %v3576 = vpop.permute.xlu0 %3575
      %3579 = vset.pattern.permute.xlu0 0
      %3580 = vperm.xlu0 %3579, %v3340
      %v3581 = vpop.permute.xlu0 %3580
      %v3583 = vlaneseq
      %v3584 = vshrl.u32 %v3583, 7
      %v3585 = vsub.s32 0, %v3584
      %v3586 = vrot.slane %v3572, %v3585
      %v3587 = vmul.f32 %v3576, %v3586
      %v3588 = vmul.f32 %v3581, %v3586
      %v3589 = vadd.f32 %v3570, %v3587
      %v3590 = vadd.f32 %v3571, %v3588
      %v3591 = vld [vmem:[%s7 + $0xa] sm:$0x1]
      %3593 = vset.pattern.permute.xlu0 0
      %3594 = vperm.xlu0 %3593, %v3345
      %v3595 = vpop.permute.xlu0 %3594
      %3598 = vset.pattern.permute.xlu0 0
      %3599 = vperm.xlu0 %3598, %v3350
      %v3600 = vpop.permute.xlu0 %3599
      %v3602 = vlaneseq
      %v3603 = vshrl.u32 %v3602, 7
      %v3604 = vsub.s32 0, %v3603
      %v3605 = vrot.slane %v3591, %v3604
      %v3606 = vmul.f32 %v3595, %v3605
      %v3607 = vmul.f32 %v3600, %v3605
      %v3608 = vadd.f32 %v3589, %v3606
      %v3609 = vadd.f32 %v3590, %v3607
      %v3610 = vld [vmem:[%s7 + $0xb] sm:$0x1]
      %3612 = vset.pattern.permute.xlu0 0
      %3613 = vperm.xlu0 %3612, %v3355
      %v3614 = vpop.permute.xlu0 %3613
      %3617 = vset.pattern.permute.xlu0 0
      %3618 = vperm.xlu0 %3617, %v3360
      %v3619 = vpop.permute.xlu0 %3618
      %v3621 = vlaneseq
      %v3622 = vshrl.u32 %v3621, 7
      %v3623 = vsub.s32 0, %v3622
      %v3624 = vrot.slane %v3610, %v3623
      %v3625 = vmul.f32 %v3614, %v3624
      %v3626 = vmul.f32 %v3619, %v3624
      %v3627 = vadd.f32 %v3608, %v3625
      %v3628 = vadd.f32 %v3609, %v3626
      %v3629 = vld [vmem:[%s7 + $0xc] sm:$0x1]
      %3631 = vset.pattern.permute.xlu0 0
      %3632 = vperm.xlu0 %3631, %v3365
      %v3633 = vpop.permute.xlu0 %3632
      %3636 = vset.pattern.permute.xlu0 0
      %3637 = vperm.xlu0 %3636, %v3370
      %v3638 = vpop.permute.xlu0 %3637
      %v3640 = vlaneseq
      %v3641 = vshrl.u32 %v3640, 7
      %v3642 = vsub.s32 0, %v3641
      %v3643 = vrot.slane %v3629, %v3642
      %v3644 = vmul.f32 %v3633, %v3643
      %v3645 = vmul.f32 %v3638, %v3643
      %v3646 = vadd.f32 %v3627, %v3644
      %v3647 = vadd.f32 %v3628, %v3645
      %v3648 = vld [vmem:[%s7 + $0xd] sm:$0x1]
      %3650 = vset.pattern.permute.xlu0 0
      %3651 = vperm.xlu0 %3650, %v3375
      %v3652 = vpop.permute.xlu0 %3651
      %3655 = vset.pattern.permute.xlu0 0
      %3656 = vperm.xlu0 %3655, %v3380
      %v3657 = vpop.permute.xlu0 %3656
      %v3659 = vlaneseq
      %v3660 = vshrl.u32 %v3659, 7
      %v3661 = vsub.s32 0, %v3660
      %v3662 = vrot.slane %v3648, %v3661
      %v3663 = vmul.f32 %v3652, %v3662
      %v3664 = vmul.f32 %v3657, %v3662
      %v3665 = vadd.f32 %v3646, %v3663
      %v3666 = vadd.f32 %v3647, %v3664
      %v3667 = vld [vmem:[%s7 + $0xe] sm:$0x1]
      %3669 = vset.pattern.permute.xlu0 0
      %3670 = vperm.xlu0 %3669, %v3385
      %v3671 = vpop.permute.xlu0 %3670
      %3674 = vset.pattern.permute.xlu0 0
      %3675 = vperm.xlu0 %3674, %v3390
      %v3676 = vpop.permute.xlu0 %3675
      %v3678 = vlaneseq
      %v3679 = vshrl.u32 %v3678, 7
      %v3680 = vsub.s32 0, %v3679
      %v3681 = vrot.slane %v3667, %v3680
      %v3682 = vmul.f32 %v3671, %v3681
      %v3683 = vmul.f32 %v3676, %v3681
      %v3684 = vadd.f32 %v3665, %v3682
      %v3685 = vadd.f32 %v3666, %v3683
      %v3686 = vld [vmem:[%s7 + $0xf] sm:$0x1]
      %3688 = vset.pattern.permute.xlu0 0
      %3689 = vperm.xlu0 %3688, %v3395
      %v3690 = vpop.permute.xlu0 %3689
      %3693 = vset.pattern.permute.xlu0 0
      %3694 = vperm.xlu0 %3693, %v3400
      %v3695 = vpop.permute.xlu0 %3694
      %v3697 = vlaneseq
      %v3698 = vshrl.u32 %v3697, 7
      %v3699 = vsub.s32 0, %v3698
      %v3700 = vrot.slane %v3686, %v3699
      %v3701 = vmul.f32 %v3690, %v3700
      %v3702 = vmul.f32 %v3695, %v3700
      %v3703 = vadd.f32 %v3684, %v3701
      %v3704 = vadd.f32 %v3685, %v3702
      %s3705 = scalar_lea.vmem %s7, 16
      %v3706 = vld [vmem:[%s3705] sm:$0x1]
      %3707 = vset.pattern.permute.xlu0 1
      %3708 = vperm.xlu0 %3707, %v3245
      %v3709 = vpop.permute.xlu0 %3708
      %3711 = vset.pattern.permute.xlu0 1
      %3712 = vperm.xlu0 %3711, %v3250
      %v3713 = vpop.permute.xlu0 %3712
      %v3715 = vlaneseq
      %v3716 = vshrl.u32 %v3715, 7
      %v3717 = vsub.s32 0, %v3716
      %v3718 = vrot.slane %v3706, %v3717
      %v3719 = vmul.f32 %v3709, %v3718
      %v3720 = vmul.f32 %v3713, %v3718
      %v3721 = vadd.f32 %v3703, %v3719
      %v3722 = vadd.f32 %v3704, %v3720
      %v3723 = vld [vmem:[%s3705 + $0x1] sm:$0x1]
      %3724 = vset.pattern.permute.xlu0 1
      %3725 = vperm.xlu0 %3724, %v3255
      %v3726 = vpop.permute.xlu0 %3725
      %3728 = vset.pattern.permute.xlu0 1
      %3729 = vperm.xlu0 %3728, %v3260
      %v3730 = vpop.permute.xlu0 %3729
      %v3732 = vlaneseq
      %v3733 = vshrl.u32 %v3732, 7
      %v3734 = vsub.s32 0, %v3733
      %v3735 = vrot.slane %v3723, %v3734
      %v3736 = vmul.f32 %v3726, %v3735
      %v3737 = vmul.f32 %v3730, %v3735
      %v3738 = vadd.f32 %v3721, %v3736
      %v3739 = vadd.f32 %v3722, %v3737
      %v3740 = vld [vmem:[%s3705 + $0x2] sm:$0x1]
      %3741 = vset.pattern.permute.xlu0 1
      %3742 = vperm.xlu0 %3741, %v3265
      %v3743 = vpop.permute.xlu0 %3742
      %3745 = vset.pattern.permute.xlu0 1
      %3746 = vperm.xlu0 %3745, %v3270
      %v3747 = vpop.permute.xlu0 %3746
      %v3749 = vlaneseq
      %v3750 = vshrl.u32 %v3749, 7
      %v3751 = vsub.s32 0, %v3750
      %v3752 = vrot.slane %v3740, %v3751
      %v3753 = vmul.f32 %v3743, %v3752
      %v3754 = vmul.f32 %v3747, %v3752
      %v3755 = vadd.f32 %v3738, %v3753
      %v3756 = vadd.f32 %v3739, %v3754
      %v3757 = vld [vmem:[%s3705 + $0x3] sm:$0x1]
      %3758 = vset.pattern.permute.xlu0 1
      %3759 = vperm.xlu0 %3758, %v3275
      %v3760 = vpop.permute.xlu0 %3759
      %3762 = vset.pattern.permute.xlu0 1
      %3763 = vperm.xlu0 %3762, %v3280
      %v3764 = vpop.permute.xlu0 %3763
      %v3766 = vlaneseq
      %v3767 = vshrl.u32 %v3766, 7
      %v3768 = vsub.s32 0, %v3767
      %v3769 = vrot.slane %v3757, %v3768
      %v3770 = vmul.f32 %v3760, %v3769
      %v3771 = vmul.f32 %v3764, %v3769
      %v3772 = vadd.f32 %v3755, %v3770
      %v3773 = vadd.f32 %v3756, %v3771
      %v3774 = vld [vmem:[%s3705 + $0x4] sm:$0x1]
      %3775 = vset.pattern.permute.xlu0 1
      %3776 = vperm.xlu0 %3775, %v3285
      %v3777 = vpop.permute.xlu0 %3776
      %3779 = vset.pattern.permute.xlu0 1
      %3780 = vperm.xlu0 %3779, %v3290
      %v3781 = vpop.permute.xlu0 %3780
      %v3783 = vlaneseq
      %v3784 = vshrl.u32 %v3783, 7
      %v3785 = vsub.s32 0, %v3784
      %v3786 = vrot.slane %v3774, %v3785
      %v3787 = vmul.f32 %v3777, %v3786
      %v3788 = vmul.f32 %v3781, %v3786
      %v3789 = vadd.f32 %v3772, %v3787
      %v3790 = vadd.f32 %v3773, %v3788
      %v3791 = vld [vmem:[%s3705 + $0x5] sm:$0x1]
      %3792 = vset.pattern.permute.xlu0 1
      %3793 = vperm.xlu0 %3792, %v3295
      %v3794 = vpop.permute.xlu0 %3793
      %3796 = vset.pattern.permute.xlu0 1
      %3797 = vperm.xlu0 %3796, %v3300
      %v3798 = vpop.permute.xlu0 %3797
      %v3800 = vlaneseq
      %v3801 = vshrl.u32 %v3800, 7
      %v3802 = vsub.s32 0, %v3801
      %v3803 = vrot.slane %v3791, %v3802
      %v3804 = vmul.f32 %v3794, %v3803
      %v3805 = vmul.f32 %v3798, %v3803
      %v3806 = vadd.f32 %v3789, %v3804
      %v3807 = vadd.f32 %v3790, %v3805
      %v3808 = vld [vmem:[%s3705 + $0x6] sm:$0x1]
      %3809 = vset.pattern.permute.xlu0 1
      %3810 = vperm.xlu0 %3809, %v3305
      %v3811 = vpop.permute.xlu0 %3810
      %3813 = vset.pattern.permute.xlu0 1
      %3814 = vperm.xlu0 %3813, %v3310
      %v3815 = vpop.permute.xlu0 %3814
      %v3817 = vlaneseq
      %v3818 = vshrl.u32 %v3817, 7
      %v3819 = vsub.s32 0, %v3818
      %v3820 = vrot.slane %v3808, %v3819
      %v3821 = vmul.f32 %v3811, %v3820
      %v3822 = vmul.f32 %v3815, %v3820
      %v3823 = vadd.f32 %v3806, %v3821
      %v3824 = vadd.f32 %v3807, %v3822
      %v3825 = vld [vmem:[%s3705 + $0x7] sm:$0x1]
      %3826 = vset.pattern.permute.xlu0 1
      %3827 = vperm.xlu0 %3826, %v3315
      %v3828 = vpop.permute.xlu0 %3827
      %3830 = vset.pattern.permute.xlu0 1
      %3831 = vperm.xlu0 %3830, %v3320
      %v3832 = vpop.permute.xlu0 %3831
      %v3834 = vlaneseq
      %v3835 = vshrl.u32 %v3834, 7
      %v3836 = vsub.s32 0, %v3835
      %v3837 = vrot.slane %v3825, %v3836
      %v3838 = vmul.f32 %v3828, %v3837
      %v3839 = vmul.f32 %v3832, %v3837
      %v3840 = vadd.f32 %v3823, %v3838
      %v3841 = vadd.f32 %v3824, %v3839
      %v3842 = vld [vmem:[%s3705 + $0x8] sm:$0x1]
      %3843 = vset.pattern.permute.xlu0 1
      %3844 = vperm.xlu0 %3843, %v3325
      %v3845 = vpop.permute.xlu0 %3844
      %3847 = vset.pattern.permute.xlu0 1
      %3848 = vperm.xlu0 %3847, %v3330
      %v3849 = vpop.permute.xlu0 %3848
      %v3851 = vlaneseq
      %v3852 = vshrl.u32 %v3851, 7
      %v3853 = vsub.s32 0, %v3852
      %v3854 = vrot.slane %v3842, %v3853
      %v3855 = vmul.f32 %v3845, %v3854
      %v3856 = vmul.f32 %v3849, %v3854
      %v3857 = vadd.f32 %v3840, %v3855
      %v3858 = vadd.f32 %v3841, %v3856
      %v3859 = vld [vmem:[%s3705 + $0x9] sm:$0x1]
      %3860 = vset.pattern.permute.xlu0 1
      %3861 = vperm.xlu0 %3860, %v3335
      %v3862 = vpop.permute.xlu0 %3861
      %3864 = vset.pattern.permute.xlu0 1
      %3865 = vperm.xlu0 %3864, %v3340
      %v3866 = vpop.permute.xlu0 %3865
      %v3868 = vlaneseq
      %v3869 = vshrl.u32 %v3868, 7
      %v3870 = vsub.s32 0, %v3869
      %v3871 = vrot.slane %v3859, %v3870
      %v3872 = vmul.f32 %v3862, %v3871
      %v3873 = vmul.f32 %v3866, %v3871
      %v3874 = vadd.f32 %v3857, %v3872
      %v3875 = vadd.f32 %v3858, %v3873
      %v3876 = vld [vmem:[%s3705 + $0xa] sm:$0x1]
      %3877 = vset.pattern.permute.xlu0 1
      %3878 = vperm.xlu0 %3877, %v3345
      %v3879 = vpop.permute.xlu0 %3878
      %3881 = vset.pattern.permute.xlu0 1
      %3882 = vperm.xlu0 %3881, %v3350
      %v3883 = vpop.permute.xlu0 %3882
      %v3885 = vlaneseq
      %v3886 = vshrl.u32 %v3885, 7
      %v3887 = vsub.s32 0, %v3886
      %v3888 = vrot.slane %v3876, %v3887
      %v3889 = vmul.f32 %v3879, %v3888
      %v3890 = vmul.f32 %v3883, %v3888
      %v3891 = vadd.f32 %v3874, %v3889
      %v3892 = vadd.f32 %v3875, %v3890
      %v3893 = vld [vmem:[%s3705 + $0xb] sm:$0x1]
      %3894 = vset.pattern.permute.xlu0 1
      %3895 = vperm.xlu0 %3894, %v3355
      %v3896 = vpop.permute.xlu0 %3895
      %3898 = vset.pattern.permute.xlu0 1
      %3899 = vperm.xlu0 %3898, %v3360
      %v3900 = vpop.permute.xlu0 %3899
      %v3902 = vlaneseq
      %v3903 = vshrl.u32 %v3902, 7
      %v3904 = vsub.s32 0, %v3903
      %v3905 = vrot.slane %v3893, %v3904
      %v3906 = vmul.f32 %v3896, %v3905
      %v3907 = vmul.f32 %v3900, %v3905
      %v3908 = vadd.f32 %v3891, %v3906
      %v3909 = vadd.f32 %v3892, %v3907
      %v3910 = vld [vmem:[%s3705 + $0xc] sm:$0x1]
      %3911 = vset.pattern.permute.xlu0 1
      %3912 = vperm.xlu0 %3911, %v3365
      %v3913 = vpop.permute.xlu0 %3912
      %3915 = vset.pattern.permute.xlu0 1
      %3916 = vperm.xlu0 %3915, %v3370
      %v3917 = vpop.permute.xlu0 %3916
      %v3919 = vlaneseq
      %v3920 = vshrl.u32 %v3919, 7
      %v3921 = vsub.s32 0, %v3920
      %v3922 = vrot.slane %v3910, %v3921
      %v3923 = vmul.f32 %v3913, %v3922
      %v3924 = vmul.f32 %v3917, %v3922
      %v3925 = vadd.f32 %v3908, %v3923
      %v3926 = vadd.f32 %v3909, %v3924
      %v3927 = vld [vmem:[%s3705 + $0xd] sm:$0x1]
      %3928 = vset.pattern.permute.xlu0 1
      %3929 = vperm.xlu0 %3928, %v3375
      %v3930 = vpop.permute.xlu0 %3929
      %3932 = vset.pattern.permute.xlu0 1
      %3933 = vperm.xlu0 %3932, %v3380
      %v3934 = vpop.permute.xlu0 %3933
      %v3936 = vlaneseq
      %v3937 = vshrl.u32 %v3936, 7
      %v3938 = vsub.s32 0, %v3937
      %v3939 = vrot.slane %v3927, %v3938
      %v3940 = vmul.f32 %v3930, %v3939
      %v3941 = vmul.f32 %v3934, %v3939
      %v3942 = vadd.f32 %v3925, %v3940
      %v3943 = vadd.f32 %v3926, %v3941
      %v3944 = vld [vmem:[%s3705 + $0xe] sm:$0x1]
      %3945 = vset.pattern.permute.xlu0 1
      %3946 = vperm.xlu0 %3945, %v3385
      %v3947 = vpop.permute.xlu0 %3946
      %3949 = vset.pattern.permute.xlu0 1
      %3950 = vperm.xlu0 %3949, %v3390
      %v3951 = vpop.permute.xlu0 %3950
      %v3953 = vlaneseq
      %v3954 = vshrl.u32 %v3953, 7
      %v3955 = vsub.s32 0, %v3954
      %v3956 = vrot.slane %v3944, %v3955
      %v3957 = vmul.f32 %v3947, %v3956
      %v3958 = vmul.f32 %v3951, %v3956
      %v3959 = vadd.f32 %v3942, %v3957
      %v3960 = vadd.f32 %v3943, %v3958
      %v3961 = vld [vmem:[%s3705 + $0xf] sm:$0x1]
      %3962 = vset.pattern.permute.xlu0 1
      %3963 = vperm.xlu0 %3962, %v3395
      %v3964 = vpop.permute.xlu0 %3963
      %3966 = vset.pattern.permute.xlu0 1
      %3967 = vperm.xlu0 %3966, %v3400
      %v3968 = vpop.permute.xlu0 %3967
      %v3970 = vlaneseq
      %v3971 = vshrl.u32 %v3970, 7
      %v3972 = vsub.s32 0, %v3971
      %v3973 = vrot.slane %v3961, %v3972
      %v3974 = vmul.f32 %v3964, %v3973
      %v3975 = vmul.f32 %v3968, %v3973
      %v3976 = vadd.f32 %v3959, %v3974
      %v3977 = vadd.f32 %v3960, %v3975
      %v3978 = vld [vmem:[%s6] sm:$0xff]
      %v3979 = vld [vmem:[%s6 + $0x8] sm:$0xff]
      %v3980 = vld [vmem:[%s6 + $0x10] sm:$0xff]
      %v3981 = vld [vmem:[%s6 + $0x18] sm:$0xff]
      %v3982 = vld [vmem:[%s6 + $0x20] sm:$0xff]
      %v3983 = vld [vmem:[%s6 + $0x28] sm:$0xff]
      %v3984 = vld [vmem:[%s6 + $0x30] sm:$0xff]
      %v3985 = vld [vmem:[%s6 + $0x38] sm:$0xff]
      %vm3986 = vcmask 130048
      %v3988 = vsel %vm3986, %v3978, 0
      %v3991 = vsel %vm3986, %v3979, 0
      %v3994 = vsel %vm3986, %v3980, 0
      %v3997 = vsel %vm3986, %v3981, 0
      %v4000 = vsel %vm3986, %v3982, 0
      %v4003 = vsel %vm3986, %v3983, 0
      %v4006 = vsel %vm3986, %v3984, 0
      %v4009 = vsel %vm3986, %v3985, 0
      %4011 = vmatprep.subr.mxu0 0.0
      %4012 = vmatpush1.msra.mxu0 %v3976
      %4013 = vmatprep.subr.mxu0 0.0
      %4014 = vmatpush1.msra.mxu0 %v3977
      %4015 = vmatprep.subr.mxu0 0.0
      %4016 = vmatpush1.msra.mxu0 0.0
      %4017 = vmatprep.subr.mxu0 0.0
      %4018 = vmatpush1.msra.mxu0 0.0
      %4019 = vmatprep.subr.mxu0 0.0
      %4020 = vmatpush1.msra.mxu0 0.0
      %4021 = vmatprep.subr.mxu0 0.0
      %4022 = vmatpush1.msra.mxu0 0.0
      %4023 = vmatprep.subr.mxu0 0.0
      %4024 = vmatpush1.msra.mxu0 0.0
      %4025 = vmatprep.subr.mxu0 0.0
      %4026 = vmatpush1.msra.mxu0 0.0
      %4027 = vmatprep.subr.mxu0 0.0
      %4028 = vmatpush1.msra.mxu0 0.0
      %4029 = vmatprep.subr.mxu0 0.0
      %4030 = vmatpush1.msra.mxu0 0.0
      %4031 = vmatprep.subr.mxu0 0.0
      %4032 = vmatpush1.msra.mxu0 0.0
      %4033 = vmatprep.subr.mxu0 0.0
      %4034 = vmatpush1.msra.mxu0 0.0
      %4035 = vmatprep.subr.mxu0 0.0
      %4036 = vmatpush1.msra.mxu0 0.0
      %4037 = vmatprep.subr.mxu0 0.0
      %4038 = vmatpush1.msra.mxu0 0.0
      %4039 = vmatprep.subr.mxu0 0.0
      %4040 = vmatpush1.msra.mxu0 0.0
      %4041 = vmatprep.subr.mxu0 0.0
      %4042 = vmatpush1.msra.mxu0 0.0
      %4043 = vmatprep.subr.mxu0 0.0
      %4044 = vmatpush1.msra.mxu0 0.0
      %4045 = vmatprep.subr.mxu0 0.0
      %4046 = vmatpush1.msra.mxu0 0.0
      %4047 = vmatprep.subr.mxu0 0.0
      %4048 = vmatpush1.msra.mxu0 0.0
      %4049 = vmatprep.subr.mxu0 0.0
      %4050 = vmatpush1.msra.mxu0 0.0
      %4051 = vmatprep.subr.mxu0 0.0
      %4052 = vmatpush1.msra.mxu0 0.0
      %4053 = vmatprep.subr.mxu0 0.0
      %4054 = vmatpush1.msra.mxu0 0.0
      %4055 = vmatprep.subr.mxu0 0.0
      %4056 = vmatpush1.msra.mxu0 0.0
      %4057 = vmatprep.subr.mxu0 0.0
      %4058 = vmatpush1.msra.mxu0 0.0
      %4059 = vmatprep.subr.mxu0 0.0
      %4060 = vmatpush1.msra.mxu0 0.0
      %4061 = vmatprep.subr.mxu0 0.0
      %4062 = vmatpush1.msra.mxu0 0.0
      %4063 = vmatprep.subr.mxu0 0.0
      %4064 = vmatpush1.msra.mxu0 0.0
      %4065 = vmatprep.subr.mxu0 0.0
      %4066 = vmatpush1.msra.mxu0 0.0
      %4067 = vmatprep.subr.mxu0 0.0
      %4068 = vmatpush1.msra.mxu0 0.0
      %4069 = vmatprep.subr.mxu0 0.0
      %4070 = vmatpush1.msra.mxu0 0.0
      %4071 = vmatprep.subr.mxu0 0.0
      %4072 = vmatpush1.msra.mxu0 0.0
      %4073 = vmatprep.subr.mxu0 0.0
      %4074 = vmatpush1.msra.mxu0 0.0
      %4075 = vmatprep.mubr.f32.mxu0 0.0
      %4076 = vmatmul.mubr.f32.gmra.mrb[0].mxu0 %v3988
      %v4077 = vpop.f32.mrb[0].mxu0
      %v4078 = vadd.f32 0.0, %v4077
      %v4079 = vpop.f32.mrb[0].mxu0
      %4080 = vmatprep.mubr.f32.mxu0 0.0
      %4081 = vmatmul.mubr.f32.gmra.mrb[0].mxu0 %v3991
      %v4082 = vpop.f32.mrb[0].mxu0
      %v4083 = vadd.f32 0.0, %v4082
      %v4084 = vpop.f32.mrb[0].mxu0
      %4085 = vmatprep.mubr.f32.mxu0 0.0
      %4086 = vmatmul.mubr.f32.gmra.mrb[0].mxu0 %v3994
      %v4087 = vpop.f32.mrb[0].mxu0
      %v4088 = vadd.f32 0.0, %v4087
      %v4089 = vpop.f32.mrb[0].mxu0
      %4090 = vmatprep.mubr.f32.mxu0 0.0
      %4091 = vmatmul.mubr.f32.gmra.mrb[0].mxu0 %v3997
      %v4092 = vpop.f32.mrb[0].mxu0
      %v4093 = vadd.f32 0.0, %v4092
      %v4094 = vpop.f32.mrb[0].mxu0
      %4095 = vmatprep.mubr.f32.mxu0 0.0
      %4096 = vmatmul.mubr.f32.gmra.mrb[0].mxu0 %v4000
      %v4097 = vpop.f32.mrb[0].mxu0
      %v4098 = vadd.f32 0.0, %v4097
      %v4099 = vpop.f32.mrb[0].mxu0
      %4100 = vmatprep.mubr.f32.mxu0 0.0
      %4101 = vmatmul.mubr.f32.gmra.mrb[0].mxu0 %v4003
      %v4102 = vpop.f32.mrb[0].mxu0
      %v4103 = vadd.f32 0.0, %v4102
      %v4104 = vpop.f32.mrb[0].mxu0
      %4105 = vmatprep.mubr.f32.mxu0 0.0
      %4106 = vmatmul.mubr.f32.gmra.mrb[0].mxu0 %v4006
      %v4107 = vpop.f32.mrb[0].mxu0
      %v4108 = vadd.f32 0.0, %v4107
      %v4109 = vpop.f32.mrb[0].mxu0
      %4110 = vmatprep.mubr.f32.mxu0 0.0
      %4111 = vmatmul.mubr.f32.gmra.mrb[0].mxu0 %v4009
      %v4112 = vpop.f32.mrb[0].mxu0
      %v4113 = vadd.f32 0.0, %v4112
      %v4114 = vpop.f32.mrb[0].mxu0
      %4115 = vdwg.mxu0
      %4116 = vst [vmem:[%s305] sm:$0xff] %v4078
      %4117 = vst [vmem:[%s305 + $0x8] sm:$0xff] %v4083
      %4118 = vst [vmem:[%s305 + $0x10] sm:$0xff] %v4088
      %4119 = vst [vmem:[%s305 + $0x18] sm:$0xff] %v4093
      %4120 = vst [vmem:[%s305 + $0x20] sm:$0xff] %v4098
      %4121 = vst [vmem:[%s305 + $0x28] sm:$0xff] %v4103
      %4122 = vst [vmem:[%s305 + $0x30] sm:$0xff] %v4108
      %4123 = vst [vmem:[%s305 + $0x38] sm:$0xff] %v4113
      %p4124 = scmp.lt.s32.totalorder %s19, 1
      %s4125 = scalar_select %p4124, %s19, 1
      %s4126 = smul.addr %s4125, 8
      %s4127 = smul.addr %s4126, 8
      %s4128 = scalar_lea.vmem %s8, %s4127
      // Predicated region
      $region53: #{instance_center_regression_head.1} parent=51 // pred_check
        %p4129 = pneg %p210
      $region54: #{instance_center_regression_head.1} parent=51 // pred_check_branch
        %4131 = sbr.rel (%p4129) target = $region56
      $region55: #{instance_center_regression_head.1} parent=51 // pred_region
        _
      $region56: #{instance_center_regression_head.1} parent=51 // pred_fallthru
        _
    $region52: #{instance_center_regression_head.1} parent=5 // pred_fallthru
      _
    %p4132 = scmp.le.s32.totalorder 2, %s14
    // Predicated region
    $region57: #{instance_center_regression_head.1} parent=5 // pred_check
      %p4133 = pneg %p4132
    $region58: #{instance_center_regression_head.1} parent=5 // pred_check_branch
      %4135 = sbr.rel (%p4133) target = $region60
    $region59: #{instance_center_regression_head.1} parent=5 // pred_region
      %s4136 = ssub.s32 %s14, 2
      // Predicated region
      $region61: #{instance_center_regression_head.1} parent=59 // pred_check
        %p4137 = pneg %p216
      $region62: #{instance_center_regression_head.1} parent=59 // pred_check_branch
        %4139 = sbr.rel (%p4137) target = $region64
      $region63: #{instance_center_regression_head.1} parent=59 // pred_region
        %p4140 = scmp.lt.s32.totalorder %s20, 1
        %s4141 = scalar_select %p4140, %s20, 1
        %s4142 = smul.addr %s4141, 8
        %s4143 = smul.addr %s4142, 8
        %s4144 = scalar_lea.vmem %s8, %s4143
      $region64: #{instance_center_regression_head.1} parent=59 // pred_fallthru
        _
    $region60: #{instance_center_regression_head.1} parent=5 // pred_fallthru
      _
  $region6: #{instance_center_regression_head.1} parent=0 // loop_footer
    %s18 = sadd.s32 1, %s14
  $region7: #{instance_center_regression_head.1} parent=0 // loop_footer_branch
    %13 = sbr.rel target = $region3
  $region8: #{instance_center_regression_head.1} parent=0 // loop_exit
    _

</llo_original>
